<compile_context>
chip_gen: v6e
topology: v6e:2x2x1
jax: 0.10.0
libtpu: 0.0.40
codegen_flags: <defaults>
</compile_context>

<pallas_src>
import math

import jax
import jax.numpy as jnp
from jax.experimental import pallas as pl
from jax.experimental.pallas import tpu as pltpu

# ----------------------------- config ---------------------------------------
HIDDEN = 32
HEADS = 4
HEAD_DIM = HIDDEN // HEADS
INTERMEDIATE = 64
EPS = 1e-12                 # layer_norm_eps
NUM_VCC_LAYERS = 2
SCORE_EPS = 1e-4
MASK_BIAS = -1000.0         # torch attention-mask bias
CROSS_MASK = -1.0e5         # masks cross-batch blocks of the folded scores
LANES = 128

# weight-slab layout (per layer, 96 rows x 128 lanes):
#   rows [0:H)    lanes [0:3H)      = [Wq/s | Wk/s | Wv]   (fused QKV, scaled)
#   rows [0:H)    lanes [3H:4H)     = Wd  (attention output projection)
#   rows [H:H+I)  lanes [0:H)       = W2  (FFN intermediate -> hidden)
#   rows [H:2H)   lanes [H:H+I)     = W1  (FFN hidden -> intermediate)
W_ROWS_PER_LAYER = HIDDEN + INTERMEDIATE          # 96

# bias-slab rows (per layer): ln1g, ln1b, bqkv, bd, ln2g, ln2b, b1, b2
B_ROWS_PER_LAYER = 8
FIN_G_ROW = NUM_VCC_LAYERS * B_ROWS_PER_LAYER
FIN_B_ROW = FIN_G_ROW + 1


def _layer_norm(x, g, b, eps=EPS):
    # x: (R, H), g/b: (1, H). Matches torch.nn.LayerNorm (biased variance).
    mu = jnp.mean(x, axis=-1, keepdims=True)
    var = jnp.mean(jnp.square(x - mu), axis=-1, keepdims=True)
    return (x - mu) * jax.lax.rsqrt(var + eps) * g + b


def _gelu_exact(x):
    # torch.nn.GELU() default = exact erf formulation.
    return 0.5 * x * (1.0 + jax.lax.erf(x * 0.7071067811865476))


# ------------------- fused VccEncoder kernel (2 layers + final LN) ----------
def vcc_encoder_kernel(x_ref, scal_ref, w_ref, b_ref, out_ref, ctx_sc):
    BS = x_ref.shape[0]          # B * S  (batch folded into sublanes)
    B = scal_ref.shape[0]
    S = BS // B

    xin = x_ref[...]                               # (BS, H+1)
    x = xin[:, :HIDDEN]                            # (BS, H)   hidden states
    ss_col = xin[:, HIDDEN:HIDDEN + 1]             # (BS, 1)   residual scale

    # Per-key attention bias rows (one per batch), then the batch-block bias
    # for the folded (BS, BS) scores.  Computed once, reused by both layers.
    bias_rows = []
    for b in range(B):
        row = scal_ref[b]                          # (3, S)
        mask = row[0:1, :]
        ss = row[1:2, :]
        nd = row[2:3, :]
        bias_rows.append(MASK_BIAS * (1.0 - mask)
                         + jnp.log(ss + SCORE_EPS)
                         + jnp.log(nd + SCORE_EPS))
    blocks = []
    for bq in range(B):
        lane_chunks = []
        for bk in range(B):
            if bk == bq:
                lane_chunks.append(jnp.broadcast_to(bias_rows[bk], (S, S)))
            else:
                lane_chunks.append(jnp.full((S, S), CROSS_MASK, jnp.float32))
        blocks.append(jnp.concatenate(lane_chunks, axis=-1))
    bias_all = jnp.concatenate(blocks, axis=0)     # (BS, BS)

    for layer in range(NUM_VCC_LAYERS):
        o = layer * W_ROWS_PER_LAYER
        bo = layer * B_ROWS_PER_LAYER

        blk_a = w_ref[o:o + HIDDEN, :]                                 # (H,128)
        wqkv = blk_a[:, :3 * HIDDEN]                                   # (H,3H)
        wd = blk_a[:, 3 * HIDDEN:4 * HIDDEN]                           # (H,H)
        w1 = w_ref[o + HIDDEN:o + 2 * HIDDEN,
                   HIDDEN:HIDDEN + INTERMEDIATE]                       # (H,I)
        w2 = w_ref[o + HIDDEN:o + HIDDEN + INTERMEDIATE, :HIDDEN]      # (I,H)

        brows = b_ref[bo:bo + B_ROWS_PER_LAYER, :]                     # (8,128)
        ln1g = brows[0:1, :HIDDEN]
        ln1b = brows[1:2, :HIDDEN]
        bqkv = brows[2:3, :3 * HIDDEN]
        bd = brows[3:4, :HIDDEN]
        ln2g = brows[4:5, :HIDDEN]
        ln2b = brows[5:6, :HIDDEN]
        b1 = brows[6:7, :INTERMEDIATE]
        b2 = brows[7:8, :HIDDEN]

        # ---- WeightedAttention (batch folded into the M dimension) ----
        hs = _layer_norm(x, ln1g, ln1b)
        # fused QKV projection; 1/sqrt(sqrt(d)) already folded into wq/wk
        qkv = jnp.dot(hs, wqkv,
                      preferred_element_type=jnp.float32) + bqkv       # (BS,3H)

        for h in range(HEADS):
            lo = h * HEAD_DIM
            qh = qkv[:, lo:lo + HEAD_DIM]
            kh = qkv[:, HIDDEN + lo:HIDDEN + lo + HEAD_DIM]
            vh = qkv[:, 2 * HIDDEN + lo:2 * HIDDEN + lo + HEAD_DIM]
            # q @ k^T without materializing a transpose; cross-batch blocks
            # are killed by bias_all (exp underflows to exactly 0).
            scores = jax.lax.dot_general(
                qh, kh, (((1,), (1,)), ((), ())),
                preferred_element_type=jnp.float32) + bias_all
            scores = scores - jnp.max(scores, axis=-1, keepdims=True)
            p = jnp.exp(scores)
            p = p / jnp.sum(p, axis=-1, keepdims=True)
            # per-head context written at a static lane offset (no lane concat)
            ctx_sc[:, lo:lo + HEAD_DIM] = jnp.dot(
                p, vh, preferred_element_type=jnp.float32)

        attn_out = jnp.dot(ctx_sc[...], wd,
                           preferred_element_type=jnp.float32) + bd
        # dropout(p=0) -> identity

        # ---- FFN ----
        y = attn_out + x
        ff = _layer_norm(y, ln2g, ln2b)
        ff = jnp.dot(ff, w1, preferred_element_type=jnp.float32) + b1
        ff = _gelu_exact(ff)
        ff = jnp.dot(ff, w2, preferred_element_type=jnp.float32) + b2

        # hidden = (ffn + attn_out) * state_scores[:, :, None] + hidden
        x = (ff + attn_out) * ss_col + x

    # ---- final encoder LayerNorm + lane-dense packed store ----
    fg = b_ref[FIN_G_ROW:FIN_G_ROW + 1, :HIDDEN]
    fb = b_ref[FIN_B_ROW:FIN_B_ROW + 1, :HIDDEN]
    ln = _layer_norm(x, fg, fb)
    chunks = [x[b * S:(b + 1) * S, :] for b in range(B)] \
           + [ln[b * S:(b + 1) * S, :] for b in range(B)]
    out_ref[...] = jnp.concatenate(chunks, axis=-1)        # (S, 2*B*H) = 128 lanes


# --------------------------- parameter packing -------------------------------
def pack_params(layer_params, final_ln):
    """Pack all parameters (both layers + final LN) into two dense (rows,128) slabs."""
    inv_scale = 1.0 / math.sqrt(math.sqrt(HEAD_DIM))

    def pad_lanes(a):
        return jnp.pad(a, ((0, 0), (0, LANES - a.shape[1])))

    w_rows, b_rows = [], []
    for p in layer_params:
        # fold the symmetric Q/K scaling into the weights and biases
        wqkv = jnp.concatenate(
            [p["wq"] * inv_scale, p["wk"] * inv_scale, p["wv"]], axis=1)   # (H,3H)
        blk_a = jnp.concatenate([wqkv, p["wd"]], axis=1)                   # (H,128)
        w1_rows = jnp.pad(p["w1"], ((0, INTERMEDIATE - HIDDEN), (0, 0)))   # (I,I)
        blk_b = jnp.concatenate(
            [p["w2"], w1_rows,
             jnp.zeros((INTERMEDIATE, LANES - HIDDEN - INTERMEDIATE),
                       jnp.float32)], axis=1)                              # (I,128)
        w_rows += [blk_a, blk_b]

        bqkv = jnp.concatenate(
            [p["bq"] * inv_scale, p["bk"] * inv_scale, p["bv"]], axis=1)   # (1,3H)
        b_rows += [pad_lanes(a) for a in
                   (p["ln1g"], p["ln1b"], bqkv, p["bd"],
                    p["ln2g"], p["ln2b"], p["b1"], p["b2"])]
    b_rows += [pad_lanes(final_ln["g"]), pad_lanes(final_ln["b"])]

    w_slab = jnp.concatenate(w_rows, axis=0)               # (192, 128)
    b_slab = jnp.concatenate(b_rows, axis=0)               # (18, 128)
    row_pad = (-b_slab.shape[0]) % 8
    b_slab = jnp.pad(b_slab, ((0, row_pad), (0, 0)))       # (24, 128)
    return w_slab.astype(jnp.float32), b_slab.astype(jnp.float32)


# ------------------------------ kernel wrapper --------------------------------
def run_vcc_encoder(hidden, mask, state_scores, num_dups, w_slab, b_slab):
    B, S, H = hidden.shape
    BS = B * S
    # Activations (batch folded) with the state-score residual column packed
    # as lane H -> a single input DMA stream, no degenerate (B,S,1) block.
    x_in = jnp.concatenate(
        [hidden.reshape(BS, H).astype(jnp.float32),
         state_scores.reshape(BS, 1).astype(jnp.float32)], axis=-1)      # (BS, H+1)
    scal = jnp.stack([mask, state_scores, num_dups],
                     axis=1).astype(jnp.float32)                          # (B, 3, S)

    def full(a):
        nd = a.ndim
        return pl.BlockSpec(a.shape, lambda i, nd=nd: (0,) * nd)

    out = pl.pallas_call(
        vcc_encoder_kernel,
        out_shape=jax.ShapeDtypeStruct((S, 2 * B * H), jnp.float32),
        grid_spec=pltpu.PrefetchScalarGridSpec(
            num_scalar_prefetch=0,
            grid=(1,),
            in_specs=[full(x_in), full(scal), full(w_slab), full(b_slab)],
            out_specs=pl.BlockSpec((S, 2 * B * H), lambda i: (0, 0)),
            scratch_shapes=[pltpu.VMEM((BS, H), jnp.float32)]),
        compiler_params=pltpu.CompilerParams(
            dimension_semantics=("arbitrary",)),
    )(x_in, scal, w_slab, b_slab)

    # Unpack the lane-dense slab: [tok_b0 | tok_b1 | ln_b0 | ln_b1].
    tok = jnp.stack([out[:, b * H:(b + 1) * H] for b in range(B)], axis=0)
    ln = jnp.stack([out[:, (B + b) * H:(B + b + 1) * H] for b in range(B)],
                   axis=0)
    return tok, ln


# ------------------------------ parameter init --------------------------------
def init_layer_params(key):
    ks = jax.random.split(key, 6)

    def lin(k, fan_in, fan_out):
        kw, kb = jax.random.split(k)
        w = jax.random.normal(kw, (fan_in, fan_out), jnp.float32) * 0.02
        b = jax.random.normal(kb, (1, fan_out), jnp.float32) * 0.02
        return w, b

    wq, bq = lin(ks[0], HIDDEN, HIDDEN)
    wk, bk = lin(ks[1], HIDDEN, HIDDEN)
    wv, bv = lin(ks[2], HIDDEN, HIDDEN)
    wd, bd = lin(ks[3], HIDDEN, HIDDEN)
    w1, b1 = lin(ks[4], HIDDEN, INTERMEDIATE)
    w2, b2 = lin(ks[5], INTERMEDIATE, HIDDEN)
    return dict(
        ln1g=jnp.ones((1, HIDDEN), jnp.float32),
        ln1b=jnp.zeros((1, HIDDEN), jnp.float32),
        wq=wq, bq=bq, wk=wk, bk=bk, wv=wv, bv=bv, wd=wd, bd=bd,
        ln2g=jnp.ones((1, HIDDEN), jnp.float32),
        ln2b=jnp.zeros((1, HIDDEN), jnp.float32),
        w1=w1, b1=b1, w2=w2, b2=b2,
    )


# -------------------------- VccEncoder forward (glue) -------------------------
def vcc_encoder_forward(mixed_states, layer_params, final_ln):
    # Same concatenation VccEncoderLayer.forward performs before encode().
    B = mixed_states["partial_fine_token_states"].shape[0]
    s_imp = mixed_states["important_token_states"].shape[1]
    ones = jnp.ones((B, s_imp), jnp.float32)

    hidden = jnp.concatenate(
        [mixed_states["partial_fine_token_states"],
         mixed_states["partial_coarse_token_states"],
         mixed_states["important_token_states"]], axis=1)
    mask = jnp.concatenate(
        [mixed_states["partial_fine_token_mask"],
         mixed_states["partial_coarse_token_mask"],
         mixed_states["important_token_mask"]], axis=1)
    scores = jnp.concatenate(
        [mixed_states["partial_fine_token_scores"],
         mixed_states["partial_coarse_token_scores"], ones], axis=1)
    dups = jnp.concatenate(
        [mixed_states["partial_fine_token_num_dups"],
         mixed_states["partial_coarse_token_num_dups"], ones], axis=1)

    w_slab, b_slab = pack_params(layer_params, final_ln)

    # Single fused kernel: both VCC layers + final LayerNorm.
    hidden, hidden_ln = run_vcc_encoder(hidden, mask, scores, dups,
                                        w_slab, b_slab)

    # Split back into the three token streams (as VccEncoderLayer does).
    s_fine = mixed_states["partial_fine_token_states"].shape[1]
    s_coarse = mixed_states["partial_coarse_token_states"].shape[1]
    mixed_states["partial_fine_token_states"] = hidden[:, :s_fine, :]
    mixed_states["partial_coarse_token_states"] = \
        hidden[:, s_fine:s_fine + s_coarse, :]
    mixed_states["important_token_states"] = hidden[:, s_fine + s_coarse:, :]

    # TODO(synk): Formatter.from_vcc_input (scatter back to the full sequence)
    # was not provided; the encoder's final LayerNorm is applied to the
    # concatenated token states instead.
    mixed_states["hidden_states"] = hidden_ln
    return mixed_states


# ------------------------------------ main ------------------------------------
if __name__ == "__main__":
    key = jax.random.PRNGKey(0)
    k_data, k_params = jax.random.split(key)

    B, S_FINE, S_COARSE, S_IMP = 2, 8, 4, 4
    kd = jax.random.split(k_data, 8)

    mixed_states = {
        "partial_fine_token_states":
            jax.random.normal(kd[0], (B, S_FINE, HIDDEN), jnp.float32),
        "partial_coarse_token_states":
            jax.random.normal(kd[1], (B, S_COARSE, HIDDEN), jnp.float32),
        "important_token_states":
            jax.random.normal(kd[2], (B, S_IMP, HIDDEN), jnp.float32),
        "partial_fine_token_mask":
            (jax.random.uniform(kd[3], (B, S_FINE)) > 0.2).astype(jnp.float32),
        "partial_coarse_token_mask": jnp.ones((B, S_COARSE), jnp.float32),
        "important_token_mask": jnp.ones((B, S_IMP), jnp.float32),
        "partial_fine_token_scores":
            jax.random.uniform(kd[4], (B, S_FINE), jnp.float32, 0.1, 1.0),
        "partial_coarse_token_scores":
            jax.random.uniform(kd[5], (B, S_COARSE), jnp.float32, 0.1, 1.0),
        "partial_fine_token_num_dups": jnp.ones((B, S_FINE), jnp.float32),
        "partial_coarse_token_num_dups":
            jnp.round(jax.random.uniform(kd[6], (B, S_COARSE), jnp.float32,
                                         1.0, 4.0)),
    }

    kp = jax.random.split(k_params, NUM_VCC_LAYERS)
    layer_params = [init_layer_params(kp[i]) for i in range(NUM_VCC_LAYERS)]
    final_ln = {"g": jnp.ones((1, HIDDEN), jnp.float32),
                "b": jnp.zeros((1, HIDDEN), jnp.float32)}

    out = vcc_encoder_forward(mixed_states, layer_params, final_ln)
    jax.block_until_ready(out["hidden_states"])
    jax.block_until_ready(out["partial_fine_token_states"])

    S_TOT = S_FINE + S_COARSE + S_IMP
    assert out["hidden_states"].shape == (B, S_TOT, HIDDEN)
    assert out["partial_fine_token_states"].shape == (B, S_FINE, HIDDEN)
    assert bool(jnp.all(jnp.isfinite(out["hidden_states"])))
    assert bool(jnp.all(jnp.isfinite(out["partial_fine_token_states"])))
    print("KERNEL_OK")
</pallas_src>

<mosaic_0001>
module attributes {stable_mosaic.version = 11 : i64} {
  func.func @vcc_encoder_kernel(%arg0: i32, %arg1: memref<32x33xf32, #tpu.memory_space<vmem>>, %arg2: memref<2x3x16xf32, #tpu.memory_space<vmem>>, %arg3: memref<192x128xf32, #tpu.memory_space<vmem>>, %arg4: memref<24x128xf32, #tpu.memory_space<vmem>>, %arg5: memref<16x128xf32, #tpu.memory_space<vmem>>, %arg6: memref<32x32xf32, #tpu.memory_space<vmem>>) attributes {dimension_semantics = [#tpu.dimension_semantics<arbitrary>], iteration_bounds = array<i64: 1>, scalar_prefetch = 0 : i64, scratch_operands = 1 : i64, tpu.core_type = #tpu.core_type<tc>, window_params = [{pipeline_mode = #tpu.pipeline_mode<synchronous>, transform_indices = @transform_0, window_bounds = array<i64: 32, 33>}, {pipeline_mode = #tpu.pipeline_mode<synchronous>, transform_indices = @transform_1, window_bounds = array<i64: 2, 3, 16>}, {pipeline_mode = #tpu.pipeline_mode<synchronous>, transform_indices = @transform_2, window_bounds = array<i64: 192, 128>}, {pipeline_mode = #tpu.pipeline_mode<synchronous>, transform_indices = @transform_3, window_bounds = array<i64: 24, 128>}, {pipeline_mode = #tpu.pipeline_mode<synchronous>, transform_indices = @transform_4, window_bounds = array<i64: 16, 128>}]} {
    %c0 = arith.constant 0 : index
    %c0_0 = arith.constant 0 : index
    %0 = vector.load %arg1[%c0, %c0_0] : memref<32x33xf32, #tpu.memory_space<vmem>>, vector<32x33xf32>
    %1 = vector.extract_strided_slice %0 {offsets = [0, 0], sizes = [32, 32], strides = [1, 1]} : vector<32x33xf32> to vector<32x32xf32>
    %2 = vector.extract_strided_slice %0 {offsets = [0, 32], sizes = [32, 1], strides = [1, 1]} : vector<32x33xf32> to vector<32x1xf32>
    %c0_1 = arith.constant 0 : index
    %c0_2 = arith.constant 0 : index
    %c0_3 = arith.constant 0 : index
    %3 = vector.load %arg2[%c0_1, %c0_2, %c0_3] : memref<2x3x16xf32, #tpu.memory_space<vmem>>, vector<1x3x16xf32>
    %4 = vector.shape_cast %3 : vector<1x3x16xf32> to vector<3x16xf32>
    %5 = vector.extract_strided_slice %4 {offsets = [0, 0], sizes = [1, 16], strides = [1, 1]} : vector<3x16xf32> to vector<1x16xf32>
    %6 = vector.extract_strided_slice %4 {offsets = [1, 0], sizes = [1, 16], strides = [1, 1]} : vector<3x16xf32> to vector<1x16xf32>
    %7 = vector.extract_strided_slice %4 {offsets = [2, 0], sizes = [1, 16], strides = [1, 1]} : vector<3x16xf32> to vector<1x16xf32>
    %cst = arith.constant 1.000000e+00 : f32
    %8 = vector.broadcast %cst : f32 to vector<1x16xf32>
    %9 = arith.subf %8, %5 : vector<1x16xf32>
    %cst_4 = arith.constant -1.000000e+03 : f32
    %10 = vector.broadcast %cst_4 : f32 to vector<1x16xf32>
    %11 = arith.mulf %10, %9 : vector<1x16xf32>
    %cst_5 = arith.constant 9.99999974E-5 : f32
    %12 = vector.broadcast %cst_5 : f32 to vector<1x16xf32>
    %13 = arith.addf %6, %12 : vector<1x16xf32>
    %14 = math.log %13 : vector<1x16xf32>
    %15 = arith.addf %11, %14 : vector<1x16xf32>
    %cst_6 = arith.constant 9.99999974E-5 : f32
    %16 = vector.broadcast %cst_6 : f32 to vector<1x16xf32>
    %17 = arith.addf %7, %16 : vector<1x16xf32>
    %18 = math.log %17 : vector<1x16xf32>
    %19 = arith.addf %15, %18 : vector<1x16xf32>
    %c1 = arith.constant 1 : index
    %c0_7 = arith.constant 0 : index
    %c0_8 = arith.constant 0 : index
    %20 = vector.load %arg2[%c1, %c0_7, %c0_8] : memref<2x3x16xf32, #tpu.memory_space<vmem>>, vector<1x3x16xf32>
    %21 = vector.shape_cast %20 : vector<1x3x16xf32> to vector<3x16xf32>
    %22 = vector.extract_strided_slice %21 {offsets = [0, 0], sizes = [1, 16], strides = [1, 1]} : vector<3x16xf32> to vector<1x16xf32>
    %23 = vector.extract_strided_slice %21 {offsets = [1, 0], sizes = [1, 16], strides = [1, 1]} : vector<3x16xf32> to vector<1x16xf32>
    %24 = vector.extract_strided_slice %21 {offsets = [2, 0], sizes = [1, 16], strides = [1, 1]} : vector<3x16xf32> to vector<1x16xf32>
    %cst_9 = arith.constant 1.000000e+00 : f32
    %25 = vector.broadcast %cst_9 : f32 to vector<1x16xf32>
    %26 = arith.subf %25, %22 : vector<1x16xf32>
    %cst_10 = arith.constant -1.000000e+03 : f32
    %27 = vector.broadcast %cst_10 : f32 to vector<1x16xf32>
    %28 = arith.mulf %27, %26 : vector<1x16xf32>
    %cst_11 = arith.constant 9.99999974E-5 : f32
    %29 = vector.broadcast %cst_11 : f32 to vector<1x16xf32>
    %30 = arith.addf %23, %29 : vector<1x16xf32>
    %31 = math.log %30 : vector<1x16xf32>
    %32 = arith.addf %28, %31 : vector<1x16xf32>
    %cst_12 = arith.constant 9.99999974E-5 : f32
    %33 = vector.broadcast %cst_12 : f32 to vector<1x16xf32>
    %34 = arith.addf %24, %33 : vector<1x16xf32>
    %35 = math.log %34 : vector<1x16xf32>
    %36 = arith.addf %32, %35 : vector<1x16xf32>
    %37 = vector.shape_cast %19 : vector<1x16xf32> to vector<1x16xf32>
    %38 = vector.broadcast %37 : vector<1x16xf32> to vector<16x16xf32>
    %cst_13 = arith.constant -1.000000e+05 : f32
    %39 = vector.broadcast %cst_13 : f32 to vector<16x16xf32>
    %40 = tpu.concatenate %38, %39 in 1 : vector<16x16xf32>, vector<16x16xf32> -> vector<16x32xf32>
    %cst_14 = arith.constant -1.000000e+05 : f32
    %41 = vector.broadcast %cst_14 : f32 to vector<16x16xf32>
    %42 = vector.shape_cast %36 : vector<1x16xf32> to vector<1x16xf32>
    %43 = vector.broadcast %42 : vector<1x16xf32> to vector<16x16xf32>
    %44 = tpu.concatenate %41, %43 in 1 : vector<16x16xf32>, vector<16x16xf32> -> vector<16x32xf32>
    %45 = tpu.concatenate %40, %44 in 0 : vector<16x32xf32>, vector<16x32xf32> -> vector<32x32xf32>
    %c0_15 = arith.constant 0 : index
    %c0_16 = arith.constant 0 : index
    %46 = vector.load %arg3[%c0_15, %c0_16] : memref<192x128xf32, #tpu.memory_space<vmem>>, vector<32x128xf32>
    %47 = vector.extract_strided_slice %46 {offsets = [0, 0], sizes = [32, 96], strides = [1, 1]} : vector<32x128xf32> to vector<32x96xf32>
    %48 = vector.extract_strided_slice %46 {offsets = [0, 96], sizes = [32, 32], strides = [1, 1]} : vector<32x128xf32> to vector<32x32xf32>
    %c32 = arith.constant 32 : index
    %c32_17 = arith.constant 32 : index
    %49 = vector.load %arg3[%c32, %c32_17] : memref<192x128xf32, #tpu.memory_space<vmem>>, vector<32x64xf32>
    %c32_18 = arith.constant 32 : index
    %c0_19 = arith.constant 0 : index
    %50 = vector.load %arg3[%c32_18, %c0_19] : memref<192x128xf32, #tpu.memory_space<vmem>>, vector<64x32xf32>
    %c0_20 = arith.constant 0 : index
    %c0_21 = arith.constant 0 : index
    %51 = vector.load %arg4[%c0_20, %c0_21] : memref<24x128xf32, #tpu.memory_space<vmem>>, vector<8x128xf32>
    %52 = vector.extract_strided_slice %51 {offsets = [0, 0], sizes = [1, 32], strides = [1, 1]} : vector<8x128xf32> to vector<1x32xf32>
    %53 = vector.extract_strided_slice %51 {offsets = [1, 0], sizes = [1, 32], strides = [1, 1]} : vector<8x128xf32> to vector<1x32xf32>
    %54 = vector.extract_strided_slice %51 {offsets = [2, 0], sizes = [1, 96], strides = [1, 1]} : vector<8x128xf32> to vector<1x96xf32>
    %55 = vector.extract_strided_slice %51 {offsets = [3, 0], sizes = [1, 32], strides = [1, 1]} : vector<8x128xf32> to vector<1x32xf32>
    %56 = vector.extract_strided_slice %51 {offsets = [4, 0], sizes = [1, 32], strides = [1, 1]} : vector<8x128xf32> to vector<1x32xf32>
    %57 = vector.extract_strided_slice %51 {offsets = [5, 0], sizes = [1, 32], strides = [1, 1]} : vector<8x128xf32> to vector<1x32xf32>
    %58 = vector.extract_strided_slice %51 {offsets = [6, 0], sizes = [1, 64], strides = [1, 1]} : vector<8x128xf32> to vector<1x64xf32>
    %59 = vector.extract_strided_slice %51 {offsets = [7, 0], sizes = [1, 32], strides = [1, 1]} : vector<8x128xf32> to vector<1x32xf32>
    %cst_22 = arith.constant dense<0.000000e+00> : vector<32xf32>
    %60 = vector.multi_reduction <add>, %1, %cst_22 [1] : vector<32x32xf32> to vector<32xf32>
    %61 = vector.shape_cast %60 : vector<32xf32> to vector<32x1xf32>
    %cst_23 = arith.constant 3.200000e+01 : f32
    %62 = vector.broadcast %cst_23 : f32 to vector<32x1xf32>
    %63 = arith.divf %61, %62 : vector<32x1xf32>
    %64 = vector.broadcast %63 : vector<32x1xf32> to vector<32x32xf32>
    %65 = arith.subf %1, %64 : vector<32x32xf32>
    %66 = arith.mulf %65, %65 : vector<32x32xf32>
    %cst_24 = arith.constant dense<0.000000e+00> : vector<32xf32>
    %67 = vector.multi_reduction <add>, %66, %cst_24 [1] : vector<32x32xf32> to vector<32xf32>
    %68 = vector.shape_cast %67 : vector<32xf32> to vector<32x1xf32>
    %cst_25 = arith.constant 3.200000e+01 : f32
    %69 = vector.broadcast %cst_25 : f32 to vector<32x1xf32>
    %70 = arith.divf %68, %69 : vector<32x1xf32>
    %71 = vector.broadcast %63 : vector<32x1xf32> to vector<32x32xf32>
    %72 = arith.subf %1, %71 : vector<32x32xf32>
    %cst_26 = arith.constant 9.99999996E-13 : f32
    %73 = vector.broadcast %cst_26 : f32 to vector<32x1xf32>
    %74 = arith.addf %70, %73 : vector<32x1xf32>
    %75 = math.rsqrt %74 : vector<32x1xf32>
    %76 = vector.broadcast %75 : vector<32x1xf32> to vector<32x32xf32>
    %77 = arith.mulf %72, %76 : vector<32x32xf32>
    %78 = vector.broadcast %52 : vector<1x32xf32> to vector<32x32xf32>
    %79 = arith.mulf %77, %78 : vector<32x32xf32>
    %80 = vector.broadcast %53 : vector<1x32xf32> to vector<32x32xf32>
    %81 = arith.addf %79, %80 : vector<32x32xf32>
    %cst_27 = arith.constant dense<0.000000e+00> : vector<32x96xf32>
    %82 = tpu.matmul %81, %47, %cst_27 {dimension_numbers = #tpu.dot_dimension_numbers<[1], [0], [0], [1], [0, 0, 1, 1], [], []>} : vector<32x32xf32>, vector<32x96xf32>, vector<32x96xf32> -> vector<32x96xf32>
    %83 = vector.broadcast %54 : vector<1x96xf32> to vector<32x96xf32>
    %84 = arith.addf %82, %83 : vector<32x96xf32>
    %85 = vector.extract_strided_slice %84 {offsets = [0, 0], sizes = [32, 8], strides = [1, 1]} : vector<32x96xf32> to vector<32x8xf32>
    %86 = vector.extract_strided_slice %84 {offsets = [0, 32], sizes = [32, 8], strides = [1, 1]} : vector<32x96xf32> to vector<32x8xf32>
    %87 = vector.extract_strided_slice %84 {offsets = [0, 64], sizes = [32, 8], strides = [1, 1]} : vector<32x96xf32> to vector<32x8xf32>
    %cst_28 = arith.constant dense<0.000000e+00> : vector<32x32xf32>
    %88 = tpu.matmul %85, %86, %cst_28 {dimension_numbers = #tpu.dot_dimension_numbers<[1], [1], [0], [0], [0, 0, 1, 0], [], []>} : vector<32x8xf32>, vector<32x8xf32>, vector<32x32xf32> -> vector<32x32xf32>
    %89 = arith.addf %88, %45 : vector<32x32xf32>
    %cst_29 = arith.constant dense<0xFF800000> : vector<32xf32>
    %90 = vector.multi_reduction <maximumf>, %89, %cst_29 [1] : vector<32x32xf32> to vector<32xf32>
    %91 = vector.shape_cast %90 : vector<32xf32> to vector<32x1xf32>
    %92 = vector.broadcast %91 : vector<32x1xf32> to vector<32x32xf32>
    %93 = arith.subf %89, %92 : vector<32x32xf32>
    %94 = math.exp %93 : vector<32x32xf32>
    %cst_30 = arith.constant dense<0.000000e+00> : vector<32xf32>
    %95 = vector.multi_reduction <add>, %94, %cst_30 [1] : vector<32x32xf32> to vector<32xf32>
    %96 = vector.shape_cast %95 : vector<32xf32> to vector<32x1xf32>
    %97 = vector.broadcast %96 : vector<32x1xf32> to vector<32x32xf32>
    %98 = arith.divf %94, %97 : vector<32x32xf32>
    %cst_31 = arith.constant dense<0.000000e+00> : vector<32x8xf32>
    %99 = tpu.matmul %98, %87, %cst_31 {dimension_numbers = #tpu.dot_dimension_numbers<[1], [0], [0], [1], [0, 0, 1, 1], [], []>} : vector<32x32xf32>, vector<32x8xf32>, vector<32x8xf32> -> vector<32x8xf32>
    %c0_32 = arith.constant 0 : index
    %c0_33 = arith.constant 0 : index
    %100 = vector.load %arg6[%c0_32, %c0_33] : memref<32x32xf32, #tpu.memory_space<vmem>>, vector<32x8xf32>
    tpu.vector_store %arg6[%c0_32, %c0_33], %99 {strides = array<i32>} : memref<32x32xf32, #tpu.memory_space<vmem>>, vector<32x8xf32>,
    %101 = vector.extract_strided_slice %84 {offsets = [0, 8], sizes = [32, 8], strides = [1, 1]} : vector<32x96xf32> to vector<32x8xf32>
    %102 = vector.extract_strided_slice %84 {offsets = [0, 40], sizes = [32, 8], strides = [1, 1]} : vector<32x96xf32> to vector<32x8xf32>
    %103 = vector.extract_strided_slice %84 {offsets = [0, 72], sizes = [32, 8], strides = [1, 1]} : vector<32x96xf32> to vector<32x8xf32>
    %cst_34 = arith.constant dense<0.000000e+00> : vector<32x32xf32>
    %104 = tpu.matmul %101, %102, %cst_34 {dimension_numbers = #tpu.dot_dimension_numbers<[1], [1], [0], [0], [0, 0, 1, 0], [], []>} : vector<32x8xf32>, vector<32x8xf32>, vector<32x32xf32> -> vector<32x32xf32>
    %105 = arith.addf %104, %45 : vector<32x32xf32>
    %cst_35 = arith.constant dense<0xFF800000> : vector<32xf32>
    %106 = vector.multi_reduction <maximumf>, %105, %cst_35 [1] : vector<32x32xf32> to vector<32xf32>
    %107 = vector.shape_cast %106 : vector<32xf32> to vector<32x1xf32>
    %108 = vector.broadcast %107 : vector<32x1xf32> to vector<32x32xf32>
    %109 = arith.subf %105, %108 : vector<32x32xf32>
    %110 = math.exp %109 : vector<32x32xf32>
    %cst_36 = arith.constant dense<0.000000e+00> : vector<32xf32>
    %111 = vector.multi_reduction <add>, %110, %cst_36 [1] : vector<32x32xf32> to vector<32xf32>
    %112 = vector.shape_cast %111 : vector<32xf32> to vector<32x1xf32>
    %113 = vector.broadcast %112 : vector<32x1xf32> to vector<32x32xf32>
    %114 = arith.divf %110, %113 : vector<32x32xf32>
    %cst_37 = arith.constant dense<0.000000e+00> : vector<32x8xf32>
    %115 = tpu.matmul %114, %103, %cst_37 {dimension_numbers = #tpu.dot_dimension_numbers<[1], [0], [0], [1], [0, 0, 1, 1], [], []>} : vector<32x32xf32>, vector<32x8xf32>, vector<32x8xf32> -> vector<32x8xf32>
    %c0_38 = arith.constant 0 : index
    %c8 = arith.constant 8 : index
    %116 = vector.load %arg6[%c0_38, %c8] : memref<32x32xf32, #tpu.memory_space<vmem>>, vector<32x8xf32>
    tpu.vector_store %arg6[%c0_38, %c8], %115 {strides = array<i32>} : memref<32x32xf32, #tpu.memory_space<vmem>>, vector<32x8xf32>,
    %117 = vector.extract_strided_slice %84 {offsets = [0, 16], sizes = [32, 8], strides = [1, 1]} : vector<32x96xf32> to vector<32x8xf32>
    %118 = vector.extract_strided_slice %84 {offsets = [0, 48], sizes = [32, 8], strides = [1, 1]} : vector<32x96xf32> to vector<32x8xf32>
    %119 = vector.extract_strided_slice %84 {offsets = [0, 80], sizes = [32, 8], strides = [1, 1]} : vector<32x96xf32> to vector<32x8xf32>
    %cst_39 = arith.constant dense<0.000000e+00> : vector<32x32xf32>
    %120 = tpu.matmul %117, %118, %cst_39 {dimension_numbers = #tpu.dot_dimension_numbers<[1], [1], [0], [0], [0, 0, 1, 0], [], []>} : vector<32x8xf32>, vector<32x8xf32>, vector<32x32xf32> -> vector<32x32xf32>
    %121 = arith.addf %120, %45 : vector<32x32xf32>
    %cst_40 = arith.constant dense<0xFF800000> : vector<32xf32>
    %122 = vector.multi_reduction <maximumf>, %121, %cst_40 [1] : vector<32x32xf32> to vector<32xf32>
    %123 = vector.shape_cast %122 : vector<32xf32> to vector<32x1xf32>
    %124 = vector.broadcast %123 : vector<32x1xf32> to vector<32x32xf32>
    %125 = arith.subf %121, %124 : vector<32x32xf32>
    %126 = math.exp %125 : vector<32x32xf32>
    %cst_41 = arith.constant dense<0.000000e+00> : vector<32xf32>
    %127 = vector.multi_reduction <add>, %126, %cst_41 [1] : vector<32x32xf32> to vector<32xf32>
    %128 = vector.shape_cast %127 : vector<32xf32> to vector<32x1xf32>
    %129 = vector.broadcast %128 : vector<32x1xf32> to vector<32x32xf32>
    %130 = arith.divf %126, %129 : vector<32x32xf32>
    %cst_42 = arith.constant dense<0.000000e+00> : vector<32x8xf32>
    %131 = tpu.matmul %130, %119, %cst_42 {dimension_numbers = #tpu.dot_dimension_numbers<[1], [0], [0], [1], [0, 0, 1, 1], [], []>} : vector<32x32xf32>, vector<32x8xf32>, vector<32x8xf32> -> vector<32x8xf32>
    %c0_43 = arith.constant 0 : index
    %c16 = arith.constant 16 : index
    %132 = vector.load %arg6[%c0_43, %c16] : memref<32x32xf32, #tpu.memory_space<vmem>>, vector<32x8xf32>
    tpu.vector_store %arg6[%c0_43, %c16], %131 {strides = array<i32>} : memref<32x32xf32, #tpu.memory_space<vmem>>, vector<32x8xf32>,
    %133 = vector.extract_strided_slice %84 {offsets = [0, 24], sizes = [32, 8], strides = [1, 1]} : vector<32x96xf32> to vector<32x8xf32>
    %134 = vector.extract_strided_slice %84 {offsets = [0, 56], sizes = [32, 8], strides = [1, 1]} : vector<32x96xf32> to vector<32x8xf32>
    %135 = vector.extract_strided_slice %84 {offsets = [0, 88], sizes = [32, 8], strides = [1, 1]} : vector<32x96xf32> to vector<32x8xf32>
    %cst_44 = arith.constant dense<0.000000e+00> : vector<32x32xf32>
    %136 = tpu.matmul %133, %134, %cst_44 {dimension_numbers = #tpu.dot_dimension_numbers<[1], [1], [0], [0], [0, 0, 1, 0], [], []>} : vector<32x8xf32>, vector<32x8xf32>, vector<32x32xf32> -> vector<32x32xf32>
    %137 = arith.addf %136, %45 : vector<32x32xf32>
    %cst_45 = arith.constant dense<0xFF800000> : vector<32xf32>
    %138 = vector.multi_reduction <maximumf>, %137, %cst_45 [1] : vector<32x32xf32> to vector<32xf32>
    %139 = vector.shape_cast %138 : vector<32xf32> to vector<32x1xf32>
    %140 = vector.broadcast %139 : vector<32x1xf32> to vector<32x32xf32>
    %141 = arith.subf %137, %140 : vector<32x32xf32>
    %142 = math.exp %141 : vector<32x32xf32>
    %cst_46 = arith.constant dense<0.000000e+00> : vector<32xf32>
    %143 = vector.multi_reduction <add>, %142, %cst_46 [1] : vector<32x32xf32> to vector<32xf32>
    %144 = vector.shape_cast %143 : vector<32xf32> to vector<32x1xf32>
    %145 = vector.broadcast %144 : vector<32x1xf32> to vector<32x32xf32>
    %146 = arith.divf %142, %145 : vector<32x32xf32>
    %cst_47 = arith.constant dense<0.000000e+00> : vector<32x8xf32>
    %147 = tpu.matmul %146, %135, %cst_47 {dimension_numbers = #tpu.dot_dimension_numbers<[1], [0], [0], [1], [0, 0, 1, 1], [], []>} : vector<32x32xf32>, vector<32x8xf32>, vector<32x8xf32> -> vector<32x8xf32>
    %c0_48 = arith.constant 0 : index
    %c24 = arith.constant 24 : index
    %148 = vector.load %arg6[%c0_48, %c24] : memref<32x32xf32, #tpu.memory_space<vmem>>, vector<32x8xf32>
    tpu.vector_store %arg6[%c0_48, %c24], %147 {strides = array<i32>} : memref<32x32xf32, #tpu.memory_space<vmem>>, vector<32x8xf32>,
    %c0_49 = arith.constant 0 : index
    %c0_50 = arith.constant 0 : index
    %149 = vector.load %arg6[%c0_49, %c0_50] : memref<32x32xf32, #tpu.memory_space<vmem>>, vector<32x32xf32>
    %cst_51 = arith.constant dense<0.000000e+00> : vector<32x32xf32>
    %150 = tpu.matmul %149, %48, %cst_51 {dimension_numbers = #tpu.dot_dimension_numbers<[1], [0], [0], [1], [0, 0, 1, 1], [], []>} : vector<32x32xf32>, vector<32x32xf32>, vector<32x32xf32> -> vector<32x32xf32>
    %151 = vector.broadcast %55 : vector<1x32xf32> to vector<32x32xf32>
    %152 = arith.addf %150, %151 : vector<32x32xf32>
    %153 = arith.addf %152, %1 : vector<32x32xf32>
    %cst_52 = arith.constant dense<0.000000e+00> : vector<32xf32>
    %154 = vector.multi_reduction <add>, %153, %cst_52 [1] : vector<32x32xf32> to vector<32xf32>
    %155 = vector.shape_cast %154 : vector<32xf32> to vector<32x1xf32>
    %cst_53 = arith.constant 3.200000e+01 : f32
    %156 = vector.broadcast %cst_53 : f32 to vector<32x1xf32>
    %157 = arith.divf %155, %156 : vector<32x1xf32>
    %158 = vector.broadcast %157 : vector<32x1xf32> to vector<32x32xf32>
    %159 = arith.subf %153, %158 : vector<32x32xf32>
    %160 = arith.mulf %159, %159 : vector<32x32xf32>
    %cst_54 = arith.constant dense<0.000000e+00> : vector<32xf32>
    %161 = vector.multi_reduction <add>, %160, %cst_54 [1] : vector<32x32xf32> to vector<32xf32>
    %162 = vector.shape_cast %161 : vector<32xf32> to vector<32x1xf32>
    %cst_55 = arith.constant 3.200000e+01 : f32
    %163 = vector.broadcast %cst_55 : f32 to vector<32x1xf32>
    %164 = arith.divf %162, %163 : vector<32x1xf32>
    %165 = vector.broadcast %157 : vector<32x1xf32> to vector<32x32xf32>
    %166 = arith.subf %153, %165 : vector<32x32xf32>
    %cst_56 = arith.constant 9.99999996E-13 : f32
    %167 = vector.broadcast %cst_56 : f32 to vector<32x1xf32>
    %168 = arith.addf %164, %167 : vector<32x1xf32>
    %169 = math.rsqrt %168 : vector<32x1xf32>
    %170 = vector.broadcast %169 : vector<32x1xf32> to vector<32x32xf32>
    %171 = arith.mulf %166, %170 : vector<32x32xf32>
    %172 = vector.broadcast %56 : vector<1x32xf32> to vector<32x32xf32>
    %173 = arith.mulf %171, %172 : vector<32x32xf32>
    %174 = vector.broadcast %57 : vector<1x32xf32> to vector<32x32xf32>
    %175 = arith.addf %173, %174 : vector<32x32xf32>
    %cst_57 = arith.constant dense<0.000000e+00> : vector<32x64xf32>
    %176 = tpu.matmul %175, %49, %cst_57 {dimension_numbers = #tpu.dot_dimension_numbers<[1], [0], [0], [1], [0, 0, 1, 1], [], []>} : vector<32x32xf32>, vector<32x64xf32>, vector<32x64xf32> -> vector<32x64xf32>
    %177 = vector.broadcast %58 : vector<1x64xf32> to vector<32x64xf32>
    %178 = arith.addf %176, %177 : vector<32x64xf32>
    %cst_58 = arith.constant 5.000000e-01 : f32
    %179 = vector.broadcast %cst_58 : f32 to vector<32x64xf32>
    %180 = arith.mulf %179, %178 : vector<32x64xf32>
    %cst_59 = arith.constant 0.707106769 : f32
    %181 = vector.broadcast %cst_59 : f32 to vector<32x64xf32>
    %182 = arith.mulf %178, %181 : vector<32x64xf32>
    %183 = math.erf %182 : vector<32x64xf32>
    %cst_60 = arith.constant 1.000000e+00 : f32
    %184 = vector.broadcast %cst_60 : f32 to vector<32x64xf32>
    %185 = arith.addf %184, %183 : vector<32x64xf32>
    %186 = arith.mulf %180, %185 : vector<32x64xf32>
    %cst_61 = arith.constant dense<0.000000e+00> : vector<32x32xf32>
    %187 = tpu.matmul %186, %50, %cst_61 {dimension_numbers = #tpu.dot_dimension_numbers<[1], [0], [0], [1], [0, 0, 1, 1], [], []>} : vector<32x64xf32>, vector<64x32xf32>, vector<32x32xf32> -> vector<32x32xf32>
    %188 = vector.broadcast %59 : vector<1x32xf32> to vector<32x32xf32>
    %189 = arith.addf %187, %188 : vector<32x32xf32>
    %190 = arith.addf %189, %152 : vector<32x32xf32>
    %191 = vector.broadcast %2 : vector<32x1xf32> to vector<32x32xf32>
    %192 = arith.mulf %190, %191 : vector<32x32xf32>
    %193 = arith.addf %192, %1 : vector<32x32xf32>
    %c96 = arith.constant 96 : index
    %c0_62 = arith.constant 0 : index
    %194 = vector.load %arg3[%c96, %c0_62] : memref<192x128xf32, #tpu.memory_space<vmem>>, vector<32x128xf32>
    %195 = vector.extract_strided_slice %194 {offsets = [0, 0], sizes = [32, 96], strides = [1, 1]} : vector<32x128xf32> to vector<32x96xf32>
    %196 = vector.extract_strided_slice %194 {offsets = [0, 96], sizes = [32, 32], strides = [1, 1]} : vector<32x128xf32> to vector<32x32xf32>
    %c128 = arith.constant 128 : index
    %c32_63 = arith.constant 32 : index
    %197 = vector.load %arg3[%c128, %c32_63] : memref<192x128xf32, #tpu.memory_space<vmem>>, vector<32x64xf32>
    %c128_64 = arith.constant 128 : index
    %c0_65 = arith.constant 0 : index
    %198 = vector.load %arg3[%c128_64, %c0_65] : memref<192x128xf32, #tpu.memory_space<vmem>>, vector<64x32xf32>
    %c8_66 = arith.constant 8 : index
    %c0_67 = arith.constant 0 : index
    %199 = vector.load %arg4[%c8_66, %c0_67] : memref<24x128xf32, #tpu.memory_space<vmem>>, vector<8x128xf32>
    %200 = vector.extract_strided_slice %199 {offsets = [0, 0], sizes = [1, 32], strides = [1, 1]} : vector<8x128xf32> to vector<1x32xf32>
    %201 = vector.extract_strided_slice %199 {offsets = [1, 0], sizes = [1, 32], strides = [1, 1]} : vector<8x128xf32> to vector<1x32xf32>
    %202 = vector.extract_strided_slice %199 {offsets = [2, 0], sizes = [1, 96], strides = [1, 1]} : vector<8x128xf32> to vector<1x96xf32>
    %203 = vector.extract_strided_slice %199 {offsets = [3, 0], sizes = [1, 32], strides = [1, 1]} : vector<8x128xf32> to vector<1x32xf32>
    %204 = vector.extract_strided_slice %199 {offsets = [4, 0], sizes = [1, 32], strides = [1, 1]} : vector<8x128xf32> to vector<1x32xf32>
    %205 = vector.extract_strided_slice %199 {offsets = [5, 0], sizes = [1, 32], strides = [1, 1]} : vector<8x128xf32> to vector<1x32xf32>
    %206 = vector.extract_strided_slice %199 {offsets = [6, 0], sizes = [1, 64], strides = [1, 1]} : vector<8x128xf32> to vector<1x64xf32>
    %207 = vector.extract_strided_slice %199 {offsets = [7, 0], sizes = [1, 32], strides = [1, 1]} : vector<8x128xf32> to vector<1x32xf32>
    %cst_68 = arith.constant dense<0.000000e+00> : vector<32xf32>
    %208 = vector.multi_reduction <add>, %193, %cst_68 [1] : vector<32x32xf32> to vector<32xf32>
    %209 = vector.shape_cast %208 : vector<32xf32> to vector<32x1xf32>
    %cst_69 = arith.constant 3.200000e+01 : f32
    %210 = vector.broadcast %cst_69 : f32 to vector<32x1xf32>
    %211 = arith.divf %209, %210 : vector<32x1xf32>
    %212 = vector.broadcast %211 : vector<32x1xf32> to vector<32x32xf32>
    %213 = arith.subf %193, %212 : vector<32x32xf32>
    %214 = arith.mulf %213, %213 : vector<32x32xf32>
    %cst_70 = arith.constant dense<0.000000e+00> : vector<32xf32>
    %215 = vector.multi_reduction <add>, %214, %cst_70 [1] : vector<32x32xf32> to vector<32xf32>
    %216 = vector.shape_cast %215 : vector<32xf32> to vector<32x1xf32>
    %cst_71 = arith.constant 3.200000e+01 : f32
    %217 = vector.broadcast %cst_71 : f32 to vector<32x1xf32>
    %218 = arith.divf %216, %217 : vector<32x1xf32>
    %219 = vector.broadcast %211 : vector<32x1xf32> to vector<32x32xf32>
    %220 = arith.subf %193, %219 : vector<32x32xf32>
    %cst_72 = arith.constant 9.99999996E-13 : f32
    %221 = vector.broadcast %cst_72 : f32 to vector<32x1xf32>
    %222 = arith.addf %218, %221 : vector<32x1xf32>
    %223 = math.rsqrt %222 : vector<32x1xf32>
    %224 = vector.broadcast %223 : vector<32x1xf32> to vector<32x32xf32>
    %225 = arith.mulf %220, %224 : vector<32x32xf32>
    %226 = vector.broadcast %200 : vector<1x32xf32> to vector<32x32xf32>
    %227 = arith.mulf %225, %226 : vector<32x32xf32>
    %228 = vector.broadcast %201 : vector<1x32xf32> to vector<32x32xf32>
    %229 = arith.addf %227, %228 : vector<32x32xf32>
    %cst_73 = arith.constant dense<0.000000e+00> : vector<32x96xf32>
    %230 = tpu.matmul %229, %195, %cst_73 {dimension_numbers = #tpu.dot_dimension_numbers<[1], [0], [0], [1], [0, 0, 1, 1], [], []>} : vector<32x32xf32>, vector<32x96xf32>, vector<32x96xf32> -> vector<32x96xf32>
    %231 = vector.broadcast %202 : vector<1x96xf32> to vector<32x96xf32>
    %232 = arith.addf %230, %231 : vector<32x96xf32>
    %233 = vector.extract_strided_slice %232 {offsets = [0, 0], sizes = [32, 8], strides = [1, 1]} : vector<32x96xf32> to vector<32x8xf32>
    %234 = vector.extract_strided_slice %232 {offsets = [0, 32], sizes = [32, 8], strides = [1, 1]} : vector<32x96xf32> to vector<32x8xf32>
    %235 = vector.extract_strided_slice %232 {offsets = [0, 64], sizes = [32, 8], strides = [1, 1]} : vector<32x96xf32> to vector<32x8xf32>
    %cst_74 = arith.constant dense<0.000000e+00> : vector<32x32xf32>
    %236 = tpu.matmul %233, %234, %cst_74 {dimension_numbers = #tpu.dot_dimension_numbers<[1], [1], [0], [0], [0, 0, 1, 0], [], []>} : vector<32x8xf32>, vector<32x8xf32>, vector<32x32xf32> -> vector<32x32xf32>
    %237 = arith.addf %236, %45 : vector<32x32xf32>
    %cst_75 = arith.constant dense<0xFF800000> : vector<32xf32>
    %238 = vector.multi_reduction <maximumf>, %237, %cst_75 [1] : vector<32x32xf32> to vector<32xf32>
    %239 = vector.shape_cast %238 : vector<32xf32> to vector<32x1xf32>
    %240 = vector.broadcast %239 : vector<32x1xf32> to vector<32x32xf32>
    %241 = arith.subf %237, %240 : vector<32x32xf32>
    %242 = math.exp %241 : vector<32x32xf32>
    %cst_76 = arith.constant dense<0.000000e+00> : vector<32xf32>
    %243 = vector.multi_reduction <add>, %242, %cst_76 [1] : vector<32x32xf32> to vector<32xf32>
    %244 = vector.shape_cast %243 : vector<32xf32> to vector<32x1xf32>
    %245 = vector.broadcast %244 : vector<32x1xf32> to vector<32x32xf32>
    %246 = arith.divf %242, %245 : vector<32x32xf32>
    %cst_77 = arith.constant dense<0.000000e+00> : vector<32x8xf32>
    %247 = tpu.matmul %246, %235, %cst_77 {dimension_numbers = #tpu.dot_dimension_numbers<[1], [0], [0], [1], [0, 0, 1, 1], [], []>} : vector<32x32xf32>, vector<32x8xf32>, vector<32x8xf32> -> vector<32x8xf32>
    %c0_78 = arith.constant 0 : index
    %c0_79 = arith.constant 0 : index
    %248 = vector.load %arg6[%c0_78, %c0_79] : memref<32x32xf32, #tpu.memory_space<vmem>>, vector<32x8xf32>
    tpu.vector_store %arg6[%c0_78, %c0_79], %247 {strides = array<i32>} : memref<32x32xf32, #tpu.memory_space<vmem>>, vector<32x8xf32>,
    %249 = vector.extract_strided_slice %232 {offsets = [0, 8], sizes = [32, 8], strides = [1, 1]} : vector<32x96xf32> to vector<32x8xf32>
    %250 = vector.extract_strided_slice %232 {offsets = [0, 40], sizes = [32, 8], strides = [1, 1]} : vector<32x96xf32> to vector<32x8xf32>
    %251 = vector.extract_strided_slice %232 {offsets = [0, 72], sizes = [32, 8], strides = [1, 1]} : vector<32x96xf32> to vector<32x8xf32>
    %cst_80 = arith.constant dense<0.000000e+00> : vector<32x32xf32>
    %252 = tpu.matmul %249, %250, %cst_80 {dimension_numbers = #tpu.dot_dimension_numbers<[1], [1], [0], [0], [0, 0, 1, 0], [], []>} : vector<32x8xf32>, vector<32x8xf32>, vector<32x32xf32> -> vector<32x32xf32>
    %253 = arith.addf %252, %45 : vector<32x32xf32>
    %cst_81 = arith.constant dense<0xFF800000> : vector<32xf32>
    %254 = vector.multi_reduction <maximumf>, %253, %cst_81 [1] : vector<32x32xf32> to vector<32xf32>
    %255 = vector.shape_cast %254 : vector<32xf32> to vector<32x1xf32>
    %256 = vector.broadcast %255 : vector<32x1xf32> to vector<32x32xf32>
    %257 = arith.subf %253, %256 : vector<32x32xf32>
    %258 = math.exp %257 : vector<32x32xf32>
    %cst_82 = arith.constant dense<0.000000e+00> : vector<32xf32>
    %259 = vector.multi_reduction <add>, %258, %cst_82 [1] : vector<32x32xf32> to vector<32xf32>
    %260 = vector.shape_cast %259 : vector<32xf32> to vector<32x1xf32>
    %261 = vector.broadcast %260 : vector<32x1xf32> to vector<32x32xf32>
    %262 = arith.divf %258, %261 : vector<32x32xf32>
    %cst_83 = arith.constant dense<0.000000e+00> : vector<32x8xf32>
    %263 = tpu.matmul %262, %251, %cst_83 {dimension_numbers = #tpu.dot_dimension_numbers<[1], [0], [0], [1], [0, 0, 1, 1], [], []>} : vector<32x32xf32>, vector<32x8xf32>, vector<32x8xf32> -> vector<32x8xf32>
    %c0_84 = arith.constant 0 : index
    %c8_85 = arith.constant 8 : index
    %264 = vector.load %arg6[%c0_84, %c8_85] : memref<32x32xf32, #tpu.memory_space<vmem>>, vector<32x8xf32>
    tpu.vector_store %arg6[%c0_84, %c8_85], %263 {strides = array<i32>} : memref<32x32xf32, #tpu.memory_space<vmem>>, vector<32x8xf32>,
    %265 = vector.extract_strided_slice %232 {offsets = [0, 16], sizes = [32, 8], strides = [1, 1]} : vector<32x96xf32> to vector<32x8xf32>
    %266 = vector.extract_strided_slice %232 {offsets = [0, 48], sizes = [32, 8], strides = [1, 1]} : vector<32x96xf32> to vector<32x8xf32>
    %267 = vector.extract_strided_slice %232 {offsets = [0, 80], sizes = [32, 8], strides = [1, 1]} : vector<32x96xf32> to vector<32x8xf32>
    %cst_86 = arith.constant dense<0.000000e+00> : vector<32x32xf32>
    %268 = tpu.matmul %265, %266, %cst_86 {dimension_numbers = #tpu.dot_dimension_numbers<[1], [1], [0], [0], [0, 0, 1, 0], [], []>} : vector<32x8xf32>, vector<32x8xf32>, vector<32x32xf32> -> vector<32x32xf32>
    %269 = arith.addf %268, %45 : vector<32x32xf32>
    %cst_87 = arith.constant dense<0xFF800000> : vector<32xf32>
    %270 = vector.multi_reduction <maximumf>, %269, %cst_87 [1] : vector<32x32xf32> to vector<32xf32>
    %271 = vector.shape_cast %270 : vector<32xf32> to vector<32x1xf32>
    %272 = vector.broadcast %271 : vector<32x1xf32> to vector<32x32xf32>
    %273 = arith.subf %269, %272 : vector<32x32xf32>
    %274 = math.exp %273 : vector<32x32xf32>
    %cst_88 = arith.constant dense<0.000000e+00> : vector<32xf32>
    %275 = vector.multi_reduction <add>, %274, %cst_88 [1] : vector<32x32xf32> to vector<32xf32>
    %276 = vector.shape_cast %275 : vector<32xf32> to vector<32x1xf32>
    %277 = vector.broadcast %276 : vector<32x1xf32> to vector<32x32xf32>
    %278 = arith.divf %274, %277 : vector<32x32xf32>
    %cst_89 = arith.constant dense<0.000000e+00> : vector<32x8xf32>
    %279 = tpu.matmul %278, %267, %cst_89 {dimension_numbers = #tpu.dot_dimension_numbers<[1], [0], [0], [1], [0, 0, 1, 1], [], []>} : vector<32x32xf32>, vector<32x8xf32>, vector<32x8xf32> -> vector<32x8xf32>
    %c0_90 = arith.constant 0 : index
    %c16_91 = arith.constant 16 : index
    %280 = vector.load %arg6[%c0_90, %c16_91] : memref<32x32xf32, #tpu.memory_space<vmem>>, vector<32x8xf32>
    tpu.vector_store %arg6[%c0_90, %c16_91], %279 {strides = array<i32>} : memref<32x32xf32, #tpu.memory_space<vmem>>, vector<32x8xf32>,
    %281 = vector.extract_strided_slice %232 {offsets = [0, 24], sizes = [32, 8], strides = [1, 1]} : vector<32x96xf32> to vector<32x8xf32>
    %282 = vector.extract_strided_slice %232 {offsets = [0, 56], sizes = [32, 8], strides = [1, 1]} : vector<32x96xf32> to vector<32x8xf32>
    %283 = vector.extract_strided_slice %232 {offsets = [0, 88], sizes = [32, 8], strides = [1, 1]} : vector<32x96xf32> to vector<32x8xf32>
    %cst_92 = arith.constant dense<0.000000e+00> : vector<32x32xf32>
    %284 = tpu.matmul %281, %282, %cst_92 {dimension_numbers = #tpu.dot_dimension_numbers<[1], [1], [0], [0], [0, 0, 1, 0], [], []>} : vector<32x8xf32>, vector<32x8xf32>, vector<32x32xf32> -> vector<32x32xf32>
    %285 = arith.addf %284, %45 : vector<32x32xf32>
    %cst_93 = arith.constant dense<0xFF800000> : vector<32xf32>
    %286 = vector.multi_reduction <maximumf>, %285, %cst_93 [1] : vector<32x32xf32> to vector<32xf32>
    %287 = vector.shape_cast %286 : vector<32xf32> to vector<32x1xf32>
    %288 = vector.broadcast %287 : vector<32x1xf32> to vector<32x32xf32>
    %289 = arith.subf %285, %288 : vector<32x32xf32>
    %290 = math.exp %289 : vector<32x32xf32>
    %cst_94 = arith.constant dense<0.000000e+00> : vector<32xf32>
    %291 = vector.multi_reduction <add>, %290, %cst_94 [1] : vector<32x32xf32> to vector<32xf32>
    %292 = vector.shape_cast %291 : vector<32xf32> to vector<32x1xf32>
    %293 = vector.broadcast %292 : vector<32x1xf32> to vector<32x32xf32>
    %294 = arith.divf %290, %293 : vector<32x32xf32>
    %cst_95 = arith.constant dense<0.000000e+00> : vector<32x8xf32>
    %295 = tpu.matmul %294, %283, %cst_95 {dimension_numbers = #tpu.dot_dimension_numbers<[1], [0], [0], [1], [0, 0, 1, 1], [], []>} : vector<32x32xf32>, vector<32x8xf32>, vector<32x8xf32> -> vector<32x8xf32>
    %c0_96 = arith.constant 0 : index
    %c24_97 = arith.constant 24 : index
    %296 = vector.load %arg6[%c0_96, %c24_97] : memref<32x32xf32, #tpu.memory_space<vmem>>, vector<32x8xf32>
    tpu.vector_store %arg6[%c0_96, %c24_97], %295 {strides = array<i32>} : memref<32x32xf32, #tpu.memory_space<vmem>>, vector<32x8xf32>,
    %c0_98 = arith.constant 0 : index
    %c0_99 = arith.constant 0 : index
    %297 = vector.load %arg6[%c0_98, %c0_99] : memref<32x32xf32, #tpu.memory_space<vmem>>, vector<32x32xf32>
    %cst_100 = arith.constant dense<0.000000e+00> : vector<32x32xf32>
    %298 = tpu.matmul %297, %196, %cst_100 {dimension_numbers = #tpu.dot_dimension_numbers<[1], [0], [0], [1], [0, 0, 1, 1], [], []>} : vector<32x32xf32>, vector<32x32xf32>, vector<32x32xf32> -> vector<32x32xf32>
    %299 = vector.broadcast %203 : vector<1x32xf32> to vector<32x32xf32>
    %300 = arith.addf %298, %299 : vector<32x32xf32>
    %301 = arith.addf %300, %193 : vector<32x32xf32>
    %cst_101 = arith.constant dense<0.000000e+00> : vector<32xf32>
    %302 = vector.multi_reduction <add>, %301, %cst_101 [1] : vector<32x32xf32> to vector<32xf32>
    %303 = vector.shape_cast %302 : vector<32xf32> to vector<32x1xf32>
    %cst_102 = arith.constant 3.200000e+01 : f32
    %304 = vector.broadcast %cst_102 : f32 to vector<32x1xf32>
    %305 = arith.divf %303, %304 : vector<32x1xf32>
    %306 = vector.broadcast %305 : vector<32x1xf32> to vector<32x32xf32>
    %307 = arith.subf %301, %306 : vector<32x32xf32>
    %308 = arith.mulf %307, %307 : vector<32x32xf32>
    %cst_103 = arith.constant dense<0.000000e+00> : vector<32xf32>
    %309 = vector.multi_reduction <add>, %308, %cst_103 [1] : vector<32x32xf32> to vector<32xf32>
    %310 = vector.shape_cast %309 : vector<32xf32> to vector<32x1xf32>
    %cst_104 = arith.constant 3.200000e+01 : f32
    %311 = vector.broadcast %cst_104 : f32 to vector<32x1xf32>
    %312 = arith.divf %310, %311 : vector<32x1xf32>
    %313 = vector.broadcast %305 : vector<32x1xf32> to vector<32x32xf32>
    %314 = arith.subf %301, %313 : vector<32x32xf32>
    %cst_105 = arith.constant 9.99999996E-13 : f32
    %315 = vector.broadcast %cst_105 : f32 to vector<32x1xf32>
    %316 = arith.addf %312, %315 : vector<32x1xf32>
    %317 = math.rsqrt %316 : vector<32x1xf32>
    %318 = vector.broadcast %317 : vector<32x1xf32> to vector<32x32xf32>
    %319 = arith.mulf %314, %318 : vector<32x32xf32>
    %320 = vector.broadcast %204 : vector<1x32xf32> to vector<32x32xf32>
    %321 = arith.mulf %319, %320 : vector<32x32xf32>
    %322 = vector.broadcast %205 : vector<1x32xf32> to vector<32x32xf32>
    %323 = arith.addf %321, %322 : vector<32x32xf32>
    %cst_106 = arith.constant dense<0.000000e+00> : vector<32x64xf32>
    %324 = tpu.matmul %323, %197, %cst_106 {dimension_numbers = #tpu.dot_dimension_numbers<[1], [0], [0], [1], [0, 0, 1, 1], [], []>} : vector<32x32xf32>, vector<32x64xf32>, vector<32x64xf32> -> vector<32x64xf32>
    %325 = vector.broadcast %206 : vector<1x64xf32> to vector<32x64xf32>
    %326 = arith.addf %324, %325 : vector<32x64xf32>
    %cst_107 = arith.constant 5.000000e-01 : f32
    %327 = vector.broadcast %cst_107 : f32 to vector<32x64xf32>
    %328 = arith.mulf %327, %326 : vector<32x64xf32>
    %cst_108 = arith.constant 0.707106769 : f32
    %329 = vector.broadcast %cst_108 : f32 to vector<32x64xf32>
    %330 = arith.mulf %326, %329 : vector<32x64xf32>
    %331 = math.erf %330 : vector<32x64xf32>
    %cst_109 = arith.constant 1.000000e+00 : f32
    %332 = vector.broadcast %cst_109 : f32 to vector<32x64xf32>
    %333 = arith.addf %332, %331 : vector<32x64xf32>
    %334 = arith.mulf %328, %333 : vector<32x64xf32>
    %cst_110 = arith.constant dense<0.000000e+00> : vector<32x32xf32>
    %335 = tpu.matmul %334, %198, %cst_110 {dimension_numbers = #tpu.dot_dimension_numbers<[1], [0], [0], [1], [0, 0, 1, 1], [], []>} : vector<32x64xf32>, vector<64x32xf32>, vector<32x32xf32> -> vector<32x32xf32>
    %336 = vector.broadcast %207 : vector<1x32xf32> to vector<32x32xf32>
    %337 = arith.addf %335, %336 : vector<32x32xf32>
    %338 = arith.addf %337, %300 : vector<32x32xf32>
    %339 = vector.broadcast %2 : vector<32x1xf32> to vector<32x32xf32>
    %340 = arith.mulf %338, %339 : vector<32x32xf32>
    %341 = arith.addf %340, %193 : vector<32x32xf32>
    %c16_111 = arith.constant 16 : index
    %c0_112 = arith.constant 0 : index
    %342 = vector.load %arg4[%c16_111, %c0_112] : memref<24x128xf32, #tpu.memory_space<vmem>>, vector<1x32xf32>
    %c17 = arith.constant 17 : index
    %c0_113 = arith.constant 0 : index
    %343 = vector.load %arg4[%c17, %c0_113] : memref<24x128xf32, #tpu.memory_space<vmem>>, vector<1x32xf32>
    %cst_114 = arith.constant dense<0.000000e+00> : vector<32xf32>
    %344 = vector.multi_reduction <add>, %341, %cst_114 [1] : vector<32x32xf32> to vector<32xf32>
    %345 = vector.shape_cast %344 : vector<32xf32> to vector<32x1xf32>
    %cst_115 = arith.constant 3.200000e+01 : f32
    %346 = vector.broadcast %cst_115 : f32 to vector<32x1xf32>
    %347 = arith.divf %345, %346 : vector<32x1xf32>
    %348 = vector.broadcast %347 : vector<32x1xf32> to vector<32x32xf32>
    %349 = arith.subf %341, %348 : vector<32x32xf32>
    %350 = arith.mulf %349, %349 : vector<32x32xf32>
    %cst_116 = arith.constant dense<0.000000e+00> : vector<32xf32>
    %351 = vector.multi_reduction <add>, %350, %cst_116 [1] : vector<32x32xf32> to vector<32xf32>
    %352 = vector.shape_cast %351 : vector<32xf32> to vector<32x1xf32>
    %cst_117 = arith.constant 3.200000e+01 : f32
    %353 = vector.broadcast %cst_117 : f32 to vector<32x1xf32>
    %354 = arith.divf %352, %353 : vector<32x1xf32>
    %355 = vector.broadcast %347 : vector<32x1xf32> to vector<32x32xf32>
    %356 = arith.subf %341, %355 : vector<32x32xf32>
    %cst_118 = arith.constant 9.99999996E-13 : f32
    %357 = vector.broadcast %cst_118 : f32 to vector<32x1xf32>
    %358 = arith.addf %354, %357 : vector<32x1xf32>
    %359 = math.rsqrt %358 : vector<32x1xf32>
    %360 = vector.broadcast %359 : vector<32x1xf32> to vector<32x32xf32>
    %361 = arith.mulf %356, %360 : vector<32x32xf32>
    %362 = vector.broadcast %342 : vector<1x32xf32> to vector<32x32xf32>
    %363 = arith.mulf %361, %362 : vector<32x32xf32>
    %364 = vector.broadcast %343 : vector<1x32xf32> to vector<32x32xf32>
    %365 = arith.addf %363, %364 : vector<32x32xf32>
    %366 = vector.extract_strided_slice %341 {offsets = [0, 0], sizes = [16, 32], strides = [1, 1]} : vector<32x32xf32> to vector<16x32xf32>
    %367 = vector.extract_strided_slice %341 {offsets = [16, 0], sizes = [16, 32], strides = [1, 1]} : vector<32x32xf32> to vector<16x32xf32>
    %368 = vector.extract_strided_slice %365 {offsets = [0, 0], sizes = [16, 32], strides = [1, 1]} : vector<32x32xf32> to vector<16x32xf32>
    %369 = vector.extract_strided_slice %365 {offsets = [16, 0], sizes = [16, 32], strides = [1, 1]} : vector<32x32xf32> to vector<16x32xf32>
    %370 = tpu.concatenate %366, %367, %368, %369 in 1 : vector<16x32xf32>, vector<16x32xf32>, vector<16x32xf32>, vector<16x32xf32> -> vector<16x128xf32>
    %c0_119 = arith.constant 0 : index
    %c0_120 = arith.constant 0 : index
    %371 = vector.load %arg5[%c0_119, %c0_120] : memref<16x128xf32, #tpu.memory_space<vmem>>, vector<16x128xf32>
    tpu.vector_store %arg5[%c0_119, %c0_120], %370 {strides = array<i32>} : memref<16x128xf32, #tpu.memory_space<vmem>>, vector<16x128xf32>,
    return
  }
  func.func @transform_0(%arg0: i32) -> (i32, i32) {
    %c0_i32 = arith.constant 0 : i32
    %c0_i32_0 = arith.constant 0 : i32
    %c0_i32_1 = arith.constant 0 : i32
    return %c0_i32, %c0_i32_0 : i32, i32
  }
  func.func @transform_1(%arg0: i32) -> (i32, i32, i32) {
    %c0_i32 = arith.constant 0 : i32
    %c0_i32_0 = arith.constant 0 : i32
    %c0_i32_1 = arith.constant 0 : i32
    %c0_i32_2 = arith.constant 0 : i32
    return %c0_i32, %c0_i32_0, %c0_i32_1 : i32, i32, i32
  }
  func.func @transform_2(%arg0: i32) -> (i32, i32) {
    %c0_i32 = arith.constant 0 : i32
    %c0_i32_0 = arith.constant 0 : i32
    %c0_i32_1 = arith.constant 0 : i32
    return %c0_i32, %c0_i32_0 : i32, i32
  }
  func.func @transform_3(%arg0: i32) -> (i32, i32) {
    %c0_i32 = arith.constant 0 : i32
    %c0_i32_0 = arith.constant 0 : i32
    %c0_i32_1 = arith.constant 0 : i32
    return %c0_i32, %c0_i32_0 : i32, i32
  }
  func.func @transform_4(%arg0: i32) -> (i32, i32) {
    %c0_i32 = arith.constant 0 : i32
    %c0_i32_0 = arith.constant 0 : i32
    %c0_i32_1 = arith.constant 0 : i32
    return %c0_i32, %c0_i32_0 : i32, i32
  }
}

</mosaic_0001>

<llo_original>
// kernel: tpu_custom_call.1
$region0: #{tpu_custom_call.1}
  #allocation0 [shape = 'u32[]', space=smem, size = 0x4, offset = 0x4, fixed_abs, tag = 'smem constant byte address 0x4 - core index']
  #allocation1 [shape = 'u32[144,128]{1,0:T(1,128)}', space=vmem, size = 0x12000, scoped, tag = 'internal scratch']
  #allocation2 [shape = 'f32[32,32]{1,0:T(8,128)}', space=vmem, size = 0x4000, scoped, tag = 'scratch operand']
  %s0 = inlined_call_operand.hbm [shape: f32[32,33], index: 0, kind: input, shape index: {}]
  %s1 = inlined_call_operand.vmem [shape: f32[2,3,16], index: 1, kind: input, shape index: {}]
  %s2 = inlined_call_operand.hbm [shape: f32[192,128], index: 2, kind: input, shape index: {}]
  %s3 = inlined_call_operand.hbm [shape: f32[24,128], index: 3, kind: input, shape index: {}]
  %s4 = inlined_call_operand.hbm [shape: f32[16,128], index: 4, kind: output, shape index: {}]
  %s5 = sld [smem:[#allocation0]]
  $region38: #{tpu_custom_call.1} parent=0
    _
  %s7 = ssub.s32 1, %s5
  %s8 = scalar_select 0, %s7, %s5
  $region1: #{tpu_custom_call.1} parent=0
    #allocation3 [shape = 'u8[16384]{0}', space=vmem, size = 0x4000, scoped, tag = 'input window, operand 0, single buffered']
    #allocation4 [shape = 's32[1]{0}', space=sflag, size = 0x4, scoped, tag = 'scoped memory for tpu_custom_call.1']
    #allocation5 [shape = 's32[1]{0}', space=sflag, size = 0x4, scoped, tag = 'scoped memory for tpu_custom_call.1']
    #allocation6 [shape = 'u8[98304]{0}', space=vmem, size = 0x18000, scoped, tag = 'input window, operand 2, single buffered']
    #allocation7 [shape = 's32[1]{0}', space=sflag, size = 0x4, scoped, tag = 'scoped memory for tpu_custom_call.1']
    #allocation8 [shape = 'u8[12288]{0}', space=vmem, size = 0x3000, scoped, tag = 'input window, operand 3, single buffered']
    #allocation9 [shape = 'u8[8192]{0}', space=vmem, size = 0x2000, scoped, tag = 'output window, operand 0, single buffered']
    %9 = vsyncpa [#allocation4], 0
    %10 = vsyncpa [#allocation7], 0
    %11 = vsyncpa [#allocation5], 0
    // Predicated region
    $region2: #{tpu_custom_call.1} parent=1 // pred_check
      _
    $region3: #{tpu_custom_call.1} parent=1 // pred_check_branch
      %13 = sbr.rel (0) target = $region5
    $region4: #{tpu_custom_call.1} parent=1 // pred_region
      %s15 = ssub.s32 512, 512
      %16 = vsyncadd [#allocation4], %s15
      %s17 = sshll.u32 [#allocation3], 4
      %s18 = int_to_ptr.vmem [resolvable:$true] %s17
      %23 = dma.hbm_to_vmem [thread:$0]  %s0, 512, %s18, [#allocation4], 128, 128, 8
    $region5: #{tpu_custom_call.1} parent=1 // pred_fallthru
      _
    // Predicated region
    $region6: #{tpu_custom_call.1} parent=1 // pred_check
      _
    $region7: #{tpu_custom_call.1} parent=1 // pred_check_branch
      %25 = sbr.rel (0) target = $region9
    $region8: #{tpu_custom_call.1} parent=1 // pred_region
      _
    $region9: #{tpu_custom_call.1} parent=1 // pred_fallthru
      _
    // Predicated region
    $region10: #{tpu_custom_call.1} parent=1 // pred_check
      _
    $region11: #{tpu_custom_call.1} parent=1 // pred_check_branch
      %27 = sbr.rel (0) target = $region13
    $region12: #{tpu_custom_call.1} parent=1 // pred_region
      %s29 = ssub.s32 3072, 3072
      %30 = vsyncadd [#allocation7], %s29
      %s31 = sshll.u32 [#allocation6], 4
      %s32 = int_to_ptr.vmem [resolvable:$true] %s31
      %37 = dma.hbm_to_vmem [thread:$0]  %s2, 3072, %s32, [#allocation7], 128, 128, 8
    $region13: #{tpu_custom_call.1} parent=1 // pred_fallthru
      _
    // Predicated region
    $region14: #{tpu_custom_call.1} parent=1 // pred_check
      _
    $region15: #{tpu_custom_call.1} parent=1 // pred_check_branch
      %39 = sbr.rel (0) target = $region17
    $region16: #{tpu_custom_call.1} parent=1 // pred_region
      %s41 = ssub.s32 384, 384
      %42 = vsyncadd [#allocation7], %s41
      %s43 = sshll.u32 [#allocation8], 4
      %s44 = int_to_ptr.vmem [resolvable:$true] %s43
      %49 = dma.hbm_to_vmem [thread:$0]  %s3, 384, %s44, [#allocation7], 128, 128, 8
    $region17: #{tpu_custom_call.1} parent=1 // pred_fallthru
      _
    // Predicated region
    $region18: #{tpu_custom_call.1} parent=1 // pred_check
      _
    $region19: #{tpu_custom_call.1} parent=1 // pred_check_branch
      %51 = sbr.rel (0) target = $region21
    $region20: #{tpu_custom_call.1} parent=1 // pred_region
      %52 = dma.done [#allocation4], 512
    $region21: #{tpu_custom_call.1} parent=1 // pred_fallthru
      _
    // Predicated region
    $region22: #{tpu_custom_call.1} parent=1 // pred_check
      _
    $region23: #{tpu_custom_call.1} parent=1 // pred_check_branch
      %54 = sbr.rel (0) target = $region25
    $region24: #{tpu_custom_call.1} parent=1 // pred_region
      %55 = dma.done [#allocation7], 3072
    $region25: #{tpu_custom_call.1} parent=1 // pred_fallthru
      _
    // Predicated region
    $region26: #{tpu_custom_call.1} parent=1 // pred_check
      _
    $region27: #{tpu_custom_call.1} parent=1 // pred_check_branch
      %57 = sbr.rel (0) target = $region29
    $region28: #{tpu_custom_call.1} parent=1 // pred_region
      %58 = dma.done [#allocation7], 384
    $region29: #{tpu_custom_call.1} parent=1 // pred_fallthru
      _
    %v59 = vld [vmem:[#allocation3] sm:$0xff]
    %v60 = vld [vmem:[#allocation3 + $0x8] sm:$0xff]
    %v61 = vld [vmem:[#allocation3 + $0x10] sm:$0xff]
    %v62 = vld [vmem:[#allocation3 + $0x18] sm:$0xff]
    %v63 = vld [vmem:[%s1] sm:$0x7]
    %v64 = vsub.f32 1.0, %v63
    %v65 = vmul.f32 %v64, -1000.0
    %v66 = vadd.f32 %v63, 0.0001
    %v67 = vlog2.pop %v66
    %v68 = vmul.f32 %v67, 0.6931472
    %v70 = vrot.slane %v68, 1
    %v72 = vadd.f32 %v65, %v70
    %v73 = vrot.slane %v68, 2
    %v75 = vadd.f32 %v72, %v73
    %s76 = scalar_lea.vmem %s1, 4
    %v77 = vld [vmem:[%s76] sm:$0x7]
    %v78 = vsub.f32 1.0, %v77
    %v79 = vmul.f32 %v78, -1000.0
    %v80 = vadd.f32 %v77, 0.0001
    %v81 = vlog2.pop %v80
    %v82 = vmul.f32 %v81, 0.6931472
    %v84 = vrot.slane %v82, 1
    %v86 = vadd.f32 %v79, %v84
    %v87 = vrot.slane %v82, 2
    %v89 = vadd.f32 %v86, %v87
    %v90 = vlaneseq
    %v91 = vshrl.u32 %v90, 7
    %v92 = vsub.s32 0, %v91
    %v93 = vrot.slane %v75, %v92
    %vm94 = vcmask 130048
    %v95 = vsel %vm94, %v93, -100000.0
    %v96 = vlaneseq
    %v97 = vshrl.u32 %v96, 7
    %v98 = vsub.s32 0, %v97
    %v99 = vrot.slane %v89, %v98
    %101 = vrot.lane.b32.xlu0 %v99, 16
    %v102 = vpop.permute.xlu0 %101
    %v104 = vsel %vm94, -100000.0, %v102
    %v105 = vld [vmem:[#allocation6] sm:$0xff]
    %v106 = vld [vmem:[#allocation6 + $0x8] sm:$0xff]
    %v107 = vld [vmem:[#allocation6 + $0x10] sm:$0xff]
    %v108 = vld [vmem:[#allocation6 + $0x18] sm:$0xff]
    %v109 = vld [vmem:[#allocation6 + $0x20] sm:$0xff]
    %v110 = vld [vmem:[#allocation6 + $0x28] sm:$0xff]
    %v111 = vld [vmem:[#allocation6 + $0x30] sm:$0xff]
    %v112 = vld [vmem:[#allocation6 + $0x38] sm:$0xff]
    %v113 = vld [vmem:[#allocation6 + $0x40] sm:$0xff]
    %v114 = vld [vmem:[#allocation6 + $0x48] sm:$0xff]
    %v115 = vld [vmem:[#allocation6 + $0x50] sm:$0xff]
    %v116 = vld [vmem:[#allocation6 + $0x58] sm:$0xff]
    %v117 = vld [vmem:[#allocation8] sm:$0xff]
    %vm118 = vcmask 261120
    %v119 = vsel %vm118, %v59, 0.0
    %120 = vadd.xlane.f32.xlu0 %v119
    %v121 = vpop.xlane.xlu0 %120
    %v122 = vsel %vm118, %v60, 0.0
    %123 = vadd.xlane.f32.xlu0 %v122
    %v124 = vpop.xlane.xlu0 %123
    %v125 = vsel %vm118, %v61, 0.0
    %126 = vadd.xlane.f32.xlu0 %v125
    %v127 = vpop.xlane.xlu0 %126
    %v128 = vsel %vm118, %v62, 0.0
    %129 = vadd.xlane.f32.xlu0 %v128
    %v130 = vpop.xlane.xlu0 %129
    %v131 = vrcp.pop 32.0
    %v132 = vmul.f32 %v121, %v131
    %v133 = vmul.f32 %v124, %v131
    %v134 = vmul.f32 %v127, %v131
    %v135 = vmul.f32 %v130, %v131
    %v136 = vsub.f32 %v59, %v132
    %v137 = vsub.f32 %v60, %v133
    %v138 = vsub.f32 %v61, %v134
    %v139 = vsub.f32 %v62, %v135
    %v140 = vmul.f32 %v136, %v136
    %v141 = vmul.f32 %v137, %v137
    %v142 = vmul.f32 %v138, %v138
    %v143 = vmul.f32 %v139, %v139
    %v144 = vsel %vm118, %v140, 0.0
    %145 = vadd.xlane.f32.xlu0 %v144
    %v146 = vpop.xlane.xlu0 %145
    %v147 = vsel %vm118, %v141, 0.0
    %148 = vadd.xlane.f32.xlu0 %v147
    %v149 = vpop.xlane.xlu0 %148
    %v150 = vsel %vm118, %v142, 0.0
    %151 = vadd.xlane.f32.xlu0 %v150
    %v152 = vpop.xlane.xlu0 %151
    %v153 = vsel %vm118, %v143, 0.0
    %154 = vadd.xlane.f32.xlu0 %v153
    %v155 = vpop.xlane.xlu0 %154
    %v156 = vmul.f32 %v146, %v131
    %v157 = vmul.f32 %v149, %v131
    %v158 = vmul.f32 %v152, %v131
    %v159 = vmul.f32 %v155, %v131
    %v160 = vadd.f32 %v156, 1e-12
    %v161 = vadd.f32 %v157, 1e-12
    %v162 = vadd.f32 %v158, 1e-12
    %v163 = vadd.f32 %v159, 1e-12
    %v164 = vrsqrt.pop %v160
    %v165 = vrsqrt.pop %v161
    %v166 = vrsqrt.pop %v162
    %v167 = vrsqrt.pop %v163
    %v168 = vmul.f32 %v136, %v164
    %v169 = vmul.f32 %v137, %v165
    %v170 = vmul.f32 %v138, %v166
    %v171 = vmul.f32 %v139, %v167
    %v172 = vlaneseq
    %v173 = vshrl.u32 %v172, 7
    %v174 = vsub.s32 0, %v173
    %v175 = vrot.slane %v117, %v174
    %v176 = vmul.f32 %v168, %v175
    %v177 = vmul.f32 %v169, %v175
    %v178 = vmul.f32 %v170, %v175
    %v179 = vmul.f32 %v171, %v175
    %v180 = vlaneseq
    %v181 = vshrl.u32 %v180, 7
    %v182 = vsub.s32 1, %v181
    %v183 = vrot.slane %v117, %v182
    %v184 = vadd.f32 %v176, %v183
    %v185 = vadd.f32 %v177, %v183
    %v186 = vadd.f32 %v178, %v183
    %v187 = vadd.f32 %v179, %v183
    %v188 = vlaneseq
    %v189 = vshrl.u32 %v188, 7
    %v190 = vsub.s32 2, %v189
    %v191 = vrot.slane %v117, %v190
    %v193 = vsel %vm118, %v184, 0
    %v196 = vsel %vm118, %v185, 0
    %v199 = vsel %vm118, %v186, 0
    %v202 = vsel %vm118, %v187, 0
    %204 = vmatprep.subr.mxu0 0.0
    %205 = vmatpush1.msra.mxu0 0.0
    %206 = vmatprep.subr.mxu0 0.0
    %207 = vmatpush1.msra.mxu0 0.0
    %208 = vmatprep.subr.mxu0 0.0
    %209 = vmatpush1.msra.mxu0 0.0
    %210 = vmatprep.subr.mxu0 0.0
    %211 = vmatpush1.msra.mxu0 0.0
    %212 = vmatprep.subr.mxu0 0.0
    %213 = vmatpush1.msra.mxu0 0.0
    %214 = vmatprep.subr.mxu0 0.0
    %215 = vmatpush1.msra.mxu0 0.0
    %216 = vmatprep.subr.mxu0 0.0
    %217 = vmatpush1.msra.mxu0 0.0
    %218 = vmatprep.subr.mxu0 0.0
    %219 = vmatpush1.msra.mxu0 0.0
    %220 = vmatprep.subr.mxu0 0.0
    %221 = vmatpush1.msra.mxu0 0.0
    %222 = vmatprep.subr.mxu0 0.0
    %223 = vmatpush1.msra.mxu0 0.0
    %224 = vmatprep.subr.mxu0 0.0
    %225 = vmatpush1.msra.mxu0 0.0
    %226 = vmatprep.subr.mxu0 0.0
    %227 = vmatpush1.msra.mxu0 0.0
    %228 = vmatprep.subr.mxu0 0.0
    %229 = vmatpush1.msra.mxu0 %v108
    %230 = vmatprep.subr.mxu0 0.0
    %231 = vmatpush1.msra.mxu0 %v107
    %232 = vmatprep.subr.mxu0 0.0
    %233 = vmatpush1.msra.mxu0 %v106
    %234 = vmatprep.subr.mxu0 0.0
    %235 = vmatpush1.msra.mxu0 %v105
    %236 = vmatprep.subr.mxu0 0.0
    %237 = vmatpush2.msra.mxu0 0.0
    %238 = vmatprep.subr.mxu0 0.0
    %239 = vmatpush2.msra.mxu0 0.0
    %240 = vmatprep.subr.mxu0 0.0
    %241 = vmatpush2.msra.mxu0 0.0
    %242 = vmatprep.subr.mxu0 0.0
    %243 = vmatpush2.msra.mxu0 0.0
    %244 = vmatprep.subr.mxu0 0.0
    %245 = vmatpush2.msra.mxu0 0.0
    %246 = vmatprep.subr.mxu0 0.0
    %247 = vmatpush2.msra.mxu0 0.0
    %248 = vmatprep.subr.mxu0 0.0
    %249 = vmatpush2.msra.mxu0 0.0
    %250 = vmatprep.subr.mxu0 0.0
    %251 = vmatpush2.msra.mxu0 0.0
    %252 = vmatprep.subr.mxu0 0.0
    %253 = vmatpush2.msra.mxu0 0.0
    %254 = vmatprep.subr.mxu0 0.0
    %255 = vmatpush2.msra.mxu0 0.0
    %256 = vmatprep.subr.mxu0 0.0
    %257 = vmatpush2.msra.mxu0 0.0
    %258 = vmatprep.subr.mxu0 0.0
    %259 = vmatpush2.msra.mxu0 0.0
    %260 = vmatprep.subr.mxu0 0.0
    %261 = vmatpush2.msra.mxu0 0.0
    %262 = vmatprep.subr.mxu0 0.0
    %263 = vmatpush2.msra.mxu0 0.0
    %264 = vmatprep.subr.mxu0 0.0
    %265 = vmatpush2.msra.mxu0 0.0
    %266 = vmatprep.subr.mxu0 0.0
    %267 = vmatpush2.msra.mxu0 0.0
    %268 = vmatprep.mubr.f32.mxu0 0.0
    %269 = vmatmul.mubr.f32.gmra.mxu0 %v193
    %v270 = vpop.f32.mrf.mxu0
    %v271 = vadd.f32 %v191, %v270
    %v272 = vpop.f32.mrf.mxu0
    %273 = vmatprep.mubr.f32.mxu0 0.0
    %274 = vmatmul.mubr.f32.gmra.mxu0 %v196
    %v275 = vpop.f32.mrf.mxu0
    %v276 = vadd.f32 %v191, %v275
    %v277 = vpop.f32.mrf.mxu0
    %278 = vmatprep.mubr.f32.mxu0 0.0
    %279 = vmatmul.mubr.f32.gmra.mxu0 %v199
    %v280 = vpop.f32.mrf.mxu0
    %v281 = vadd.f32 %v191, %v280
    %v282 = vpop.f32.mrf.mxu0
    %283 = vmatprep.mubr.f32.mxu0 0.0
    %284 = vmatmul.mubr.f32.gmra.mxu0 %v202
    %v285 = vpop.f32.mrf.mxu0
    %v286 = vadd.f32 %v191, %v285
    %v287 = vpop.f32.mrf.mxu0
    %288 = vdwg.mxu0
    %293 = vrot.lane.b32.xlu0 %v271, 96
    %v294 = vpop.permute.xlu0 %293
    %295 = vrot.lane.b32.xlu0 %v276, 96
    %v296 = vpop.permute.xlu0 %295
    %297 = vrot.lane.b32.xlu0 %v281, 96
    %v298 = vpop.permute.xlu0 %297
    %299 = vrot.lane.b32.xlu0 %v286, 96
    %v300 = vpop.permute.xlu0 %299
    %vm301 = vcmask 64512
    %v302 = vsel %vm301, %v271, 0
    %v304 = vsel %vm301, %v276, 0
    %v306 = vsel %vm301, %v281, 0
    %v308 = vsel %vm301, %v286, 0
    %v310 = vsel %vm301, %v294, 0
    %v312 = vsel %vm301, %v296, 0
    %v314 = vsel %vm301, %v298, 0
    %v316 = vsel %vm301, %v300, 0
    %318 = vmatprep.subr.mxu0 0.0
    %319 = vmatpush1.xpose.msra.mxu0 0.0
    %320 = vmatprep.subr.mxu0 0.0
    %321 = vmatpush1.xpose.msra.mxu0 0.0
    %322 = vmatprep.subr.mxu0 0.0
    %323 = vmatpush1.xpose.msra.mxu0 0.0
    %324 = vmatprep.subr.mxu0 0.0
    %325 = vmatpush1.xpose.msra.mxu0 0.0
    %326 = vmatprep.subr.mxu0 0.0
    %327 = vmatpush1.xpose.msra.mxu0 0.0
    %328 = vmatprep.subr.mxu0 0.0
    %329 = vmatpush1.xpose.msra.mxu0 0.0
    %330 = vmatprep.subr.mxu0 0.0
    %331 = vmatpush1.xpose.msra.mxu0 0.0
    %332 = vmatprep.subr.mxu0 0.0
    %333 = vmatpush1.xpose.msra.mxu0 0.0
    %334 = vmatprep.subr.mxu0 0.0
    %335 = vmatpush1.xpose.msra.mxu0 0.0
    %336 = vmatprep.subr.mxu0 0.0
    %337 = vmatpush1.xpose.msra.mxu0 0.0
    %338 = vmatprep.subr.mxu0 0.0
    %339 = vmatpush1.xpose.msra.mxu0 0.0
    %340 = vmatprep.subr.mxu0 0.0
    %341 = vmatpush1.xpose.msra.mxu0 0.0
    %342 = vmatprep.subr.mxu0 0.0
    %343 = vmatpush1.xpose.msra.mxu0 %v316
    %344 = vmatprep.subr.mxu0 0.0
    %345 = vmatpush1.xpose.msra.mxu0 %v314
    %346 = vmatprep.subr.mxu0 0.0
    %347 = vmatpush1.xpose.msra.mxu0 %v312
    %348 = vmatprep.subr.mxu0 0.0
    %349 = vmatpush1.xpose.msra.mxu0 %v310
    %350 = vmatprep.subr.mxu0 0.0
    %351 = vmatpush2.xpose.msra.mxu0 0.0
    %352 = vmatprep.subr.mxu0 0.0
    %353 = vmatpush2.xpose.msra.mxu0 0.0
    %354 = vmatprep.subr.mxu0 0.0
    %355 = vmatpush2.xpose.msra.mxu0 0.0
    %356 = vmatprep.subr.mxu0 0.0
    %357 = vmatpush2.xpose.msra.mxu0 0.0
    %358 = vmatprep.subr.mxu0 0.0
    %359 = vmatpush2.xpose.msra.mxu0 0.0
    %360 = vmatprep.subr.mxu0 0.0
    %361 = vmatpush2.xpose.msra.mxu0 0.0
    %362 = vmatprep.subr.mxu0 0.0
    %363 = vmatpush2.xpose.msra.mxu0 0.0
    %364 = vmatprep.subr.mxu0 0.0
    %365 = vmatpush2.xpose.msra.mxu0 0.0
    %366 = vmatprep.subr.mxu0 0.0
    %367 = vmatpush2.xpose.msra.mxu0 0.0
    %368 = vmatprep.subr.mxu0 0.0
    %369 = vmatpush2.xpose.msra.mxu0 0.0
    %370 = vmatprep.subr.mxu0 0.0
    %371 = vmatpush2.xpose.msra.mxu0 0.0
    %372 = vmatprep.subr.mxu0 0.0
    %373 = vmatpush2.xpose.msra.mxu0 0.0
    %374 = vmatprep.subr.mxu0 0.0
    %375 = vmatpush2.xpose.msra.mxu0 0.0
    %376 = vmatprep.subr.mxu0 0.0
    %377 = vmatpush2.xpose.msra.mxu0 0.0
    %378 = vmatprep.subr.mxu0 0.0
    %379 = vmatpush2.xpose.msra.mxu0 0.0
    %380 = vmatprep.subr.mxu0 0.0
    %381 = vmatpush2.xpose.msra.mxu0 0.0
    %382 = vmatprep.mubr.f32.mxu0 0.0
    %383 = vmatmul.mubr.f32.gmra.mxu0 %v302
    %v384 = vpop.f32.mrf.mxu0
    %v385 = vadd.f32 %v95, %v384
    %v386 = vpop.f32.mrf.mxu0
    %387 = vmatprep.mubr.f32.mxu0 0.0
    %388 = vmatmul.mubr.f32.gmra.mxu0 %v304
    %v389 = vpop.f32.mrf.mxu0
    %v390 = vadd.f32 %v95, %v389
    %v391 = vpop.f32.mrf.mxu0
    %392 = vmatprep.mubr.f32.mxu0 0.0
    %393 = vmatmul.mubr.f32.gmra.mxu0 %v306
    %v394 = vpop.f32.mrf.mxu0
    %v395 = vadd.f32 %v104, %v394
    %v396 = vpop.f32.mrf.mxu0
    %397 = vmatprep.mubr.f32.mxu0 0.0
    %398 = vmatmul.mubr.f32.gmra.mxu0 %v308
    %v399 = vpop.f32.mrf.mxu0
    %v400 = vadd.f32 %v104, %v399
    %v401 = vpop.f32.mrf.mxu0
    %402 = vdwg.mxu0
    %v403 = vsel %vm118, %v385, -inf
    %404 = vmax.xlane.f32.xlu0 %v403
    %v405 = vpop.xlane.xlu0 %404
    %v406 = vsel %vm118, %v390, -inf
    %407 = vmax.xlane.f32.xlu0 %v406
    %v408 = vpop.xlane.xlu0 %407
    %v409 = vsel %vm118, %v395, -inf
    %410 = vmax.xlane.f32.xlu0 %v409
    %v411 = vpop.xlane.xlu0 %410
    %v412 = vsel %vm118, %v400, -inf
    %413 = vmax.xlane.f32.xlu0 %v412
    %v414 = vpop.xlane.xlu0 %413
    %v415 = vsub.f32 %v385, %v405
    %v416 = vsub.f32 %v390, %v408
    %v417 = vsub.f32 %v395, %v411
    %v418 = vsub.f32 %v400, %v414
    %v419 = vmul.f32 %v415, 1.442695
    %v420 = vpow.pop %v419
    %v421 = vmul.f32 %v416, 1.442695
    %v422 = vpow.pop %v421
    %v423 = vmul.f32 %v417, 1.442695
    %v424 = vpow.pop %v423
    %v425 = vmul.f32 %v418, 1.442695
    %v426 = vpow.pop %v425
    %v427 = vsel %vm118, %v420, 0.0
    %428 = vadd.xlane.f32.xlu0 %v427
    %v429 = vpop.xlane.xlu0 %428
    %v430 = vsel %vm118, %v422, 0.0
    %431 = vadd.xlane.f32.xlu0 %v430
    %v432 = vpop.xlane.xlu0 %431
    %v433 = vsel %vm118, %v424, 0.0
    %434 = vadd.xlane.f32.xlu0 %v433
    %v435 = vpop.xlane.xlu0 %434
    %v436 = vsel %vm118, %v426, 0.0
    %437 = vadd.xlane.f32.xlu0 %v436
    %v438 = vpop.xlane.xlu0 %437
    %v439 = vrcp.pop %v429
    %v440 = vmul.f32 %v420, %v439
    %v441 = vrcp.pop %v432
    %v442 = vmul.f32 %v422, %v441
    %v443 = vrcp.pop %v435
    %v444 = vmul.f32 %v424, %v443
    %v445 = vrcp.pop %v438
    %v446 = vmul.f32 %v426, %v445
    %447 = vrot.lane.b32.xlu0 %v271, 64
    %v448 = vpop.permute.xlu0 %447
    %449 = vrot.lane.b32.xlu0 %v276, 64
    %v450 = vpop.permute.xlu0 %449
    %451 = vrot.lane.b32.xlu0 %v281, 64
    %v452 = vpop.permute.xlu0 %451
    %453 = vrot.lane.b32.xlu0 %v286, 64
    %v454 = vpop.permute.xlu0 %453
    %v460 = vsel %vm118, %v440, 0
    %v463 = vsel %vm118, %v442, 0
    %v466 = vsel %vm118, %v444, 0
    %v469 = vsel %vm118, %v446, 0
    %471 = vmatprep.subr.mxu0 0.0
    %472 = vmatpush1.msra.mxu0 0.0
    %473 = vmatprep.subr.mxu0 0.0
    %474 = vmatpush1.msra.mxu0 0.0
    %475 = vmatprep.subr.mxu0 0.0
    %476 = vmatpush1.msra.mxu0 0.0
    %477 = vmatprep.subr.mxu0 0.0
    %478 = vmatpush1.msra.mxu0 0.0
    %479 = vmatprep.subr.mxu0 0.0
    %480 = vmatpush1.msra.mxu0 0.0
    %481 = vmatprep.subr.mxu0 0.0
    %482 = vmatpush1.msra.mxu0 0.0
    %483 = vmatprep.subr.mxu0 0.0
    %484 = vmatpush1.msra.mxu0 0.0
    %485 = vmatprep.subr.mxu0 0.0
    %486 = vmatpush1.msra.mxu0 0.0
    %487 = vmatprep.subr.mxu0 0.0
    %488 = vmatpush1.msra.mxu0 0.0
    %489 = vmatprep.subr.mxu0 0.0
    %490 = vmatpush1.msra.mxu0 0.0
    %491 = vmatprep.subr.mxu0 0.0
    %492 = vmatpush1.msra.mxu0 0.0
    %493 = vmatprep.subr.mxu0 0.0
    %494 = vmatpush1.msra.mxu0 0.0
    %495 = vmatprep.subr.mxu0 0.0
    %496 = vmatpush1.msra.mxu0 %v454
    %497 = vmatprep.subr.mxu0 0.0
    %498 = vmatpush1.msra.mxu0 %v452
    %499 = vmatprep.subr.mxu0 0.0
    %500 = vmatpush1.msra.mxu0 %v450
    %501 = vmatprep.subr.mxu0 0.0
    %502 = vmatpush1.msra.mxu0 %v448
    %503 = vmatprep.subr.mxu0 0.0
    %504 = vmatpush2.msra.mxu0 0.0
    %505 = vmatprep.subr.mxu0 0.0
    %506 = vmatpush2.msra.mxu0 0.0
    %507 = vmatprep.subr.mxu0 0.0
    %508 = vmatpush2.msra.mxu0 0.0
    %509 = vmatprep.subr.mxu0 0.0
    %510 = vmatpush2.msra.mxu0 0.0
    %511 = vmatprep.subr.mxu0 0.0
    %512 = vmatpush2.msra.mxu0 0.0
    %513 = vmatprep.subr.mxu0 0.0
    %514 = vmatpush2.msra.mxu0 0.0
    %515 = vmatprep.subr.mxu0 0.0
    %516 = vmatpush2.msra.mxu0 0.0
    %517 = vmatprep.subr.mxu0 0.0
    %518 = vmatpush2.msra.mxu0 0.0
    %519 = vmatprep.subr.mxu0 0.0
    %520 = vmatpush2.msra.mxu0 0.0
    %521 = vmatprep.subr.mxu0 0.0
    %522 = vmatpush2.msra.mxu0 0.0
    %523 = vmatprep.subr.mxu0 0.0
    %524 = vmatpush2.msra.mxu0 0.0
    %525 = vmatprep.subr.mxu0 0.0
    %526 = vmatpush2.msra.mxu0 0.0
    %527 = vmatprep.subr.mxu0 0.0
    %528 = vmatpush2.msra.mxu0 0.0
    %529 = vmatprep.subr.mxu0 0.0
    %530 = vmatpush2.msra.mxu0 0.0
    %531 = vmatprep.subr.mxu0 0.0
    %532 = vmatpush2.msra.mxu0 0.0
    %533 = vmatprep.subr.mxu0 0.0
    %534 = vmatpush2.msra.mxu0 0.0
    %535 = vmatprep.mubr.f32.mxu0 0.0
    %536 = vmatmul.mubr.f32.gmra.mxu0 %v460
    %v537 = vpop.f32.mrf.mxu0
    %v538 = vadd.f32 0.0, %v537
    %v539 = vpop.f32.mrf.mxu0
    %540 = vmatprep.mubr.f32.mxu0 0.0
    %541 = vmatmul.mubr.f32.gmra.mxu0 %v463
    %v542 = vpop.f32.mrf.mxu0
    %v543 = vadd.f32 0.0, %v542
    %v544 = vpop.f32.mrf.mxu0
    %545 = vmatprep.mubr.f32.mxu0 0.0
    %546 = vmatmul.mubr.f32.gmra.mxu0 %v466
    %v547 = vpop.f32.mrf.mxu0
    %v548 = vadd.f32 0.0, %v547
    %v549 = vpop.f32.mrf.mxu0
    %550 = vmatprep.mubr.f32.mxu0 0.0
    %551 = vmatmul.mubr.f32.gmra.mxu0 %v469
    %v552 = vpop.f32.mrf.mxu0
    %v553 = vadd.f32 0.0, %v552
    %v554 = vpop.f32.mrf.mxu0
    %555 = vdwg.mxu0
    %556 = vst.msk [vmem:[#allocation2] sm:$0xff] %vm301, %v538
    %557 = vst.msk [vmem:[#allocation2 + $0x8] sm:$0xff] %vm301, %v543
    %558 = vst.msk [vmem:[#allocation2 + $0x10] sm:$0xff] %vm301, %v548
    %559 = vst.msk [vmem:[#allocation2 + $0x18] sm:$0xff] %vm301, %v553
    %560 = vrot.lane.b32.xlu0 %v271, 120
    %v561 = vpop.permute.xlu0 %560
    %562 = vrot.lane.b32.xlu0 %v276, 120
    %v563 = vpop.permute.xlu0 %562
    %564 = vrot.lane.b32.xlu0 %v281, 120
    %v565 = vpop.permute.xlu0 %564
    %566 = vrot.lane.b32.xlu0 %v286, 120
    %v567 = vpop.permute.xlu0 %566
    %568 = vrot.lane.b32.xlu0 %v271, 88
    %v569 = vpop.permute.xlu0 %568
    %570 = vrot.lane.b32.xlu0 %v276, 88
    %v571 = vpop.permute.xlu0 %570
    %572 = vrot.lane.b32.xlu0 %v281, 88
    %v573 = vpop.permute.xlu0 %572
    %574 = vrot.lane.b32.xlu0 %v286, 88
    %v575 = vpop.permute.xlu0 %574
    %v576 = vsel %vm301, %v561, 0
    %v578 = vsel %vm301, %v563, 0
    %v580 = vsel %vm301, %v565, 0
    %v582 = vsel %vm301, %v567, 0
    %v584 = vsel %vm301, %v569, 0
    %v586 = vsel %vm301, %v571, 0
    %v588 = vsel %vm301, %v573, 0
    %v590 = vsel %vm301, %v575, 0
    %592 = vmatprep.subr.mxu0 0.0
    %593 = vmatpush1.xpose.msra.mxu0 0.0
    %594 = vmatprep.subr.mxu0 0.0
    %595 = vmatpush1.xpose.msra.mxu0 0.0
    %596 = vmatprep.subr.mxu0 0.0
    %597 = vmatpush1.xpose.msra.mxu0 0.0
    %598 = vmatprep.subr.mxu0 0.0
    %599 = vmatpush1.xpose.msra.mxu0 0.0
    %600 = vmatprep.subr.mxu0 0.0
    %601 = vmatpush1.xpose.msra.mxu0 0.0
    %602 = vmatprep.subr.mxu0 0.0
    %603 = vmatpush1.xpose.msra.mxu0 0.0
    %604 = vmatprep.subr.mxu0 0.0
    %605 = vmatpush1.xpose.msra.mxu0 0.0
    %606 = vmatprep.subr.mxu0 0.0
    %607 = vmatpush1.xpose.msra.mxu0 0.0
    %608 = vmatprep.subr.mxu0 0.0
    %609 = vmatpush1.xpose.msra.mxu0 0.0
    %610 = vmatprep.subr.mxu0 0.0
    %611 = vmatpush1.xpose.msra.mxu0 0.0
    %612 = vmatprep.subr.mxu0 0.0
    %613 = vmatpush1.xpose.msra.mxu0 0.0
    %614 = vmatprep.subr.mxu0 0.0
    %615 = vmatpush1.xpose.msra.mxu0 0.0
    %616 = vmatprep.subr.mxu0 0.0
    %617 = vmatpush1.xpose.msra.mxu0 %v590
    %618 = vmatprep.subr.mxu0 0.0
    %619 = vmatpush1.xpose.msra.mxu0 %v588
    %620 = vmatprep.subr.mxu0 0.0
    %621 = vmatpush1.xpose.msra.mxu0 %v586
    %622 = vmatprep.subr.mxu0 0.0
    %623 = vmatpush1.xpose.msra.mxu0 %v584
    %624 = vmatprep.subr.mxu0 0.0
    %625 = vmatpush2.xpose.msra.mxu0 0.0
    %626 = vmatprep.subr.mxu0 0.0
    %627 = vmatpush2.xpose.msra.mxu0 0.0
    %628 = vmatprep.subr.mxu0 0.0
    %629 = vmatpush2.xpose.msra.mxu0 0.0
    %630 = vmatprep.subr.mxu0 0.0
    %631 = vmatpush2.xpose.msra.mxu0 0.0
    %632 = vmatprep.subr.mxu0 0.0
    %633 = vmatpush2.xpose.msra.mxu0 0.0
    %634 = vmatprep.subr.mxu0 0.0
    %635 = vmatpush2.xpose.msra.mxu0 0.0
    %636 = vmatprep.subr.mxu0 0.0
    %637 = vmatpush2.xpose.msra.mxu0 0.0
    %638 = vmatprep.subr.mxu0 0.0
    %639 = vmatpush2.xpose.msra.mxu0 0.0
    %640 = vmatprep.subr.mxu0 0.0
    %641 = vmatpush2.xpose.msra.mxu0 0.0
    %642 = vmatprep.subr.mxu0 0.0
    %643 = vmatpush2.xpose.msra.mxu0 0.0
    %644 = vmatprep.subr.mxu0 0.0
    %645 = vmatpush2.xpose.msra.mxu0 0.0
    %646 = vmatprep.subr.mxu0 0.0
    %647 = vmatpush2.xpose.msra.mxu0 0.0
    %648 = vmatprep.subr.mxu0 0.0
    %649 = vmatpush2.xpose.msra.mxu0 0.0
    %650 = vmatprep.subr.mxu0 0.0
    %651 = vmatpush2.xpose.msra.mxu0 0.0
    %652 = vmatprep.subr.mxu0 0.0
    %653 = vmatpush2.xpose.msra.mxu0 0.0
    %654 = vmatprep.subr.mxu0 0.0
    %655 = vmatpush2.xpose.msra.mxu0 0.0
    %656 = vmatprep.mubr.f32.mxu0 0.0
    %657 = vmatmul.mubr.f32.gmra.mxu0 %v576
    %v658 = vpop.f32.mrf.mxu0
    %v659 = vadd.f32 %v95, %v658
    %v660 = vpop.f32.mrf.mxu0
    %661 = vmatprep.mubr.f32.mxu0 0.0
    %662 = vmatmul.mubr.f32.gmra.mxu0 %v578
    %v663 = vpop.f32.mrf.mxu0
    %v664 = vadd.f32 %v95, %v663
    %v665 = vpop.f32.mrf.mxu0
    %666 = vmatprep.mubr.f32.mxu0 0.0
    %667 = vmatmul.mubr.f32.gmra.mxu0 %v580
    %v668 = vpop.f32.mrf.mxu0
    %v669 = vadd.f32 %v104, %v668
    %v670 = vpop.f32.mrf.mxu0
    %671 = vmatprep.mubr.f32.mxu0 0.0
    %672 = vmatmul.mubr.f32.gmra.mxu0 %v582
    %v673 = vpop.f32.mrf.mxu0
    %v674 = vadd.f32 %v104, %v673
    %v675 = vpop.f32.mrf.mxu0
    %676 = vdwg.mxu0
    %v677 = vsel %vm118, %v659, -inf
    %678 = vmax.xlane.f32.xlu0 %v677
    %v679 = vpop.xlane.xlu0 %678
    %v680 = vsel %vm118, %v664, -inf
    %681 = vmax.xlane.f32.xlu0 %v680
    %v682 = vpop.xlane.xlu0 %681
    %v683 = vsel %vm118, %v669, -inf
    %684 = vmax.xlane.f32.xlu0 %v683
    %v685 = vpop.xlane.xlu0 %684
    %v686 = vsel %vm118, %v674, -inf
    %687 = vmax.xlane.f32.xlu0 %v686
    %v688 = vpop.xlane.xlu0 %687
    %v689 = vsub.f32 %v659, %v679
    %v690 = vsub.f32 %v664, %v682
    %v691 = vsub.f32 %v669, %v685
    %v692 = vsub.f32 %v674, %v688
    %v693 = vmul.f32 %v689, 1.442695
    %v694 = vpow.pop %v693
    %v695 = vmul.f32 %v690, 1.442695
    %v696 = vpow.pop %v695
    %v697 = vmul.f32 %v691, 1.442695
    %v698 = vpow.pop %v697
    %v699 = vmul.f32 %v692, 1.442695
    %v700 = vpow.pop %v699
    %v701 = vsel %vm118, %v694, 0.0
    %702 = vadd.xlane.f32.xlu0 %v701
    %v703 = vpop.xlane.xlu0 %702
    %v704 = vsel %vm118, %v696, 0.0
    %705 = vadd.xlane.f32.xlu0 %v704
    %v706 = vpop.xlane.xlu0 %705
    %v707 = vsel %vm118, %v698, 0.0
    %708 = vadd.xlane.f32.xlu0 %v707
    %v709 = vpop.xlane.xlu0 %708
    %v710 = vsel %vm118, %v700, 0.0
    %711 = vadd.xlane.f32.xlu0 %v710
    %v712 = vpop.xlane.xlu0 %711
    %v713 = vrcp.pop %v703
    %v714 = vmul.f32 %v694, %v713
    %v715 = vrcp.pop %v706
    %v716 = vmul.f32 %v696, %v715
    %v717 = vrcp.pop %v709
    %v718 = vmul.f32 %v698, %v717
    %v719 = vrcp.pop %v712
    %v720 = vmul.f32 %v700, %v719
    %721 = vrot.lane.b32.xlu0 %v271, 56
    %v722 = vpop.permute.xlu0 %721
    %723 = vrot.lane.b32.xlu0 %v276, 56
    %v724 = vpop.permute.xlu0 %723
    %725 = vrot.lane.b32.xlu0 %v281, 56
    %v726 = vpop.permute.xlu0 %725
    %727 = vrot.lane.b32.xlu0 %v286, 56
    %v728 = vpop.permute.xlu0 %727
    %v734 = vsel %vm118, %v714, 0
    %v737 = vsel %vm118, %v716, 0
    %v740 = vsel %vm118, %v718, 0
    %v743 = vsel %vm118, %v720, 0
    %745 = vmatprep.subr.mxu0 0.0
    %746 = vmatpush1.msra.mxu0 0.0
    %747 = vmatprep.subr.mxu0 0.0
    %748 = vmatpush1.msra.mxu0 0.0
    %749 = vmatprep.subr.mxu0 0.0
    %750 = vmatpush1.msra.mxu0 0.0
    %751 = vmatprep.subr.mxu0 0.0
    %752 = vmatpush1.msra.mxu0 0.0
    %753 = vmatprep.subr.mxu0 0.0
    %754 = vmatpush1.msra.mxu0 0.0
    %755 = vmatprep.subr.mxu0 0.0
    %756 = vmatpush1.msra.mxu0 0.0
    %757 = vmatprep.subr.mxu0 0.0
    %758 = vmatpush1.msra.mxu0 0.0
    %759 = vmatprep.subr.mxu0 0.0
    %760 = vmatpush1.msra.mxu0 0.0
    %761 = vmatprep.subr.mxu0 0.0
    %762 = vmatpush1.msra.mxu0 0.0
    %763 = vmatprep.subr.mxu0 0.0
    %764 = vmatpush1.msra.mxu0 0.0
    %765 = vmatprep.subr.mxu0 0.0
    %766 = vmatpush1.msra.mxu0 0.0
    %767 = vmatprep.subr.mxu0 0.0
    %768 = vmatpush1.msra.mxu0 0.0
    %769 = vmatprep.subr.mxu0 0.0
    %770 = vmatpush1.msra.mxu0 %v728
    %771 = vmatprep.subr.mxu0 0.0
    %772 = vmatpush1.msra.mxu0 %v726
    %773 = vmatprep.subr.mxu0 0.0
    %774 = vmatpush1.msra.mxu0 %v724
    %775 = vmatprep.subr.mxu0 0.0
    %776 = vmatpush1.msra.mxu0 %v722
    %777 = vmatprep.subr.mxu0 0.0
    %778 = vmatpush2.msra.mxu0 0.0
    %779 = vmatprep.subr.mxu0 0.0
    %780 = vmatpush2.msra.mxu0 0.0
    %781 = vmatprep.subr.mxu0 0.0
    %782 = vmatpush2.msra.mxu0 0.0
    %783 = vmatprep.subr.mxu0 0.0
    %784 = vmatpush2.msra.mxu0 0.0
    %785 = vmatprep.subr.mxu0 0.0
    %786 = vmatpush2.msra.mxu0 0.0
    %787 = vmatprep.subr.mxu0 0.0
    %788 = vmatpush2.msra.mxu0 0.0
    %789 = vmatprep.subr.mxu0 0.0
    %790 = vmatpush2.msra.mxu0 0.0
    %791 = vmatprep.subr.mxu0 0.0
    %792 = vmatpush2.msra.mxu0 0.0
    %793 = vmatprep.subr.mxu0 0.0
    %794 = vmatpush2.msra.mxu0 0.0
    %795 = vmatprep.subr.mxu0 0.0
    %796 = vmatpush2.msra.mxu0 0.0
    %797 = vmatprep.subr.mxu0 0.0
    %798 = vmatpush2.msra.mxu0 0.0
    %799 = vmatprep.subr.mxu0 0.0
    %800 = vmatpush2.msra.mxu0 0.0
    %801 = vmatprep.subr.mxu0 0.0
    %802 = vmatpush2.msra.mxu0 0.0
    %803 = vmatprep.subr.mxu0 0.0
    %804 = vmatpush2.msra.mxu0 0.0
    %805 = vmatprep.subr.mxu0 0.0
    %806 = vmatpush2.msra.mxu0 0.0
    %807 = vmatprep.subr.mxu0 0.0
    %808 = vmatpush2.msra.mxu0 0.0
    %809 = vmatprep.mubr.f32.mxu0 0.0
    %810 = vmatmul.mubr.f32.gmra.mxu0 %v734
    %v811 = vpop.f32.mrf.mxu0
    %v812 = vadd.f32 0.0, %v811
    %v813 = vpop.f32.mrf.mxu0
    %814 = vmatprep.mubr.f32.mxu0 0.0
    %815 = vmatmul.mubr.f32.gmra.mxu0 %v737
    %v816 = vpop.f32.mrf.mxu0
    %v817 = vadd.f32 0.0, %v816
    %v818 = vpop.f32.mrf.mxu0
    %819 = vmatprep.mubr.f32.mxu0 0.0
    %820 = vmatmul.mubr.f32.gmra.mxu0 %v740
    %v821 = vpop.f32.mrf.mxu0
    %v822 = vadd.f32 0.0, %v821
    %v823 = vpop.f32.mrf.mxu0
    %824 = vmatprep.mubr.f32.mxu0 0.0
    %825 = vmatmul.mubr.f32.gmra.mxu0 %v743
    %v826 = vpop.f32.mrf.mxu0
    %v827 = vadd.f32 0.0, %v826
    %v828 = vpop.f32.mrf.mxu0
    %829 = vdwg.mxu0
    %834 = vrot.lane.b32.xlu0 %v812, 8
    %v835 = vpop.permute.xlu0 %834
    %836 = vrot.lane.b32.xlu0 %v817, 8
    %v837 = vpop.permute.xlu0 %836
    %838 = vrot.lane.b32.xlu0 %v822, 8
    %v839 = vpop.permute.xlu0 %838
    %840 = vrot.lane.b32.xlu0 %v827, 8
    %v841 = vpop.permute.xlu0 %840
    %vm846 = vcmask 130112
    %847 = vst.msk [vmem:[#allocation2] sm:$0xff] %vm846, %v835
    %848 = vst.msk [vmem:[#allocation2 + $0x8] sm:$0xff] %vm846, %v837
    %849 = vst.msk [vmem:[#allocation2 + $0x10] sm:$0xff] %vm846, %v839
    %850 = vst.msk [vmem:[#allocation2 + $0x18] sm:$0xff] %vm846, %v841
    %851 = vrot.lane.b32.xlu0 %v271, 112
    %v852 = vpop.permute.xlu0 %851
    %853 = vrot.lane.b32.xlu0 %v276, 112
    %v854 = vpop.permute.xlu0 %853
    %855 = vrot.lane.b32.xlu0 %v281, 112
    %v856 = vpop.permute.xlu0 %855
    %857 = vrot.lane.b32.xlu0 %v286, 112
    %v858 = vpop.permute.xlu0 %857
    %859 = vrot.lane.b32.xlu0 %v271, 80
    %v860 = vpop.permute.xlu0 %859
    %861 = vrot.lane.b32.xlu0 %v276, 80
    %v862 = vpop.permute.xlu0 %861
    %863 = vrot.lane.b32.xlu0 %v281, 80
    %v864 = vpop.permute.xlu0 %863
    %865 = vrot.lane.b32.xlu0 %v286, 80
    %v866 = vpop.permute.xlu0 %865
    %v867 = vsel %vm301, %v852, 0
    %v869 = vsel %vm301, %v854, 0
    %v871 = vsel %vm301, %v856, 0
    %v873 = vsel %vm301, %v858, 0
    %v875 = vsel %vm301, %v860, 0
    %v877 = vsel %vm301, %v862, 0
    %v879 = vsel %vm301, %v864, 0
    %v881 = vsel %vm301, %v866, 0
    %883 = vmatprep.subr.mxu0 0.0
    %884 = vmatpush1.xpose.msra.mxu0 0.0
    %885 = vmatprep.subr.mxu0 0.0
    %886 = vmatpush1.xpose.msra.mxu0 0.0
    %887 = vmatprep.subr.mxu0 0.0
    %888 = vmatpush1.xpose.msra.mxu0 0.0
    %889 = vmatprep.subr.mxu0 0.0
    %890 = vmatpush1.xpose.msra.mxu0 0.0
    %891 = vmatprep.subr.mxu0 0.0
    %892 = vmatpush1.xpose.msra.mxu0 0.0
    %893 = vmatprep.subr.mxu0 0.0
    %894 = vmatpush1.xpose.msra.mxu0 0.0
    %895 = vmatprep.subr.mxu0 0.0
    %896 = vmatpush1.xpose.msra.mxu0 0.0
    %897 = vmatprep.subr.mxu0 0.0
    %898 = vmatpush1.xpose.msra.mxu0 0.0
    %899 = vmatprep.subr.mxu0 0.0
    %900 = vmatpush1.xpose.msra.mxu0 0.0
    %901 = vmatprep.subr.mxu0 0.0
    %902 = vmatpush1.xpose.msra.mxu0 0.0
    %903 = vmatprep.subr.mxu0 0.0
    %904 = vmatpush1.xpose.msra.mxu0 0.0
    %905 = vmatprep.subr.mxu0 0.0
    %906 = vmatpush1.xpose.msra.mxu0 0.0
    %907 = vmatprep.subr.mxu0 0.0
    %908 = vmatpush1.xpose.msra.mxu0 %v881
    %909 = vmatprep.subr.mxu0 0.0
    %910 = vmatpush1.xpose.msra.mxu0 %v879
    %911 = vmatprep.subr.mxu0 0.0
    %912 = vmatpush1.xpose.msra.mxu0 %v877
    %913 = vmatprep.subr.mxu0 0.0
    %914 = vmatpush1.xpose.msra.mxu0 %v875
    %915 = vmatprep.subr.mxu0 0.0
    %916 = vmatpush2.xpose.msra.mxu0 0.0
    %917 = vmatprep.subr.mxu0 0.0
    %918 = vmatpush2.xpose.msra.mxu0 0.0
    %919 = vmatprep.subr.mxu0 0.0
    %920 = vmatpush2.xpose.msra.mxu0 0.0
    %921 = vmatprep.subr.mxu0 0.0
    %922 = vmatpush2.xpose.msra.mxu0 0.0
    %923 = vmatprep.subr.mxu0 0.0
    %924 = vmatpush2.xpose.msra.mxu0 0.0
    %925 = vmatprep.subr.mxu0 0.0
    %926 = vmatpush2.xpose.msra.mxu0 0.0
    %927 = vmatprep.subr.mxu0 0.0
    %928 = vmatpush2.xpose.msra.mxu0 0.0
    %929 = vmatprep.subr.mxu0 0.0
    %930 = vmatpush2.xpose.msra.mxu0 0.0
    %931 = vmatprep.subr.mxu0 0.0
    %932 = vmatpush2.xpose.msra.mxu0 0.0
    %933 = vmatprep.subr.mxu0 0.0
    %934 = vmatpush2.xpose.msra.mxu0 0.0
    %935 = vmatprep.subr.mxu0 0.0
    %936 = vmatpush2.xpose.msra.mxu0 0.0
    %937 = vmatprep.subr.mxu0 0.0
    %938 = vmatpush2.xpose.msra.mxu0 0.0
    %939 = vmatprep.subr.mxu0 0.0
    %940 = vmatpush2.xpose.msra.mxu0 0.0
    %941 = vmatprep.subr.mxu0 0.0
    %942 = vmatpush2.xpose.msra.mxu0 0.0
    %943 = vmatprep.subr.mxu0 0.0
    %944 = vmatpush2.xpose.msra.mxu0 0.0
    %945 = vmatprep.subr.mxu0 0.0
    %946 = vmatpush2.xpose.msra.mxu0 0.0
    %947 = vmatprep.mubr.f32.mxu0 0.0
    %948 = vmatmul.mubr.f32.gmra.mxu0 %v867
    %v949 = vpop.f32.mrf.mxu0
    %v950 = vadd.f32 %v95, %v949
    %v951 = vpop.f32.mrf.mxu0
    %952 = vmatprep.mubr.f32.mxu0 0.0
    %953 = vmatmul.mubr.f32.gmra.mxu0 %v869
    %v954 = vpop.f32.mrf.mxu0
    %v955 = vadd.f32 %v95, %v954
    %v956 = vpop.f32.mrf.mxu0
    %957 = vmatprep.mubr.f32.mxu0 0.0
    %958 = vmatmul.mubr.f32.gmra.mxu0 %v871
    %v959 = vpop.f32.mrf.mxu0
    %v960 = vadd.f32 %v104, %v959
    %v961 = vpop.f32.mrf.mxu0
    %962 = vmatprep.mubr.f32.mxu0 0.0
    %963 = vmatmul.mubr.f32.gmra.mxu0 %v873
    %v964 = vpop.f32.mrf.mxu0
    %v965 = vadd.f32 %v104, %v964
    %v966 = vpop.f32.mrf.mxu0
    %967 = vdwg.mxu0
    %v968 = vsel %vm118, %v950, -inf
    %969 = vmax.xlane.f32.xlu0 %v968
    %v970 = vpop.xlane.xlu0 %969
    %v971 = vsel %vm118, %v955, -inf
    %972 = vmax.xlane.f32.xlu0 %v971
    %v973 = vpop.xlane.xlu0 %972
    %v974 = vsel %vm118, %v960, -inf
    %975 = vmax.xlane.f32.xlu0 %v974
    %v976 = vpop.xlane.xlu0 %975
    %v977 = vsel %vm118, %v965, -inf
    %978 = vmax.xlane.f32.xlu0 %v977
    %v979 = vpop.xlane.xlu0 %978
    %v980 = vsub.f32 %v950, %v970
    %v981 = vsub.f32 %v955, %v973
    %v982 = vsub.f32 %v960, %v976
    %v983 = vsub.f32 %v965, %v979
    %v984 = vmul.f32 %v980, 1.442695
    %v985 = vpow.pop %v984
    %v986 = vmul.f32 %v981, 1.442695
    %v987 = vpow.pop %v986
    %v988 = vmul.f32 %v982, 1.442695
    %v989 = vpow.pop %v988
    %v990 = vmul.f32 %v983, 1.442695
    %v991 = vpow.pop %v990
    %v992 = vsel %vm118, %v985, 0.0
    %993 = vadd.xlane.f32.xlu0 %v992
    %v994 = vpop.xlane.xlu0 %993
    %v995 = vsel %vm118, %v987, 0.0
    %996 = vadd.xlane.f32.xlu0 %v995
    %v997 = vpop.xlane.xlu0 %996
    %v998 = vsel %vm118, %v989, 0.0
    %999 = vadd.xlane.f32.xlu0 %v998
    %v1000 = vpop.xlane.xlu0 %999
    %v1001 = vsel %vm118, %v991, 0.0
    %1002 = vadd.xlane.f32.xlu0 %v1001
    %v1003 = vpop.xlane.xlu0 %1002
    %v1004 = vrcp.pop %v994
    %v1005 = vmul.f32 %v985, %v1004
    %v1006 = vrcp.pop %v997
    %v1007 = vmul.f32 %v987, %v1006
    %v1008 = vrcp.pop %v1000
    %v1009 = vmul.f32 %v989, %v1008
    %v1010 = vrcp.pop %v1003
    %v1011 = vmul.f32 %v991, %v1010
    %1012 = vrot.lane.b32.xlu0 %v271, 48
    %v1013 = vpop.permute.xlu0 %1012
    %1014 = vrot.lane.b32.xlu0 %v276, 48
    %v1015 = vpop.permute.xlu0 %1014
    %1016 = vrot.lane.b32.xlu0 %v281, 48
    %v1017 = vpop.permute.xlu0 %1016
    %1018 = vrot.lane.b32.xlu0 %v286, 48
    %v1019 = vpop.permute.xlu0 %1018
    %v1025 = vsel %vm118, %v1005, 0
    %v1028 = vsel %vm118, %v1007, 0
    %v1031 = vsel %vm118, %v1009, 0
    %v1034 = vsel %vm118, %v1011, 0
    %1036 = vmatprep.subr.mxu0 0.0
    %1037 = vmatpush1.msra.mxu0 0.0
    %1038 = vmatprep.subr.mxu0 0.0
    %1039 = vmatpush1.msra.mxu0 0.0
    %1040 = vmatprep.subr.mxu0 0.0
    %1041 = vmatpush1.msra.mxu0 0.0
    %1042 = vmatprep.subr.mxu0 0.0
    %1043 = vmatpush1.msra.mxu0 0.0
    %1044 = vmatprep.subr.mxu0 0.0
    %1045 = vmatpush1.msra.mxu0 0.0
    %1046 = vmatprep.subr.mxu0 0.0
    %1047 = vmatpush1.msra.mxu0 0.0
    %1048 = vmatprep.subr.mxu0 0.0
    %1049 = vmatpush1.msra.mxu0 0.0
    %1050 = vmatprep.subr.mxu0 0.0
    %1051 = vmatpush1.msra.mxu0 0.0
    %1052 = vmatprep.subr.mxu0 0.0
    %1053 = vmatpush1.msra.mxu0 0.0
    %1054 = vmatprep.subr.mxu0 0.0
    %1055 = vmatpush1.msra.mxu0 0.0
    %1056 = vmatprep.subr.mxu0 0.0
    %1057 = vmatpush1.msra.mxu0 0.0
    %1058 = vmatprep.subr.mxu0 0.0
    %1059 = vmatpush1.msra.mxu0 0.0
    %1060 = vmatprep.subr.mxu0 0.0
    %1061 = vmatpush1.msra.mxu0 %v1019
    %1062 = vmatprep.subr.mxu0 0.0
    %1063 = vmatpush1.msra.mxu0 %v1017
    %1064 = vmatprep.subr.mxu0 0.0
    %1065 = vmatpush1.msra.mxu0 %v1015
    %1066 = vmatprep.subr.mxu0 0.0
    %1067 = vmatpush1.msra.mxu0 %v1013
    %1068 = vmatprep.subr.mxu0 0.0
    %1069 = vmatpush2.msra.mxu0 0.0
    %1070 = vmatprep.subr.mxu0 0.0
    %1071 = vmatpush2.msra.mxu0 0.0
    %1072 = vmatprep.subr.mxu0 0.0
    %1073 = vmatpush2.msra.mxu0 0.0
    %1074 = vmatprep.subr.mxu0 0.0
    %1075 = vmatpush2.msra.mxu0 0.0
    %1076 = vmatprep.subr.mxu0 0.0
    %1077 = vmatpush2.msra.mxu0 0.0
    %1078 = vmatprep.subr.mxu0 0.0
    %1079 = vmatpush2.msra.mxu0 0.0
    %1080 = vmatprep.subr.mxu0 0.0
    %1081 = vmatpush2.msra.mxu0 0.0
    %1082 = vmatprep.subr.mxu0 0.0
    %1083 = vmatpush2.msra.mxu0 0.0
    %1084 = vmatprep.subr.mxu0 0.0
    %1085 = vmatpush2.msra.mxu0 0.0
    %1086 = vmatprep.subr.mxu0 0.0
    %1087 = vmatpush2.msra.mxu0 0.0
    %1088 = vmatprep.subr.mxu0 0.0
    %1089 = vmatpush2.msra.mxu0 0.0
    %1090 = vmatprep.subr.mxu0 0.0
    %1091 = vmatpush2.msra.mxu0 0.0
    %1092 = vmatprep.subr.mxu0 0.0
    %1093 = vmatpush2.msra.mxu0 0.0
    %1094 = vmatprep.subr.mxu0 0.0
    %1095 = vmatpush2.msra.mxu0 0.0
    %1096 = vmatprep.subr.mxu0 0.0
    %1097 = vmatpush2.msra.mxu0 0.0
    %1098 = vmatprep.subr.mxu0 0.0
    %1099 = vmatpush2.msra.mxu0 0.0
    %1100 = vmatprep.mubr.f32.mxu0 0.0
    %1101 = vmatmul.mubr.f32.gmra.mxu0 %v1025
    %v1102 = vpop.f32.mrf.mxu0
    %v1103 = vadd.f32 0.0, %v1102
    %v1104 = vpop.f32.mrf.mxu0
    %1105 = vmatprep.mubr.f32.mxu0 0.0
    %1106 = vmatmul.mubr.f32.gmra.mxu0 %v1028
    %v1107 = vpop.f32.mrf.mxu0
    %v1108 = vadd.f32 0.0, %v1107
    %v1109 = vpop.f32.mrf.mxu0
    %1110 = vmatprep.mubr.f32.mxu0 0.0
    %1111 = vmatmul.mubr.f32.gmra.mxu0 %v1031
    %v1112 = vpop.f32.mrf.mxu0
    %v1113 = vadd.f32 0.0, %v1112
    %v1114 = vpop.f32.mrf.mxu0
    %1115 = vmatprep.mubr.f32.mxu0 0.0
    %1116 = vmatmul.mubr.f32.gmra.mxu0 %v1034
    %v1117 = vpop.f32.mrf.mxu0
    %v1118 = vadd.f32 0.0, %v1117
    %v1119 = vpop.f32.mrf.mxu0
    %1120 = vdwg.mxu0
    %1125 = vrot.lane.b32.xlu0 %v1103, 16
    %v1126 = vpop.permute.xlu0 %1125
    %1127 = vrot.lane.b32.xlu0 %v1108, 16
    %v1128 = vpop.permute.xlu0 %1127
    %1129 = vrot.lane.b32.xlu0 %v1113, 16
    %v1130 = vpop.permute.xlu0 %1129
    %1131 = vrot.lane.b32.xlu0 %v1118, 16
    %v1132 = vpop.permute.xlu0 %1131
    %vm1137 = vcmask 195712
    %1138 = vst.msk [vmem:[#allocation2] sm:$0xff] %vm1137, %v1126
    %1139 = vst.msk [vmem:[#allocation2 + $0x8] sm:$0xff] %vm1137, %v1128
    %1140 = vst.msk [vmem:[#allocation2 + $0x10] sm:$0xff] %vm1137, %v1130
    %1141 = vst.msk [vmem:[#allocation2 + $0x18] sm:$0xff] %vm1137, %v1132
    %1142 = vrot.lane.b32.xlu0 %v271, 104
    %v1143 = vpop.permute.xlu0 %1142
    %1144 = vrot.lane.b32.xlu0 %v276, 104
    %v1145 = vpop.permute.xlu0 %1144
    %1146 = vrot.lane.b32.xlu0 %v281, 104
    %v1147 = vpop.permute.xlu0 %1146
    %1148 = vrot.lane.b32.xlu0 %v286, 104
    %v1149 = vpop.permute.xlu0 %1148
    %1150 = vrot.lane.b32.xlu0 %v271, 72
    %v1151 = vpop.permute.xlu0 %1150
    %1152 = vrot.lane.b32.xlu0 %v276, 72
    %v1153 = vpop.permute.xlu0 %1152
    %1154 = vrot.lane.b32.xlu0 %v281, 72
    %v1155 = vpop.permute.xlu0 %1154
    %1156 = vrot.lane.b32.xlu0 %v286, 72
    %v1157 = vpop.permute.xlu0 %1156
    %v1158 = vsel %vm301, %v1143, 0
    %v1160 = vsel %vm301, %v1145, 0
    %v1162 = vsel %vm301, %v1147, 0
    %v1164 = vsel %vm301, %v1149, 0
    %v1166 = vsel %vm301, %v1151, 0
    %v1168 = vsel %vm301, %v1153, 0
    %v1170 = vsel %vm301, %v1155, 0
    %v1172 = vsel %vm301, %v1157, 0
    %1174 = vmatprep.subr.mxu0 0.0
    %1175 = vmatpush1.xpose.msra.mxu0 0.0
    %1176 = vmatprep.subr.mxu0 0.0
    %1177 = vmatpush1.xpose.msra.mxu0 0.0
    %1178 = vmatprep.subr.mxu0 0.0
    %1179 = vmatpush1.xpose.msra.mxu0 0.0
    %1180 = vmatprep.subr.mxu0 0.0
    %1181 = vmatpush1.xpose.msra.mxu0 0.0
    %1182 = vmatprep.subr.mxu0 0.0
    %1183 = vmatpush1.xpose.msra.mxu0 0.0
    %1184 = vmatprep.subr.mxu0 0.0
    %1185 = vmatpush1.xpose.msra.mxu0 0.0
    %1186 = vmatprep.subr.mxu0 0.0
    %1187 = vmatpush1.xpose.msra.mxu0 0.0
    %1188 = vmatprep.subr.mxu0 0.0
    %1189 = vmatpush1.xpose.msra.mxu0 0.0
    %1190 = vmatprep.subr.mxu0 0.0
    %1191 = vmatpush1.xpose.msra.mxu0 0.0
    %1192 = vmatprep.subr.mxu0 0.0
    %1193 = vmatpush1.xpose.msra.mxu0 0.0
    %1194 = vmatprep.subr.mxu0 0.0
    %1195 = vmatpush1.xpose.msra.mxu0 0.0
    %1196 = vmatprep.subr.mxu0 0.0
    %1197 = vmatpush1.xpose.msra.mxu0 0.0
    %1198 = vmatprep.subr.mxu0 0.0
    %1199 = vmatpush1.xpose.msra.mxu0 %v1172
    %1200 = vmatprep.subr.mxu0 0.0
    %1201 = vmatpush1.xpose.msra.mxu0 %v1170
    %1202 = vmatprep.subr.mxu0 0.0
    %1203 = vmatpush1.xpose.msra.mxu0 %v1168
    %1204 = vmatprep.subr.mxu0 0.0
    %1205 = vmatpush1.xpose.msra.mxu0 %v1166
    %1206 = vmatprep.subr.mxu0 0.0
    %1207 = vmatpush2.xpose.msra.mxu0 0.0
    %1208 = vmatprep.subr.mxu0 0.0
    %1209 = vmatpush2.xpose.msra.mxu0 0.0
    %1210 = vmatprep.subr.mxu0 0.0
    %1211 = vmatpush2.xpose.msra.mxu0 0.0
    %1212 = vmatprep.subr.mxu0 0.0
    %1213 = vmatpush2.xpose.msra.mxu0 0.0
    %1214 = vmatprep.subr.mxu0 0.0
    %1215 = vmatpush2.xpose.msra.mxu0 0.0
    %1216 = vmatprep.subr.mxu0 0.0
    %1217 = vmatpush2.xpose.msra.mxu0 0.0
    %1218 = vmatprep.subr.mxu0 0.0
    %1219 = vmatpush2.xpose.msra.mxu0 0.0
    %1220 = vmatprep.subr.mxu0 0.0
    %1221 = vmatpush2.xpose.msra.mxu0 0.0
    %1222 = vmatprep.subr.mxu0 0.0
    %1223 = vmatpush2.xpose.msra.mxu0 0.0
    %1224 = vmatprep.subr.mxu0 0.0
    %1225 = vmatpush2.xpose.msra.mxu0 0.0
    %1226 = vmatprep.subr.mxu0 0.0
    %1227 = vmatpush2.xpose.msra.mxu0 0.0
    %1228 = vmatprep.subr.mxu0 0.0
    %1229 = vmatpush2.xpose.msra.mxu0 0.0
    %1230 = vmatprep.subr.mxu0 0.0
    %1231 = vmatpush2.xpose.msra.mxu0 0.0
    %1232 = vmatprep.subr.mxu0 0.0
    %1233 = vmatpush2.xpose.msra.mxu0 0.0
    %1234 = vmatprep.subr.mxu0 0.0
    %1235 = vmatpush2.xpose.msra.mxu0 0.0
    %1236 = vmatprep.subr.mxu0 0.0
    %1237 = vmatpush2.xpose.msra.mxu0 0.0
    %1238 = vmatprep.mubr.f32.mxu0 0.0
    %1239 = vmatmul.mubr.f32.gmra.mxu0 %v1158
    %v1240 = vpop.f32.mrf.mxu0
    %v1241 = vadd.f32 %v95, %v1240
    %v1242 = vpop.f32.mrf.mxu0
    %1243 = vmatprep.mubr.f32.mxu0 0.0
    %1244 = vmatmul.mubr.f32.gmra.mxu0 %v1160
    %v1245 = vpop.f32.mrf.mxu0
    %v1246 = vadd.f32 %v95, %v1245
    %v1247 = vpop.f32.mrf.mxu0
    %1248 = vmatprep.mubr.f32.mxu0 0.0
    %1249 = vmatmul.mubr.f32.gmra.mxu0 %v1162
    %v1250 = vpop.f32.mrf.mxu0
    %v1251 = vadd.f32 %v104, %v1250
    %v1252 = vpop.f32.mrf.mxu0
    %1253 = vmatprep.mubr.f32.mxu0 0.0
    %1254 = vmatmul.mubr.f32.gmra.mxu0 %v1164
    %v1255 = vpop.f32.mrf.mxu0
    %v1256 = vadd.f32 %v104, %v1255
    %v1257 = vpop.f32.mrf.mxu0
    %1258 = vdwg.mxu0
    %v1259 = vsel %vm118, %v1241, -inf
    %1260 = vmax.xlane.f32.xlu0 %v1259
    %v1261 = vpop.xlane.xlu0 %1260
    %v1262 = vsel %vm118, %v1246, -inf
    %1263 = vmax.xlane.f32.xlu0 %v1262
    %v1264 = vpop.xlane.xlu0 %1263
    %v1265 = vsel %vm118, %v1251, -inf
    %1266 = vmax.xlane.f32.xlu0 %v1265
    %v1267 = vpop.xlane.xlu0 %1266
    %v1268 = vsel %vm118, %v1256, -inf
    %1269 = vmax.xlane.f32.xlu0 %v1268
    %v1270 = vpop.xlane.xlu0 %1269
    %v1271 = vsub.f32 %v1241, %v1261
    %v1272 = vsub.f32 %v1246, %v1264
    %v1273 = vsub.f32 %v1251, %v1267
    %v1274 = vsub.f32 %v1256, %v1270
    %v1275 = vmul.f32 %v1271, 1.442695
    %v1276 = vpow.pop %v1275
    %v1277 = vmul.f32 %v1272, 1.442695
    %v1278 = vpow.pop %v1277
    %v1279 = vmul.f32 %v1273, 1.442695
    %v1280 = vpow.pop %v1279
    %v1281 = vmul.f32 %v1274, 1.442695
    %v1282 = vpow.pop %v1281
    %v1283 = vsel %vm118, %v1276, 0.0
    %1284 = vadd.xlane.f32.xlu0 %v1283
    %v1285 = vpop.xlane.xlu0 %1284
    %v1286 = vsel %vm118, %v1278, 0.0
    %1287 = vadd.xlane.f32.xlu0 %v1286
    %v1288 = vpop.xlane.xlu0 %1287
    %v1289 = vsel %vm118, %v1280, 0.0
    %1290 = vadd.xlane.f32.xlu0 %v1289
    %v1291 = vpop.xlane.xlu0 %1290
    %v1292 = vsel %vm118, %v1282, 0.0
    %1293 = vadd.xlane.f32.xlu0 %v1292
    %v1294 = vpop.xlane.xlu0 %1293
    %v1295 = vrcp.pop %v1285
    %v1296 = vmul.f32 %v1276, %v1295
    %v1297 = vrcp.pop %v1288
    %v1298 = vmul.f32 %v1278, %v1297
    %v1299 = vrcp.pop %v1291
    %v1300 = vmul.f32 %v1280, %v1299
    %v1301 = vrcp.pop %v1294
    %v1302 = vmul.f32 %v1282, %v1301
    %1303 = vrot.lane.b32.xlu0 %v271, 40
    %v1304 = vpop.permute.xlu0 %1303
    %1305 = vrot.lane.b32.xlu0 %v276, 40
    %v1306 = vpop.permute.xlu0 %1305
    %1307 = vrot.lane.b32.xlu0 %v281, 40
    %v1308 = vpop.permute.xlu0 %1307
    %1309 = vrot.lane.b32.xlu0 %v286, 40
    %v1310 = vpop.permute.xlu0 %1309
    %v1316 = vsel %vm118, %v1296, 0
    %v1319 = vsel %vm118, %v1298, 0
    %v1322 = vsel %vm118, %v1300, 0
    %v1325 = vsel %vm118, %v1302, 0
    %1327 = vmatprep.subr.mxu0 0.0
    %1328 = vmatpush1.msra.mxu0 0.0
    %1329 = vmatprep.subr.mxu0 0.0
    %1330 = vmatpush1.msra.mxu0 0.0
    %1331 = vmatprep.subr.mxu0 0.0
    %1332 = vmatpush1.msra.mxu0 0.0
    %1333 = vmatprep.subr.mxu0 0.0
    %1334 = vmatpush1.msra.mxu0 0.0
    %1335 = vmatprep.subr.mxu0 0.0
    %1336 = vmatpush1.msra.mxu0 0.0
    %1337 = vmatprep.subr.mxu0 0.0
    %1338 = vmatpush1.msra.mxu0 0.0
    %1339 = vmatprep.subr.mxu0 0.0
    %1340 = vmatpush1.msra.mxu0 0.0
    %1341 = vmatprep.subr.mxu0 0.0
    %1342 = vmatpush1.msra.mxu0 0.0
    %1343 = vmatprep.subr.mxu0 0.0
    %1344 = vmatpush1.msra.mxu0 0.0
    %1345 = vmatprep.subr.mxu0 0.0
    %1346 = vmatpush1.msra.mxu0 0.0
    %1347 = vmatprep.subr.mxu0 0.0
    %1348 = vmatpush1.msra.mxu0 0.0
    %1349 = vmatprep.subr.mxu0 0.0
    %1350 = vmatpush1.msra.mxu0 0.0
    %1351 = vmatprep.subr.mxu0 0.0
    %1352 = vmatpush1.msra.mxu0 %v1310
    %1353 = vmatprep.subr.mxu0 0.0
    %1354 = vmatpush1.msra.mxu0 %v1308
    %1355 = vmatprep.subr.mxu0 0.0
    %1356 = vmatpush1.msra.mxu0 %v1306
    %1357 = vmatprep.subr.mxu0 0.0
    %1358 = vmatpush1.msra.mxu0 %v1304
    %1359 = vmatprep.subr.mxu0 0.0
    %1360 = vmatpush2.msra.mxu0 0.0
    %1361 = vmatprep.subr.mxu0 0.0
    %1362 = vmatpush2.msra.mxu0 0.0
    %1363 = vmatprep.subr.mxu0 0.0
    %1364 = vmatpush2.msra.mxu0 0.0
    %1365 = vmatprep.subr.mxu0 0.0
    %1366 = vmatpush2.msra.mxu0 0.0
    %1367 = vmatprep.subr.mxu0 0.0
    %1368 = vmatpush2.msra.mxu0 0.0
    %1369 = vmatprep.subr.mxu0 0.0
    %1370 = vmatpush2.msra.mxu0 0.0
    %1371 = vmatprep.subr.mxu0 0.0
    %1372 = vmatpush2.msra.mxu0 0.0
    %1373 = vmatprep.subr.mxu0 0.0
    %1374 = vmatpush2.msra.mxu0 0.0
    %1375 = vmatprep.subr.mxu0 0.0
    %1376 = vmatpush2.msra.mxu0 0.0
    %1377 = vmatprep.subr.mxu0 0.0
    %1378 = vmatpush2.msra.mxu0 0.0
    %1379 = vmatprep.subr.mxu0 0.0
    %1380 = vmatpush2.msra.mxu0 0.0
    %1381 = vmatprep.subr.mxu0 0.0
    %1382 = vmatpush2.msra.mxu0 0.0
    %1383 = vmatprep.subr.mxu0 0.0
    %1384 = vmatpush2.msra.mxu0 0.0
    %1385 = vmatprep.subr.mxu0 0.0
    %1386 = vmatpush2.msra.mxu0 0.0
    %1387 = vmatprep.subr.mxu0 0.0
    %1388 = vmatpush2.msra.mxu0 0.0
    %1389 = vmatprep.subr.mxu0 0.0
    %1390 = vmatpush2.msra.mxu0 0.0
    %1391 = vmatprep.mubr.f32.mxu0 0.0
    %1392 = vmatmul.mubr.f32.gmra.mxu0 %v1316
    %v1393 = vpop.f32.mrf.mxu0
    %v1394 = vadd.f32 0.0, %v1393
    %v1395 = vpop.f32.mrf.mxu0
    %1396 = vmatprep.mubr.f32.mxu0 0.0
    %1397 = vmatmul.mubr.f32.gmra.mxu0 %v1319
    %v1398 = vpop.f32.mrf.mxu0
    %v1399 = vadd.f32 0.0, %v1398
    %v1400 = vpop.f32.mrf.mxu0
    %1401 = vmatprep.mubr.f32.mxu0 0.0
    %1402 = vmatmul.mubr.f32.gmra.mxu0 %v1322
    %v1403 = vpop.f32.mrf.mxu0
    %v1404 = vadd.f32 0.0, %v1403
    %v1405 = vpop.f32.mrf.mxu0
    %1406 = vmatprep.mubr.f32.mxu0 0.0
    %1407 = vmatmul.mubr.f32.gmra.mxu0 %v1325
    %v1408 = vpop.f32.mrf.mxu0
    %v1409 = vadd.f32 0.0, %v1408
    %v1410 = vpop.f32.mrf.mxu0
    %1411 = vdwg.mxu0
    %1416 = vrot.lane.b32.xlu0 %v1394, 24
    %v1417 = vpop.permute.xlu0 %1416
    %1418 = vrot.lane.b32.xlu0 %v1399, 24
    %v1419 = vpop.permute.xlu0 %1418
    %1420 = vrot.lane.b32.xlu0 %v1404, 24
    %v1421 = vpop.permute.xlu0 %1420
    %1422 = vrot.lane.b32.xlu0 %v1409, 24
    %v1423 = vpop.permute.xlu0 %1422
    %vm1428 = vcmask 261312
    %1429 = vst.msk [vmem:[#allocation2] sm:$0xff] %vm1428, %v1417
    %1430 = vst.msk [vmem:[#allocation2 + $0x8] sm:$0xff] %vm1428, %v1419
    %1431 = vst.msk [vmem:[#allocation2 + $0x10] sm:$0xff] %vm1428, %v1421
    %1432 = vst.msk [vmem:[#allocation2 + $0x18] sm:$0xff] %vm1428, %v1423
    %v1433 = vld [vmem:[#allocation2] sm:$0xff]
    %v1434 = vld [vmem:[#allocation2 + $0x8] sm:$0xff]
    %v1435 = vld [vmem:[#allocation2 + $0x10] sm:$0xff]
    %v1436 = vld [vmem:[#allocation2 + $0x18] sm:$0xff]
    %v1437 = vlaneseq
    %v1438 = vshrl.u32 %v1437, 7
    %v1439 = vsub.s32 3, %v1438
    %v1440 = vrot.slane %v117, %v1439
    %1445 = vrot.lane.b32.xlu0 %v105, 32
    %v1446 = vpop.permute.xlu0 %1445
    %1447 = vrot.lane.b32.xlu0 %v106, 32
    %v1448 = vpop.permute.xlu0 %1447
    %1449 = vrot.lane.b32.xlu0 %v107, 32
    %v1450 = vpop.permute.xlu0 %1449
    %1451 = vrot.lane.b32.xlu0 %v108, 32
    %v1452 = vpop.permute.xlu0 %1451
    %v1458 = vsel %vm118, %v1433, 0
    %v1461 = vsel %vm118, %v1434, 0
    %v1464 = vsel %vm118, %v1435, 0
    %v1467 = vsel %vm118, %v1436, 0
    %1469 = vmatprep.subr.mxu0 0.0
    %1470 = vmatpush1.msra.mxu0 0.0
    %1471 = vmatprep.subr.mxu0 0.0
    %1472 = vmatpush1.msra.mxu0 0.0
    %1473 = vmatprep.subr.mxu0 0.0
    %1474 = vmatpush1.msra.mxu0 0.0
    %1475 = vmatprep.subr.mxu0 0.0
    %1476 = vmatpush1.msra.mxu0 0.0
    %1477 = vmatprep.subr.mxu0 0.0
    %1478 = vmatpush1.msra.mxu0 0.0
    %1479 = vmatprep.subr.mxu0 0.0
    %1480 = vmatpush1.msra.mxu0 0.0
    %1481 = vmatprep.subr.mxu0 0.0
    %1482 = vmatpush1.msra.mxu0 0.0
    %1483 = vmatprep.subr.mxu0 0.0
    %1484 = vmatpush1.msra.mxu0 0.0
    %1485 = vmatprep.subr.mxu0 0.0
    %1486 = vmatpush1.msra.mxu0 0.0
    %1487 = vmatprep.subr.mxu0 0.0
    %1488 = vmatpush1.msra.mxu0 0.0
    %1489 = vmatprep.subr.mxu0 0.0
    %1490 = vmatpush1.msra.mxu0 0.0
    %1491 = vmatprep.subr.mxu0 0.0
    %1492 = vmatpush1.msra.mxu0 0.0
    %1493 = vmatprep.subr.mxu0 0.0
    %1494 = vmatpush1.msra.mxu0 %v1452
    %1495 = vmatprep.subr.mxu0 0.0
    %1496 = vmatpush1.msra.mxu0 %v1450
    %1497 = vmatprep.subr.mxu0 0.0
    %1498 = vmatpush1.msra.mxu0 %v1448
    %1499 = vmatprep.subr.mxu0 0.0
    %1500 = vmatpush1.msra.mxu0 %v1446
    %1501 = vmatprep.subr.mxu0 0.0
    %1502 = vmatpush2.msra.mxu0 0.0
    %1503 = vmatprep.subr.mxu0 0.0
    %1504 = vmatpush2.msra.mxu0 0.0
    %1505 = vmatprep.subr.mxu0 0.0
    %1506 = vmatpush2.msra.mxu0 0.0
    %1507 = vmatprep.subr.mxu0 0.0
    %1508 = vmatpush2.msra.mxu0 0.0
    %1509 = vmatprep.subr.mxu0 0.0
    %1510 = vmatpush2.msra.mxu0 0.0
    %1511 = vmatprep.subr.mxu0 0.0
    %1512 = vmatpush2.msra.mxu0 0.0
    %1513 = vmatprep.subr.mxu0 0.0
    %1514 = vmatpush2.msra.mxu0 0.0
    %1515 = vmatprep.subr.mxu0 0.0
    %1516 = vmatpush2.msra.mxu0 0.0
    %1517 = vmatprep.subr.mxu0 0.0
    %1518 = vmatpush2.msra.mxu0 0.0
    %1519 = vmatprep.subr.mxu0 0.0
    %1520 = vmatpush2.msra.mxu0 0.0
    %1521 = vmatprep.subr.mxu0 0.0
    %1522 = vmatpush2.msra.mxu0 0.0
    %1523 = vmatprep.subr.mxu0 0.0
    %1524 = vmatpush2.msra.mxu0 0.0
    %1525 = vmatprep.subr.mxu0 0.0
    %1526 = vmatpush2.msra.mxu0 0.0
    %1527 = vmatprep.subr.mxu0 0.0
    %1528 = vmatpush2.msra.mxu0 0.0
    %1529 = vmatprep.subr.mxu0 0.0
    %1530 = vmatpush2.msra.mxu0 0.0
    %1531 = vmatprep.subr.mxu0 0.0
    %1532 = vmatpush2.msra.mxu0 0.0
    %1533 = vmatprep.mubr.f32.mxu0 0.0
    %1534 = vmatmul.mubr.f32.gmra.mxu0 %v1458
    %v1535 = vpop.f32.mrf.mxu0
    %v1536 = vadd.f32 %v1440, %v1535
    %v1537 = vpop.f32.mrf.mxu0
    %1538 = vmatprep.mubr.f32.mxu0 0.0
    %1539 = vmatmul.mubr.f32.gmra.mxu0 %v1461
    %v1540 = vpop.f32.mrf.mxu0
    %v1541 = vadd.f32 %v1440, %v1540
    %v1542 = vpop.f32.mrf.mxu0
    %1543 = vmatprep.mubr.f32.mxu0 0.0
    %1544 = vmatmul.mubr.f32.gmra.mxu0 %v1464
    %v1545 = vpop.f32.mrf.mxu0
    %v1546 = vadd.f32 %v1440, %v1545
    %v1547 = vpop.f32.mrf.mxu0
    %1548 = vmatprep.mubr.f32.mxu0 0.0
    %1549 = vmatmul.mubr.f32.gmra.mxu0 %v1467
    %v1550 = vpop.f32.mrf.mxu0
    %v1551 = vadd.f32 %v1440, %v1550
    %v1552 = vpop.f32.mrf.mxu0
    %1553 = vdwg.mxu0
    %v1554 = vadd.f32 %v1536, %v59
    %v1555 = vadd.f32 %v1541, %v60
    %v1556 = vadd.f32 %v1546, %v61
    %v1557 = vadd.f32 %v1551, %v62
    %v1558 = vsel %vm118, %v1554, 0.0
    %1559 = vadd.xlane.f32.xlu0 %v1558
    %v1560 = vpop.xlane.xlu0 %1559
    %v1561 = vsel %vm118, %v1555, 0.0
    %1562 = vadd.xlane.f32.xlu0 %v1561
    %v1563 = vpop.xlane.xlu0 %1562
    %v1564 = vsel %vm118, %v1556, 0.0
    %1565 = vadd.xlane.f32.xlu0 %v1564
    %v1566 = vpop.xlane.xlu0 %1565
    %v1567 = vsel %vm118, %v1557, 0.0
    %1568 = vadd.xlane.f32.xlu0 %v1567
    %v1569 = vpop.xlane.xlu0 %1568
    %v1570 = vmul.f32 %v1560, %v131
    %v1571 = vmul.f32 %v1563, %v131
    %v1572 = vmul.f32 %v1566, %v131
    %v1573 = vmul.f32 %v1569, %v131
    %v1574 = vsub.f32 %v1554, %v1570
    %v1575 = vsub.f32 %v1555, %v1571
    %v1576 = vsub.f32 %v1556, %v1572
    %v1577 = vsub.f32 %v1557, %v1573
    %v1578 = vmul.f32 %v1574, %v1574
    %v1579 = vmul.f32 %v1575, %v1575
    %v1580 = vmul.f32 %v1576, %v1576
    %v1581 = vmul.f32 %v1577, %v1577
    %v1582 = vsel %vm118, %v1578, 0.0
    %1583 = vadd.xlane.f32.xlu0 %v1582
    %v1584 = vpop.xlane.xlu0 %1583
    %v1585 = vsel %vm118, %v1579, 0.0
    %1586 = vadd.xlane.f32.xlu0 %v1585
    %v1587 = vpop.xlane.xlu0 %1586
    %v1588 = vsel %vm118, %v1580, 0.0
    %1589 = vadd.xlane.f32.xlu0 %v1588
    %v1590 = vpop.xlane.xlu0 %1589
    %v1591 = vsel %vm118, %v1581, 0.0
    %1592 = vadd.xlane.f32.xlu0 %v1591
    %v1593 = vpop.xlane.xlu0 %1592
    %v1594 = vmul.f32 %v1584, %v131
    %v1595 = vmul.f32 %v1587, %v131
    %v1596 = vmul.f32 %v1590, %v131
    %v1597 = vmul.f32 %v1593, %v131
    %v1598 = vadd.f32 %v1594, 1e-12
    %v1599 = vadd.f32 %v1595, 1e-12
    %v1600 = vadd.f32 %v1596, 1e-12
    %v1601 = vadd.f32 %v1597, 1e-12
    %v1602 = vrsqrt.pop %v1598
    %v1603 = vrsqrt.pop %v1599
    %v1604 = vrsqrt.pop %v1600
    %v1605 = vrsqrt.pop %v1601
    %v1606 = vmul.f32 %v1574, %v1602
    %v1607 = vmul.f32 %v1575, %v1603
    %v1608 = vmul.f32 %v1576, %v1604
    %v1609 = vmul.f32 %v1577, %v1605
    %v1610 = vlaneseq
    %v1611 = vshrl.u32 %v1610, 7
    %v1612 = vsub.s32 4, %v1611
    %v1613 = vrot.slane %v117, %v1612
    %v1614 = vmul.f32 %v1606, %v1613
    %v1615 = vmul.f32 %v1607, %v1613
    %v1616 = vmul.f32 %v1608, %v1613
    %v1617 = vmul.f32 %v1609, %v1613
    %v1618 = vlaneseq
    %v1619 = vshrl.u32 %v1618, 7
    %v1620 = vsub.s32 5, %v1619
    %v1621 = vrot.slane %v117, %v1620
    %v1622 = vadd.f32 %v1614, %v1621
    %v1623 = vadd.f32 %v1615, %v1621
    %v1624 = vadd.f32 %v1616, %v1621
    %v1625 = vadd.f32 %v1617, %v1621
    %v1626 = vlaneseq
    %v1627 = vshrl.u32 %v1626, 7
    %v1628 = vsub.s32 6, %v1627
    %v1629 = vrot.slane %v117, %v1628
    %1634 = vrot.lane.b32.xlu0 %v109, 96
    %v1635 = vpop.permute.xlu0 %1634
    %1636 = vrot.lane.b32.xlu0 %v110, 96
    %v1637 = vpop.permute.xlu0 %1636
    %1638 = vrot.lane.b32.xlu0 %v111, 96
    %v1639 = vpop.permute.xlu0 %1638
    %1640 = vrot.lane.b32.xlu0 %v112, 96
    %v1641 = vpop.permute.xlu0 %1640
    %v1647 = vsel %vm118, %v1622, 0
    %v1650 = vsel %vm118, %v1623, 0
    %v1653 = vsel %vm118, %v1624, 0
    %v1656 = vsel %vm118, %v1625, 0
    %1658 = vmatprep.subr.mxu0 0.0
    %1659 = vmatpush1.msra.mxu0 0.0
    %1660 = vmatprep.subr.mxu0 0.0
    %1661 = vmatpush1.msra.mxu0 0.0
    %1662 = vmatprep.subr.mxu0 0.0
    %1663 = vmatpush1.msra.mxu0 0.0
    %1664 = vmatprep.subr.mxu0 0.0
    %1665 = vmatpush1.msra.mxu0 0.0
    %1666 = vmatprep.subr.mxu0 0.0
    %1667 = vmatpush1.msra.mxu0 0.0
    %1668 = vmatprep.subr.mxu0 0.0
    %1669 = vmatpush1.msra.mxu0 0.0
    %1670 = vmatprep.subr.mxu0 0.0
    %1671 = vmatpush1.msra.mxu0 0.0
    %1672 = vmatprep.subr.mxu0 0.0
    %1673 = vmatpush1.msra.mxu0 0.0
    %1674 = vmatprep.subr.mxu0 0.0
    %1675 = vmatpush1.msra.mxu0 0.0
    %1676 = vmatprep.subr.mxu0 0.0
    %1677 = vmatpush1.msra.mxu0 0.0
    %1678 = vmatprep.subr.mxu0 0.0
    %1679 = vmatpush1.msra.mxu0 0.0
    %1680 = vmatprep.subr.mxu0 0.0
    %1681 = vmatpush1.msra.mxu0 0.0
    %1682 = vmatprep.subr.mxu0 0.0
    %1683 = vmatpush1.msra.mxu0 %v1641
    %1684 = vmatprep.subr.mxu0 0.0
    %1685 = vmatpush1.msra.mxu0 %v1639
    %1686 = vmatprep.subr.mxu0 0.0
    %1687 = vmatpush1.msra.mxu0 %v1637
    %1688 = vmatprep.subr.mxu0 0.0
    %1689 = vmatpush1.msra.mxu0 %v1635
    %1690 = vmatprep.subr.mxu0 0.0
    %1691 = vmatpush2.msra.mxu0 0.0
    %1692 = vmatprep.subr.mxu0 0.0
    %1693 = vmatpush2.msra.mxu0 0.0
    %1694 = vmatprep.subr.mxu0 0.0
    %1695 = vmatpush2.msra.mxu0 0.0
    %1696 = vmatprep.subr.mxu0 0.0
    %1697 = vmatpush2.msra.mxu0 0.0
    %1698 = vmatprep.subr.mxu0 0.0
    %1699 = vmatpush2.msra.mxu0 0.0
    %1700 = vmatprep.subr.mxu0 0.0
    %1701 = vmatpush2.msra.mxu0 0.0
    %1702 = vmatprep.subr.mxu0 0.0
    %1703 = vmatpush2.msra.mxu0 0.0
    %1704 = vmatprep.subr.mxu0 0.0
    %1705 = vmatpush2.msra.mxu0 0.0
    %1706 = vmatprep.subr.mxu0 0.0
    %1707 = vmatpush2.msra.mxu0 0.0
    %1708 = vmatprep.subr.mxu0 0.0
    %1709 = vmatpush2.msra.mxu0 0.0
    %1710 = vmatprep.subr.mxu0 0.0
    %1711 = vmatpush2.msra.mxu0 0.0
    %1712 = vmatprep.subr.mxu0 0.0
    %1713 = vmatpush2.msra.mxu0 0.0
    %1714 = vmatprep.subr.mxu0 0.0
    %1715 = vmatpush2.msra.mxu0 0.0
    %1716 = vmatprep.subr.mxu0 0.0
    %1717 = vmatpush2.msra.mxu0 0.0
    %1718 = vmatprep.subr.mxu0 0.0
    %1719 = vmatpush2.msra.mxu0 0.0
    %1720 = vmatprep.subr.mxu0 0.0
    %1721 = vmatpush2.msra.mxu0 0.0
    %1722 = vmatprep.mubr.f32.mxu0 0.0
    %1723 = vmatmul.mubr.f32.gmra.mxu0 %v1647
    %v1724 = vpop.f32.mrf.mxu0
    %v1725 = vadd.f32 %v1629, %v1724
    %v1726 = vpop.f32.mrf.mxu0
    %1727 = vmatprep.mubr.f32.mxu0 0.0
    %1728 = vmatmul.mubr.f32.gmra.mxu0 %v1650
    %v1729 = vpop.f32.mrf.mxu0
    %v1730 = vadd.f32 %v1629, %v1729
    %v1731 = vpop.f32.mrf.mxu0
    %1732 = vmatprep.mubr.f32.mxu0 0.0
    %1733 = vmatmul.mubr.f32.gmra.mxu0 %v1653
    %v1734 = vpop.f32.mrf.mxu0
    %v1735 = vadd.f32 %v1629, %v1734
    %v1736 = vpop.f32.mrf.mxu0
    %1737 = vmatprep.mubr.f32.mxu0 0.0
    %1738 = vmatmul.mubr.f32.gmra.mxu0 %v1656
    %v1739 = vpop.f32.mrf.mxu0
    %v1740 = vadd.f32 %v1629, %v1739
    %v1741 = vpop.f32.mrf.mxu0
    %1742 = vdwg.mxu0
    %v1743 = vmul.f32 %v1725, 0.5
    %v1744 = vmul.f32 %v1730, 0.5
    %v1745 = vmul.f32 %v1735, 0.5
    %v1746 = vmul.f32 %v1740, 0.5
    %v1747 = vmul.f32 %v1725, 0.70710677
    %v1748 = vmul.f32 %v1730, 0.70710677
    %v1749 = vmul.f32 %v1735, 0.70710677
    %v1750 = vmul.f32 %v1740, 0.70710677
    %v1751 = verf.f32.pop %v1747
    %v1752 = verf.f32.pop %v1748
    %v1753 = verf.f32.pop %v1749
    %v1754 = verf.f32.pop %v1750
    %v1755 = vadd.f32 %v1751, 1.0
    %v1756 = vadd.f32 %v1752, 1.0
    %v1757 = vadd.f32 %v1753, 1.0
    %v1758 = vadd.f32 %v1754, 1.0
    %v1759 = vmul.f32 %v1743, %v1755
    %v1760 = vmul.f32 %v1744, %v1756
    %v1761 = vmul.f32 %v1745, %v1757
    %v1762 = vmul.f32 %v1746, %v1758
    %v1763 = vlaneseq
    %v1764 = vshrl.u32 %v1763, 7
    %v1765 = vsub.s32 7, %v1764
    %v1766 = vrot.slane %v117, %v1765
    %vm1767 = vcmask 523264
    %v1769 = vsel %vm1767, %v1759, 0
    %v1772 = vsel %vm1767, %v1760, 0
    %v1775 = vsel %vm1767, %v1761, 0
    %v1778 = vsel %vm1767, %v1762, 0
    %1780 = vmatprep.subr.mxu0 0.0
    %1781 = vmatpush1.msra.mxu0 0.0
    %1782 = vmatprep.subr.mxu0 0.0
    %1783 = vmatpush1.msra.mxu0 0.0
    %1784 = vmatprep.subr.mxu0 0.0
    %1785 = vmatpush1.msra.mxu0 0.0
    %1786 = vmatprep.subr.mxu0 0.0
    %1787 = vmatpush1.msra.mxu0 0.0
    %1788 = vmatprep.subr.mxu0 0.0
    %1789 = vmatpush1.msra.mxu0 0.0
    %1790 = vmatprep.subr.mxu0 0.0
    %1791 = vmatpush1.msra.mxu0 0.0
    %1792 = vmatprep.subr.mxu0 0.0
    %1793 = vmatpush1.msra.mxu0 0.0
    %1794 = vmatprep.subr.mxu0 0.0
    %1795 = vmatpush1.msra.mxu0 0.0
    %1796 = vmatprep.subr.mxu0 0.0
    %1797 = vmatpush1.msra.mxu0 %v116
    %1798 = vmatprep.subr.mxu0 0.0
    %1799 = vmatpush1.msra.mxu0 %v115
    %1800 = vmatprep.subr.mxu0 0.0
    %1801 = vmatpush1.msra.mxu0 %v114
    %1802 = vmatprep.subr.mxu0 0.0
    %1803 = vmatpush1.msra.mxu0 %v113
    %1804 = vmatprep.subr.mxu0 0.0
    %1805 = vmatpush1.msra.mxu0 %v112
    %1806 = vmatprep.subr.mxu0 0.0
    %1807 = vmatpush1.msra.mxu0 %v111
    %1808 = vmatprep.subr.mxu0 0.0
    %1809 = vmatpush1.msra.mxu0 %v110
    %1810 = vmatprep.subr.mxu0 0.0
    %1811 = vmatpush1.msra.mxu0 %v109
    %1812 = vmatprep.subr.mxu0 0.0
    %1813 = vmatpush2.msra.mxu0 0.0
    %1814 = vmatprep.subr.mxu0 0.0
    %1815 = vmatpush2.msra.mxu0 0.0
    %1816 = vmatprep.subr.mxu0 0.0
    %1817 = vmatpush2.msra.mxu0 0.0
    %1818 = vmatprep.subr.mxu0 0.0
    %1819 = vmatpush2.msra.mxu0 0.0
    %1820 = vmatprep.subr.mxu0 0.0
    %1821 = vmatpush2.msra.mxu0 0.0
    %1822 = vmatprep.subr.mxu0 0.0
    %1823 = vmatpush2.msra.mxu0 0.0
    %1824 = vmatprep.subr.mxu0 0.0
    %1825 = vmatpush2.msra.mxu0 0.0
    %1826 = vmatprep.subr.mxu0 0.0
    %1827 = vmatpush2.msra.mxu0 0.0
    %1828 = vmatprep.subr.mxu0 0.0
    %1829 = vmatpush2.msra.mxu0 0.0
    %1830 = vmatprep.subr.mxu0 0.0
    %1831 = vmatpush2.msra.mxu0 0.0
    %1832 = vmatprep.subr.mxu0 0.0
    %1833 = vmatpush2.msra.mxu0 0.0
    %1834 = vmatprep.subr.mxu0 0.0
    %1835 = vmatpush2.msra.mxu0 0.0
    %1836 = vmatprep.subr.mxu0 0.0
    %1837 = vmatpush2.msra.mxu0 0.0
    %1838 = vmatprep.subr.mxu0 0.0
    %1839 = vmatpush2.msra.mxu0 0.0
    %1840 = vmatprep.subr.mxu0 0.0
    %1841 = vmatpush2.msra.mxu0 0.0
    %1842 = vmatprep.subr.mxu0 0.0
    %1843 = vmatpush2.msra.mxu0 0.0
    %1844 = vmatprep.mubr.f32.mxu0 0.0
    %1845 = vmatmul.mubr.f32.gmra.mxu0 %v1769
    %v1846 = vpop.f32.mrf.mxu0
    %v1847 = vadd.f32 %v1766, %v1846
    %v1848 = vpop.f32.mrf.mxu0
    %1849 = vmatprep.mubr.f32.mxu0 0.0
    %1850 = vmatmul.mubr.f32.gmra.mxu0 %v1772
    %v1851 = vpop.f32.mrf.mxu0
    %v1852 = vadd.f32 %v1766, %v1851
    %v1853 = vpop.f32.mrf.mxu0
    %1854 = vmatprep.mubr.f32.mxu0 0.0
    %1855 = vmatmul.mubr.f32.gmra.mxu0 %v1775
    %v1856 = vpop.f32.mrf.mxu0
    %v1857 = vadd.f32 %v1766, %v1856
    %v1858 = vpop.f32.mrf.mxu0
    %1859 = vmatprep.mubr.f32.mxu0 0.0
    %1860 = vmatmul.mubr.f32.gmra.mxu0 %v1778
    %v1861 = vpop.f32.mrf.mxu0
    %v1862 = vadd.f32 %v1766, %v1861
    %v1863 = vpop.f32.mrf.mxu0
    %1864 = vdwg.mxu0
    %v1865 = vadd.f32 %v1847, %v1536
    %v1866 = vadd.f32 %v1852, %v1541
    %v1867 = vadd.f32 %v1857, %v1546
    %v1868 = vadd.f32 %v1862, %v1551
    %1870 = vset.pattern.permute.xlu0 32
    %1871 = vperm.xlu0 %1870, %v59
    %v1872 = vpop.permute.xlu0 %1871
    %1875 = vset.pattern.permute.xlu0 32
    %1876 = vperm.xlu0 %1875, %v60
    %v1877 = vpop.permute.xlu0 %1876
    %1880 = vset.pattern.permute.xlu0 32
    %1881 = vperm.xlu0 %1880, %v61
    %v1882 = vpop.permute.xlu0 %1881
    %1885 = vset.pattern.permute.xlu0 32
    %1886 = vperm.xlu0 %1885, %v62
    %v1887 = vpop.permute.xlu0 %1886
    %v1889 = vmul.f32 %v1865, %v1872
    %v1890 = vmul.f32 %v1866, %v1877
    %v1891 = vmul.f32 %v1867, %v1882
    %v1892 = vmul.f32 %v1868, %v1887
    %v1893 = vadd.f32 %v1889, %v59
    %v1894 = vadd.f32 %v1890, %v60
    %v1895 = vadd.f32 %v1891, %v61
    %v1896 = vadd.f32 %v1892, %v62
    %v1897 = vld [vmem:[#allocation6 + $0x60] sm:$0xff]
    %v1898 = vld [vmem:[#allocation6 + $0x68] sm:$0xff]
    %v1899 = vld [vmem:[#allocation6 + $0x70] sm:$0xff]
    %v1900 = vld [vmem:[#allocation6 + $0x78] sm:$0xff]
    %v1901 = vld [vmem:[#allocation6 + $0x80] sm:$0xff]
    %v1902 = vld [vmem:[#allocation6 + $0x88] sm:$0xff]
    %v1903 = vld [vmem:[#allocation6 + $0x90] sm:$0xff]
    %v1904 = vld [vmem:[#allocation6 + $0x98] sm:$0xff]
    %v1905 = vld [vmem:[#allocation6 + $0x80] sm:$0xff]
    %v1906 = vld [vmem:[#allocation6 + $0x88] sm:$0xff]
    %v1907 = vld [vmem:[#allocation6 + $0x90] sm:$0xff]
    %v1908 = vld [vmem:[#allocation6 + $0x98] sm:$0xff]
    %v1909 = vld [vmem:[#allocation6 + $0xa0] sm:$0xff]
    %v1910 = vld [vmem:[#allocation6 + $0xa8] sm:$0xff]
    %v1911 = vld [vmem:[#allocation6 + $0xb0] sm:$0xff]
    %v1912 = vld [vmem:[#allocation6 + $0xb8] sm:$0xff]
    %v1913 = vld [vmem:[#allocation8 + $0x8] sm:$0xff]
    %v1914 = vsel %vm118, %v1893, 0.0
    %1915 = vadd.xlane.f32.xlu0 %v1914
    %v1916 = vpop.xlane.xlu0 %1915
    %v1917 = vsel %vm118, %v1894, 0.0
    %1918 = vadd.xlane.f32.xlu0 %v1917
    %v1919 = vpop.xlane.xlu0 %1918
    %v1920 = vsel %vm118, %v1895, 0.0
    %1921 = vadd.xlane.f32.xlu0 %v1920
    %v1922 = vpop.xlane.xlu0 %1921
    %v1923 = vsel %vm118, %v1896, 0.0
    %1924 = vadd.xlane.f32.xlu0 %v1923
    %v1925 = vpop.xlane.xlu0 %1924
    %v1926 = vmul.f32 %v1916, %v131
    %v1927 = vmul.f32 %v1919, %v131
    %v1928 = vmul.f32 %v1922, %v131
    %v1929 = vmul.f32 %v1925, %v131
    %v1930 = vsub.f32 %v1893, %v1926
    %v1931 = vsub.f32 %v1894, %v1927
    %v1932 = vsub.f32 %v1895, %v1928
    %v1933 = vsub.f32 %v1896, %v1929
    %v1934 = vmul.f32 %v1930, %v1930
    %v1935 = vmul.f32 %v1931, %v1931
    %v1936 = vmul.f32 %v1932, %v1932
    %v1937 = vmul.f32 %v1933, %v1933
    %v1938 = vsel %vm118, %v1934, 0.0
    %1939 = vadd.xlane.f32.xlu0 %v1938
    %v1940 = vpop.xlane.xlu0 %1939
    %v1941 = vsel %vm118, %v1935, 0.0
    %1942 = vadd.xlane.f32.xlu0 %v1941
    %v1943 = vpop.xlane.xlu0 %1942
    %v1944 = vsel %vm118, %v1936, 0.0
    %1945 = vadd.xlane.f32.xlu0 %v1944
    %v1946 = vpop.xlane.xlu0 %1945
    %v1947 = vsel %vm118, %v1937, 0.0
    %1948 = vadd.xlane.f32.xlu0 %v1947
    %v1949 = vpop.xlane.xlu0 %1948
    %v1950 = vmul.f32 %v1940, %v131
    %v1951 = vmul.f32 %v1943, %v131
    %v1952 = vmul.f32 %v1946, %v131
    %v1953 = vmul.f32 %v1949, %v131
    %v1954 = vadd.f32 %v1950, 1e-12
    %v1955 = vadd.f32 %v1951, 1e-12
    %v1956 = vadd.f32 %v1952, 1e-12
    %v1957 = vadd.f32 %v1953, 1e-12
    %v1958 = vrsqrt.pop %v1954
    %v1959 = vrsqrt.pop %v1955
    %v1960 = vrsqrt.pop %v1956
    %v1961 = vrsqrt.pop %v1957
    %v1962 = vmul.f32 %v1930, %v1958
    %v1963 = vmul.f32 %v1931, %v1959
    %v1964 = vmul.f32 %v1932, %v1960
    %v1965 = vmul.f32 %v1933, %v1961
    %v1966 = vlaneseq
    %v1967 = vshrl.u32 %v1966, 7
    %v1968 = vsub.s32 0, %v1967
    %v1969 = vrot.slane %v1913, %v1968
    %v1970 = vmul.f32 %v1962, %v1969
    %v1971 = vmul.f32 %v1963, %v1969
    %v1972 = vmul.f32 %v1964, %v1969
    %v1973 = vmul.f32 %v1965, %v1969
    %v1974 = vlaneseq
    %v1975 = vshrl.u32 %v1974, 7
    %v1976 = vsub.s32 1, %v1975
    %v1977 = vrot.slane %v1913, %v1976
    %v1978 = vadd.f32 %v1970, %v1977
    %v1979 = vadd.f32 %v1971, %v1977
    %v1980 = vadd.f32 %v1972, %v1977
    %v1981 = vadd.f32 %v1973, %v1977
    %v1982 = vlaneseq
    %v1983 = vshrl.u32 %v1982, 7
    %v1984 = vsub.s32 2, %v1983
    %v1985 = vrot.slane %v1913, %v1984
    %v1987 = vsel %vm118, %v1978, 0
    %v1990 = vsel %vm118, %v1979, 0
    %v1993 = vsel %vm118, %v1980, 0
    %v1996 = vsel %vm118, %v1981, 0
    %1998 = vmatprep.subr.mxu0 0.0
    %1999 = vmatpush1.msra.mxu0 0.0
    %2000 = vmatprep.subr.mxu0 0.0
    %2001 = vmatpush1.msra.mxu0 0.0
    %2002 = vmatprep.subr.mxu0 0.0
    %2003 = vmatpush1.msra.mxu0 0.0
    %2004 = vmatprep.subr.mxu0 0.0
    %2005 = vmatpush1.msra.mxu0 0.0
    %2006 = vmatprep.subr.mxu0 0.0
    %2007 = vmatpush1.msra.mxu0 0.0
    %2008 = vmatprep.subr.mxu0 0.0
    %2009 = vmatpush1.msra.mxu0 0.0
    %2010 = vmatprep.subr.mxu0 0.0
    %2011 = vmatpush1.msra.mxu0 0.0
    %2012 = vmatprep.subr.mxu0 0.0
    %2013 = vmatpush1.msra.mxu0 0.0
    %2014 = vmatprep.subr.mxu0 0.0
    %2015 = vmatpush1.msra.mxu0 0.0
    %2016 = vmatprep.subr.mxu0 0.0
    %2017 = vmatpush1.msra.mxu0 0.0
    %2018 = vmatprep.subr.mxu0 0.0
    %2019 = vmatpush1.msra.mxu0 0.0
    %2020 = vmatprep.subr.mxu0 0.0
    %2021 = vmatpush1.msra.mxu0 0.0
    %2022 = vmatprep.subr.mxu0 0.0
    %2023 = vmatpush1.msra.mxu0 %v1900
    %2024 = vmatprep.subr.mxu0 0.0
    %2025 = vmatpush1.msra.mxu0 %v1899
    %2026 = vmatprep.subr.mxu0 0.0
    %2027 = vmatpush1.msra.mxu0 %v1898
    %2028 = vmatprep.subr.mxu0 0.0
    %2029 = vmatpush1.msra.mxu0 %v1897
    %2030 = vmatprep.subr.mxu0 0.0
    %2031 = vmatpush2.msra.mxu0 0.0
    %2032 = vmatprep.subr.mxu0 0.0
    %2033 = vmatpush2.msra.mxu0 0.0
    %2034 = vmatprep.subr.mxu0 0.0
    %2035 = vmatpush2.msra.mxu0 0.0
    %2036 = vmatprep.subr.mxu0 0.0
    %2037 = vmatpush2.msra.mxu0 0.0
    %2038 = vmatprep.subr.mxu0 0.0
    %2039 = vmatpush2.msra.mxu0 0.0
    %2040 = vmatprep.subr.mxu0 0.0
    %2041 = vmatpush2.msra.mxu0 0.0
    %2042 = vmatprep.subr.mxu0 0.0
    %2043 = vmatpush2.msra.mxu0 0.0
    %2044 = vmatprep.subr.mxu0 0.0
    %2045 = vmatpush2.msra.mxu0 0.0
    %2046 = vmatprep.subr.mxu0 0.0
    %2047 = vmatpush2.msra.mxu0 0.0
    %2048 = vmatprep.subr.mxu0 0.0
    %2049 = vmatpush2.msra.mxu0 0.0
    %2050 = vmatprep.subr.mxu0 0.0
    %2051 = vmatpush2.msra.mxu0 0.0
    %2052 = vmatprep.subr.mxu0 0.0
    %2053 = vmatpush2.msra.mxu0 0.0
    %2054 = vmatprep.subr.mxu0 0.0
    %2055 = vmatpush2.msra.mxu0 0.0
    %2056 = vmatprep.subr.mxu0 0.0
    %2057 = vmatpush2.msra.mxu0 0.0
    %2058 = vmatprep.subr.mxu0 0.0
    %2059 = vmatpush2.msra.mxu0 0.0
    %2060 = vmatprep.subr.mxu0 0.0
    %2061 = vmatpush2.msra.mxu0 0.0
    %2062 = vmatprep.mubr.f32.mxu0 0.0
    %2063 = vmatmul.mubr.f32.gmra.mxu0 %v1987
    %v2064 = vpop.f32.mrf.mxu0
    %v2065 = vadd.f32 %v1985, %v2064
    %v2066 = vpop.f32.mrf.mxu0
    %2067 = vmatprep.mubr.f32.mxu0 0.0
    %2068 = vmatmul.mubr.f32.gmra.mxu0 %v1990
    %v2069 = vpop.f32.mrf.mxu0
    %v2070 = vadd.f32 %v1985, %v2069
    %v2071 = vpop.f32.mrf.mxu0
    %2072 = vmatprep.mubr.f32.mxu0 0.0
    %2073 = vmatmul.mubr.f32.gmra.mxu0 %v1993
    %v2074 = vpop.f32.mrf.mxu0
    %v2075 = vadd.f32 %v1985, %v2074
    %v2076 = vpop.f32.mrf.mxu0
    %2077 = vmatprep.mubr.f32.mxu0 0.0
    %2078 = vmatmul.mubr.f32.gmra.mxu0 %v1996
    %v2079 = vpop.f32.mrf.mxu0
    %v2080 = vadd.f32 %v1985, %v2079
    %v2081 = vpop.f32.mrf.mxu0
    %2082 = vdwg.mxu0
    %2087 = vrot.lane.b32.xlu0 %v2065, 96
    %v2088 = vpop.permute.xlu0 %2087
    %2089 = vrot.lane.b32.xlu0 %v2070, 96
    %v2090 = vpop.permute.xlu0 %2089
    %2091 = vrot.lane.b32.xlu0 %v2075, 96
    %v2092 = vpop.permute.xlu0 %2091
    %2093 = vrot.lane.b32.xlu0 %v2080, 96
    %v2094 = vpop.permute.xlu0 %2093
    %v2095 = vsel %vm301, %v2065, 0
    %v2097 = vsel %vm301, %v2070, 0
    %v2099 = vsel %vm301, %v2075, 0
    %v2101 = vsel %vm301, %v2080, 0
    %v2103 = vsel %vm301, %v2088, 0
    %v2105 = vsel %vm301, %v2090, 0
    %v2107 = vsel %vm301, %v2092, 0
    %v2109 = vsel %vm301, %v2094, 0
    %2111 = vmatprep.subr.mxu0 0.0
    %2112 = vmatpush1.xpose.msra.mxu0 0.0
    %2113 = vmatprep.subr.mxu0 0.0
    %2114 = vmatpush1.xpose.msra.mxu0 0.0
    %2115 = vmatprep.subr.mxu0 0.0
    %2116 = vmatpush1.xpose.msra.mxu0 0.0
    %2117 = vmatprep.subr.mxu0 0.0
    %2118 = vmatpush1.xpose.msra.mxu0 0.0
    %2119 = vmatprep.subr.mxu0 0.0
    %2120 = vmatpush1.xpose.msra.mxu0 0.0
    %2121 = vmatprep.subr.mxu0 0.0
    %2122 = vmatpush1.xpose.msra.mxu0 0.0
    %2123 = vmatprep.subr.mxu0 0.0
    %2124 = vmatpush1.xpose.msra.mxu0 0.0
    %2125 = vmatprep.subr.mxu0 0.0
    %2126 = vmatpush1.xpose.msra.mxu0 0.0
    %2127 = vmatprep.subr.mxu0 0.0
    %2128 = vmatpush1.xpose.msra.mxu0 0.0
    %2129 = vmatprep.subr.mxu0 0.0
    %2130 = vmatpush1.xpose.msra.mxu0 0.0
    %2131 = vmatprep.subr.mxu0 0.0
    %2132 = vmatpush1.xpose.msra.mxu0 0.0
    %2133 = vmatprep.subr.mxu0 0.0
    %2134 = vmatpush1.xpose.msra.mxu0 0.0
    %2135 = vmatprep.subr.mxu0 0.0
    %2136 = vmatpush1.xpose.msra.mxu0 %v2109
    %2137 = vmatprep.subr.mxu0 0.0
    %2138 = vmatpush1.xpose.msra.mxu0 %v2107
    %2139 = vmatprep.subr.mxu0 0.0
    %2140 = vmatpush1.xpose.msra.mxu0 %v2105
    %2141 = vmatprep.subr.mxu0 0.0
    %2142 = vmatpush1.xpose.msra.mxu0 %v2103
    %2143 = vmatprep.subr.mxu0 0.0
    %2144 = vmatpush2.xpose.msra.mxu0 0.0
    %2145 = vmatprep.subr.mxu0 0.0
    %2146 = vmatpush2.xpose.msra.mxu0 0.0
    %2147 = vmatprep.subr.mxu0 0.0
    %2148 = vmatpush2.xpose.msra.mxu0 0.0
    %2149 = vmatprep.subr.mxu0 0.0
    %2150 = vmatpush2.xpose.msra.mxu0 0.0
    %2151 = vmatprep.subr.mxu0 0.0
    %2152 = vmatpush2.xpose.msra.mxu0 0.0
    %2153 = vmatprep.subr.mxu0 0.0
    %2154 = vmatpush2.xpose.msra.mxu0 0.0
    %2155 = vmatprep.subr.mxu0 0.0
    %2156 = vmatpush2.xpose.msra.mxu0 0.0
    %2157 = vmatprep.subr.mxu0 0.0
    %2158 = vmatpush2.xpose.msra.mxu0 0.0
    %2159 = vmatprep.subr.mxu0 0.0
    %2160 = vmatpush2.xpose.msra.mxu0 0.0
    %2161 = vmatprep.subr.mxu0 0.0
    %2162 = vmatpush2.xpose.msra.mxu0 0.0
    %2163 = vmatprep.subr.mxu0 0.0
    %2164 = vmatpush2.xpose.msra.mxu0 0.0
    %2165 = vmatprep.subr.mxu0 0.0
    %2166 = vmatpush2.xpose.msra.mxu0 0.0
    %2167 = vmatprep.subr.mxu0 0.0
    %2168 = vmatpush2.xpose.msra.mxu0 0.0
    %2169 = vmatprep.subr.mxu0 0.0
    %2170 = vmatpush2.xpose.msra.mxu0 0.0
    %2171 = vmatprep.subr.mxu0 0.0
    %2172 = vmatpush2.xpose.msra.mxu0 0.0
    %2173 = vmatprep.subr.mxu0 0.0
    %2174 = vmatpush2.xpose.msra.mxu0 0.0
    %2175 = vmatprep.mubr.f32.mxu0 0.0
    %2176 = vmatmul.mubr.f32.gmra.mxu0 %v2095
    %v2177 = vpop.f32.mrf.mxu0
    %v2178 = vadd.f32 %v95, %v2177
    %v2179 = vpop.f32.mrf.mxu0
    %2180 = vmatprep.mubr.f32.mxu0 0.0
    %2181 = vmatmul.mubr.f32.gmra.mxu0 %v2097
    %v2182 = vpop.f32.mrf.mxu0
    %v2183 = vadd.f32 %v95, %v2182
    %v2184 = vpop.f32.mrf.mxu0
    %2185 = vmatprep.mubr.f32.mxu0 0.0
    %2186 = vmatmul.mubr.f32.gmra.mxu0 %v2099
    %v2187 = vpop.f32.mrf.mxu0
    %v2188 = vadd.f32 %v104, %v2187
    %v2189 = vpop.f32.mrf.mxu0
    %2190 = vmatprep.mubr.f32.mxu0 0.0
    %2191 = vmatmul.mubr.f32.gmra.mxu0 %v2101
    %v2192 = vpop.f32.mrf.mxu0
    %v2193 = vadd.f32 %v104, %v2192
    %v2194 = vpop.f32.mrf.mxu0
    %2195 = vdwg.mxu0
    %v2196 = vsel %vm118, %v2178, -inf
    %2197 = vmax.xlane.f32.xlu0 %v2196
    %v2198 = vpop.xlane.xlu0 %2197
    %v2199 = vsel %vm118, %v2183, -inf
    %2200 = vmax.xlane.f32.xlu0 %v2199
    %v2201 = vpop.xlane.xlu0 %2200
    %v2202 = vsel %vm118, %v2188, -inf
    %2203 = vmax.xlane.f32.xlu0 %v2202
    %v2204 = vpop.xlane.xlu0 %2203
    %v2205 = vsel %vm118, %v2193, -inf
    %2206 = vmax.xlane.f32.xlu0 %v2205
    %v2207 = vpop.xlane.xlu0 %2206
    %v2208 = vsub.f32 %v2178, %v2198
    %v2209 = vsub.f32 %v2183, %v2201
    %v2210 = vsub.f32 %v2188, %v2204
    %v2211 = vsub.f32 %v2193, %v2207
    %v2212 = vmul.f32 %v2208, 1.442695
    %v2213 = vpow.pop %v2212
    %v2214 = vmul.f32 %v2209, 1.442695
    %v2215 = vpow.pop %v2214
    %v2216 = vmul.f32 %v2210, 1.442695
    %v2217 = vpow.pop %v2216
    %v2218 = vmul.f32 %v2211, 1.442695
    %v2219 = vpow.pop %v2218
    %v2220 = vsel %vm118, %v2213, 0.0
    %2221 = vadd.xlane.f32.xlu0 %v2220
    %v2222 = vpop.xlane.xlu0 %2221
    %v2223 = vsel %vm118, %v2215, 0.0
    %2224 = vadd.xlane.f32.xlu0 %v2223
    %v2225 = vpop.xlane.xlu0 %2224
    %v2226 = vsel %vm118, %v2217, 0.0
    %2227 = vadd.xlane.f32.xlu0 %v2226
    %v2228 = vpop.xlane.xlu0 %2227
    %v2229 = vsel %vm118, %v2219, 0.0
    %2230 = vadd.xlane.f32.xlu0 %v2229
    %v2231 = vpop.xlane.xlu0 %2230
    %v2232 = vrcp.pop %v2222
    %v2233 = vmul.f32 %v2213, %v2232
    %v2234 = vrcp.pop %v2225
    %v2235 = vmul.f32 %v2215, %v2234
    %v2236 = vrcp.pop %v2228
    %v2237 = vmul.f32 %v2217, %v2236
    %v2238 = vrcp.pop %v2231
    %v2239 = vmul.f32 %v2219, %v2238
    %2240 = vrot.lane.b32.xlu0 %v2065, 64
    %v2241 = vpop.permute.xlu0 %2240
    %2242 = vrot.lane.b32.xlu0 %v2070, 64
    %v2243 = vpop.permute.xlu0 %2242
    %2244 = vrot.lane.b32.xlu0 %v2075, 64
    %v2245 = vpop.permute.xlu0 %2244
    %2246 = vrot.lane.b32.xlu0 %v2080, 64
    %v2247 = vpop.permute.xlu0 %2246
    %v2253 = vsel %vm118, %v2233, 0
    %v2256 = vsel %vm118, %v2235, 0
    %v2259 = vsel %vm118, %v2237, 0
    %v2262 = vsel %vm118, %v2239, 0
    %2264 = vmatprep.subr.mxu0 0.0
    %2265 = vmatpush1.msra.mxu0 0.0
    %2266 = vmatprep.subr.mxu0 0.0
    %2267 = vmatpush1.msra.mxu0 0.0
    %2268 = vmatprep.subr.mxu0 0.0
    %2269 = vmatpush1.msra.mxu0 0.0
    %2270 = vmatprep.subr.mxu0 0.0
    %2271 = vmatpush1.msra.mxu0 0.0
    %2272 = vmatprep.subr.mxu0 0.0
    %2273 = vmatpush1.msra.mxu0 0.0
    %2274 = vmatprep.subr.mxu0 0.0
    %2275 = vmatpush1.msra.mxu0 0.0
    %2276 = vmatprep.subr.mxu0 0.0
    %2277 = vmatpush1.msra.mxu0 0.0
    %2278 = vmatprep.subr.mxu0 0.0
    %2279 = vmatpush1.msra.mxu0 0.0
    %2280 = vmatprep.subr.mxu0 0.0
    %2281 = vmatpush1.msra.mxu0 0.0
    %2282 = vmatprep.subr.mxu0 0.0
    %2283 = vmatpush1.msra.mxu0 0.0
    %2284 = vmatprep.subr.mxu0 0.0
    %2285 = vmatpush1.msra.mxu0 0.0
    %2286 = vmatprep.subr.mxu0 0.0
    %2287 = vmatpush1.msra.mxu0 0.0
    %2288 = vmatprep.subr.mxu0 0.0
    %2289 = vmatpush1.msra.mxu0 %v2247
    %2290 = vmatprep.subr.mxu0 0.0
    %2291 = vmatpush1.msra.mxu0 %v2245
    %2292 = vmatprep.subr.mxu0 0.0
    %2293 = vmatpush1.msra.mxu0 %v2243
    %2294 = vmatprep.subr.mxu0 0.0
    %2295 = vmatpush1.msra.mxu0 %v2241
    %2296 = vmatprep.subr.mxu0 0.0
    %2297 = vmatpush2.msra.mxu0 0.0
    %2298 = vmatprep.subr.mxu0 0.0
    %2299 = vmatpush2.msra.mxu0 0.0
    %2300 = vmatprep.subr.mxu0 0.0
    %2301 = vmatpush2.msra.mxu0 0.0
    %2302 = vmatprep.subr.mxu0 0.0
    %2303 = vmatpush2.msra.mxu0 0.0
    %2304 = vmatprep.subr.mxu0 0.0
    %2305 = vmatpush2.msra.mxu0 0.0
    %2306 = vmatprep.subr.mxu0 0.0
    %2307 = vmatpush2.msra.mxu0 0.0
    %2308 = vmatprep.subr.mxu0 0.0
    %2309 = vmatpush2.msra.mxu0 0.0
    %2310 = vmatprep.subr.mxu0 0.0
    %2311 = vmatpush2.msra.mxu0 0.0
    %2312 = vmatprep.subr.mxu0 0.0
    %2313 = vmatpush2.msra.mxu0 0.0
    %2314 = vmatprep.subr.mxu0 0.0
    %2315 = vmatpush2.msra.mxu0 0.0
    %2316 = vmatprep.subr.mxu0 0.0
    %2317 = vmatpush2.msra.mxu0 0.0
    %2318 = vmatprep.subr.mxu0 0.0
    %2319 = vmatpush2.msra.mxu0 0.0
    %2320 = vmatprep.subr.mxu0 0.0
    %2321 = vmatpush2.msra.mxu0 0.0
    %2322 = vmatprep.subr.mxu0 0.0
    %2323 = vmatpush2.msra.mxu0 0.0
    %2324 = vmatprep.subr.mxu0 0.0
    %2325 = vmatpush2.msra.mxu0 0.0
    %2326 = vmatprep.subr.mxu0 0.0
    %2327 = vmatpush2.msra.mxu0 0.0
    %2328 = vmatprep.mubr.f32.mxu0 0.0
    %2329 = vmatmul.mubr.f32.gmra.mxu0 %v2253
    %v2330 = vpop.f32.mrf.mxu0
    %v2331 = vadd.f32 0.0, %v2330
    %v2332 = vpop.f32.mrf.mxu0
    %2333 = vmatprep.mubr.f32.mxu0 0.0
    %2334 = vmatmul.mubr.f32.gmra.mxu0 %v2256
    %v2335 = vpop.f32.mrf.mxu0
    %v2336 = vadd.f32 0.0, %v2335
    %v2337 = vpop.f32.mrf.mxu0
    %2338 = vmatprep.mubr.f32.mxu0 0.0
    %2339 = vmatmul.mubr.f32.gmra.mxu0 %v2259
    %v2340 = vpop.f32.mrf.mxu0
    %v2341 = vadd.f32 0.0, %v2340
    %v2342 = vpop.f32.mrf.mxu0
    %2343 = vmatprep.mubr.f32.mxu0 0.0
    %2344 = vmatmul.mubr.f32.gmra.mxu0 %v2262
    %v2345 = vpop.f32.mrf.mxu0
    %v2346 = vadd.f32 0.0, %v2345
    %v2347 = vpop.f32.mrf.mxu0
    %2348 = vdwg.mxu0
    %2349 = vst.msk [vmem:[#allocation2] sm:$0xff] %vm301, %v2331
    %2350 = vst.msk [vmem:[#allocation2 + $0x8] sm:$0xff] %vm301, %v2336
    %2351 = vst.msk [vmem:[#allocation2 + $0x10] sm:$0xff] %vm301, %v2341
    %2352 = vst.msk [vmem:[#allocation2 + $0x18] sm:$0xff] %vm301, %v2346
    %2353 = vrot.lane.b32.xlu0 %v2065, 120
    %v2354 = vpop.permute.xlu0 %2353
    %2355 = vrot.lane.b32.xlu0 %v2070, 120
    %v2356 = vpop.permute.xlu0 %2355
    %2357 = vrot.lane.b32.xlu0 %v2075, 120
    %v2358 = vpop.permute.xlu0 %2357
    %2359 = vrot.lane.b32.xlu0 %v2080, 120
    %v2360 = vpop.permute.xlu0 %2359
    %2361 = vrot.lane.b32.xlu0 %v2065, 88
    %v2362 = vpop.permute.xlu0 %2361
    %2363 = vrot.lane.b32.xlu0 %v2070, 88
    %v2364 = vpop.permute.xlu0 %2363
    %2365 = vrot.lane.b32.xlu0 %v2075, 88
    %v2366 = vpop.permute.xlu0 %2365
    %2367 = vrot.lane.b32.xlu0 %v2080, 88
    %v2368 = vpop.permute.xlu0 %2367
    %v2369 = vsel %vm301, %v2354, 0
    %v2371 = vsel %vm301, %v2356, 0
    %v2373 = vsel %vm301, %v2358, 0
    %v2375 = vsel %vm301, %v2360, 0
    %v2377 = vsel %vm301, %v2362, 0
    %v2379 = vsel %vm301, %v2364, 0
    %v2381 = vsel %vm301, %v2366, 0
    %v2383 = vsel %vm301, %v2368, 0
    %2385 = vmatprep.subr.mxu0 0.0
    %2386 = vmatpush1.xpose.msra.mxu0 0.0
    %2387 = vmatprep.subr.mxu0 0.0
    %2388 = vmatpush1.xpose.msra.mxu0 0.0
    %2389 = vmatprep.subr.mxu0 0.0
    %2390 = vmatpush1.xpose.msra.mxu0 0.0
    %2391 = vmatprep.subr.mxu0 0.0
    %2392 = vmatpush1.xpose.msra.mxu0 0.0
    %2393 = vmatprep.subr.mxu0 0.0
    %2394 = vmatpush1.xpose.msra.mxu0 0.0
    %2395 = vmatprep.subr.mxu0 0.0
    %2396 = vmatpush1.xpose.msra.mxu0 0.0
    %2397 = vmatprep.subr.mxu0 0.0
    %2398 = vmatpush1.xpose.msra.mxu0 0.0
    %2399 = vmatprep.subr.mxu0 0.0
    %2400 = vmatpush1.xpose.msra.mxu0 0.0
    %2401 = vmatprep.subr.mxu0 0.0
    %2402 = vmatpush1.xpose.msra.mxu0 0.0
    %2403 = vmatprep.subr.mxu0 0.0
    %2404 = vmatpush1.xpose.msra.mxu0 0.0
    %2405 = vmatprep.subr.mxu0 0.0
    %2406 = vmatpush1.xpose.msra.mxu0 0.0
    %2407 = vmatprep.subr.mxu0 0.0
    %2408 = vmatpush1.xpose.msra.mxu0 0.0
    %2409 = vmatprep.subr.mxu0 0.0
    %2410 = vmatpush1.xpose.msra.mxu0 %v2383
    %2411 = vmatprep.subr.mxu0 0.0
    %2412 = vmatpush1.xpose.msra.mxu0 %v2381
    %2413 = vmatprep.subr.mxu0 0.0
    %2414 = vmatpush1.xpose.msra.mxu0 %v2379
    %2415 = vmatprep.subr.mxu0 0.0
    %2416 = vmatpush1.xpose.msra.mxu0 %v2377
    %2417 = vmatprep.subr.mxu0 0.0
    %2418 = vmatpush2.xpose.msra.mxu0 0.0
    %2419 = vmatprep.subr.mxu0 0.0
    %2420 = vmatpush2.xpose.msra.mxu0 0.0
    %2421 = vmatprep.subr.mxu0 0.0
    %2422 = vmatpush2.xpose.msra.mxu0 0.0
    %2423 = vmatprep.subr.mxu0 0.0
    %2424 = vmatpush2.xpose.msra.mxu0 0.0
    %2425 = vmatprep.subr.mxu0 0.0
    %2426 = vmatpush2.xpose.msra.mxu0 0.0
    %2427 = vmatprep.subr.mxu0 0.0
    %2428 = vmatpush2.xpose.msra.mxu0 0.0
    %2429 = vmatprep.subr.mxu0 0.0
    %2430 = vmatpush2.xpose.msra.mxu0 0.0
    %2431 = vmatprep.subr.mxu0 0.0
    %2432 = vmatpush2.xpose.msra.mxu0 0.0
    %2433 = vmatprep.subr.mxu0 0.0
    %2434 = vmatpush2.xpose.msra.mxu0 0.0
    %2435 = vmatprep.subr.mxu0 0.0
    %2436 = vmatpush2.xpose.msra.mxu0 0.0
    %2437 = vmatprep.subr.mxu0 0.0
    %2438 = vmatpush2.xpose.msra.mxu0 0.0
    %2439 = vmatprep.subr.mxu0 0.0
    %2440 = vmatpush2.xpose.msra.mxu0 0.0
    %2441 = vmatprep.subr.mxu0 0.0
    %2442 = vmatpush2.xpose.msra.mxu0 0.0
    %2443 = vmatprep.subr.mxu0 0.0
    %2444 = vmatpush2.xpose.msra.mxu0 0.0
    %2445 = vmatprep.subr.mxu0 0.0
    %2446 = vmatpush2.xpose.msra.mxu0 0.0
    %2447 = vmatprep.subr.mxu0 0.0
    %2448 = vmatpush2.xpose.msra.mxu0 0.0
    %2449 = vmatprep.mubr.f32.mxu0 0.0
    %2450 = vmatmul.mubr.f32.gmra.mxu0 %v2369
    %v2451 = vpop.f32.mrf.mxu0
    %v2452 = vadd.f32 %v95, %v2451
    %v2453 = vpop.f32.mrf.mxu0
    %2454 = vmatprep.mubr.f32.mxu0 0.0
    %2455 = vmatmul.mubr.f32.gmra.mxu0 %v2371
    %v2456 = vpop.f32.mrf.mxu0
    %v2457 = vadd.f32 %v95, %v2456
    %v2458 = vpop.f32.mrf.mxu0
    %2459 = vmatprep.mubr.f32.mxu0 0.0
    %2460 = vmatmul.mubr.f32.gmra.mxu0 %v2373
    %v2461 = vpop.f32.mrf.mxu0
    %v2462 = vadd.f32 %v104, %v2461
    %v2463 = vpop.f32.mrf.mxu0
    %2464 = vmatprep.mubr.f32.mxu0 0.0
    %2465 = vmatmul.mubr.f32.gmra.mxu0 %v2375
    %v2466 = vpop.f32.mrf.mxu0
    %v2467 = vadd.f32 %v104, %v2466
    %v2468 = vpop.f32.mrf.mxu0
    %2469 = vdwg.mxu0
    %v2470 = vsel %vm118, %v2452, -inf
    %2471 = vmax.xlane.f32.xlu0 %v2470
    %v2472 = vpop.xlane.xlu0 %2471
    %v2473 = vsel %vm118, %v2457, -inf
    %2474 = vmax.xlane.f32.xlu0 %v2473
    %v2475 = vpop.xlane.xlu0 %2474
    %v2476 = vsel %vm118, %v2462, -inf
    %2477 = vmax.xlane.f32.xlu0 %v2476
    %v2478 = vpop.xlane.xlu0 %2477
    %v2479 = vsel %vm118, %v2467, -inf
    %2480 = vmax.xlane.f32.xlu0 %v2479
    %v2481 = vpop.xlane.xlu0 %2480
    %v2482 = vsub.f32 %v2452, %v2472
    %v2483 = vsub.f32 %v2457, %v2475
    %v2484 = vsub.f32 %v2462, %v2478
    %v2485 = vsub.f32 %v2467, %v2481
    %v2486 = vmul.f32 %v2482, 1.442695
    %v2487 = vpow.pop %v2486
    %v2488 = vmul.f32 %v2483, 1.442695
    %v2489 = vpow.pop %v2488
    %v2490 = vmul.f32 %v2484, 1.442695
    %v2491 = vpow.pop %v2490
    %v2492 = vmul.f32 %v2485, 1.442695
    %v2493 = vpow.pop %v2492
    %v2494 = vsel %vm118, %v2487, 0.0
    %2495 = vadd.xlane.f32.xlu0 %v2494
    %v2496 = vpop.xlane.xlu0 %2495
    %v2497 = vsel %vm118, %v2489, 0.0
    %2498 = vadd.xlane.f32.xlu0 %v2497
    %v2499 = vpop.xlane.xlu0 %2498
    %v2500 = vsel %vm118, %v2491, 0.0
    %2501 = vadd.xlane.f32.xlu0 %v2500
    %v2502 = vpop.xlane.xlu0 %2501
    %v2503 = vsel %vm118, %v2493, 0.0
    %2504 = vadd.xlane.f32.xlu0 %v2503
    %v2505 = vpop.xlane.xlu0 %2504
    %v2506 = vrcp.pop %v2496
    %v2507 = vmul.f32 %v2487, %v2506
    %v2508 = vrcp.pop %v2499
    %v2509 = vmul.f32 %v2489, %v2508
    %v2510 = vrcp.pop %v2502
    %v2511 = vmul.f32 %v2491, %v2510
    %v2512 = vrcp.pop %v2505
    %v2513 = vmul.f32 %v2493, %v2512
    %2514 = vrot.lane.b32.xlu0 %v2065, 56
    %v2515 = vpop.permute.xlu0 %2514
    %2516 = vrot.lane.b32.xlu0 %v2070, 56
    %v2517 = vpop.permute.xlu0 %2516
    %2518 = vrot.lane.b32.xlu0 %v2075, 56
    %v2519 = vpop.permute.xlu0 %2518
    %2520 = vrot.lane.b32.xlu0 %v2080, 56
    %v2521 = vpop.permute.xlu0 %2520
    %v2527 = vsel %vm118, %v2507, 0
    %v2530 = vsel %vm118, %v2509, 0
    %v2533 = vsel %vm118, %v2511, 0
    %v2536 = vsel %vm118, %v2513, 0
    %2538 = vmatprep.subr.mxu0 0.0
    %2539 = vmatpush1.msra.mxu0 0.0
    %2540 = vmatprep.subr.mxu0 0.0
    %2541 = vmatpush1.msra.mxu0 0.0
    %2542 = vmatprep.subr.mxu0 0.0
    %2543 = vmatpush1.msra.mxu0 0.0
    %2544 = vmatprep.subr.mxu0 0.0
    %2545 = vmatpush1.msra.mxu0 0.0
    %2546 = vmatprep.subr.mxu0 0.0
    %2547 = vmatpush1.msra.mxu0 0.0
    %2548 = vmatprep.subr.mxu0 0.0
    %2549 = vmatpush1.msra.mxu0 0.0
    %2550 = vmatprep.subr.mxu0 0.0
    %2551 = vmatpush1.msra.mxu0 0.0
    %2552 = vmatprep.subr.mxu0 0.0
    %2553 = vmatpush1.msra.mxu0 0.0
    %2554 = vmatprep.subr.mxu0 0.0
    %2555 = vmatpush1.msra.mxu0 0.0
    %2556 = vmatprep.subr.mxu0 0.0
    %2557 = vmatpush1.msra.mxu0 0.0
    %2558 = vmatprep.subr.mxu0 0.0
    %2559 = vmatpush1.msra.mxu0 0.0
    %2560 = vmatprep.subr.mxu0 0.0
    %2561 = vmatpush1.msra.mxu0 0.0
    %2562 = vmatprep.subr.mxu0 0.0
    %2563 = vmatpush1.msra.mxu0 %v2521
    %2564 = vmatprep.subr.mxu0 0.0
    %2565 = vmatpush1.msra.mxu0 %v2519
    %2566 = vmatprep.subr.mxu0 0.0
    %2567 = vmatpush1.msra.mxu0 %v2517
    %2568 = vmatprep.subr.mxu0 0.0
    %2569 = vmatpush1.msra.mxu0 %v2515
    %2570 = vmatprep.subr.mxu0 0.0
    %2571 = vmatpush2.msra.mxu0 0.0
    %2572 = vmatprep.subr.mxu0 0.0
    %2573 = vmatpush2.msra.mxu0 0.0
    %2574 = vmatprep.subr.mxu0 0.0
    %2575 = vmatpush2.msra.mxu0 0.0
    %2576 = vmatprep.subr.mxu0 0.0
    %2577 = vmatpush2.msra.mxu0 0.0
    %2578 = vmatprep.subr.mxu0 0.0
    %2579 = vmatpush2.msra.mxu0 0.0
    %2580 = vmatprep.subr.mxu0 0.0
    %2581 = vmatpush2.msra.mxu0 0.0
    %2582 = vmatprep.subr.mxu0 0.0
    %2583 = vmatpush2.msra.mxu0 0.0
    %2584 = vmatprep.subr.mxu0 0.0
    %2585 = vmatpush2.msra.mxu0 0.0
    %2586 = vmatprep.subr.mxu0 0.0
    %2587 = vmatpush2.msra.mxu0 0.0
    %2588 = vmatprep.subr.mxu0 0.0
    %2589 = vmatpush2.msra.mxu0 0.0
    %2590 = vmatprep.subr.mxu0 0.0
    %2591 = vmatpush2.msra.mxu0 0.0
    %2592 = vmatprep.subr.mxu0 0.0
    %2593 = vmatpush2.msra.mxu0 0.0
    %2594 = vmatprep.subr.mxu0 0.0
    %2595 = vmatpush2.msra.mxu0 0.0
    %2596 = vmatprep.subr.mxu0 0.0
    %2597 = vmatpush2.msra.mxu0 0.0
    %2598 = vmatprep.subr.mxu0 0.0
    %2599 = vmatpush2.msra.mxu0 0.0
    %2600 = vmatprep.subr.mxu0 0.0
    %2601 = vmatpush2.msra.mxu0 0.0
    %2602 = vmatprep.mubr.f32.mxu0 0.0
    %2603 = vmatmul.mubr.f32.gmra.mxu0 %v2527
    %v2604 = vpop.f32.mrf.mxu0
    %v2605 = vadd.f32 0.0, %v2604
    %v2606 = vpop.f32.mrf.mxu0
    %2607 = vmatprep.mubr.f32.mxu0 0.0
    %2608 = vmatmul.mubr.f32.gmra.mxu0 %v2530
    %v2609 = vpop.f32.mrf.mxu0
    %v2610 = vadd.f32 0.0, %v2609
    %v2611 = vpop.f32.mrf.mxu0
    %2612 = vmatprep.mubr.f32.mxu0 0.0
    %2613 = vmatmul.mubr.f32.gmra.mxu0 %v2533
    %v2614 = vpop.f32.mrf.mxu0
    %v2615 = vadd.f32 0.0, %v2614
    %v2616 = vpop.f32.mrf.mxu0
    %2617 = vmatprep.mubr.f32.mxu0 0.0
    %2618 = vmatmul.mubr.f32.gmra.mxu0 %v2536
    %v2619 = vpop.f32.mrf.mxu0
    %v2620 = vadd.f32 0.0, %v2619
    %v2621 = vpop.f32.mrf.mxu0
    %2622 = vdwg.mxu0
    %2627 = vrot.lane.b32.xlu0 %v2605, 8
    %v2628 = vpop.permute.xlu0 %2627
    %2629 = vrot.lane.b32.xlu0 %v2610, 8
    %v2630 = vpop.permute.xlu0 %2629
    %2631 = vrot.lane.b32.xlu0 %v2615, 8
    %v2632 = vpop.permute.xlu0 %2631
    %2633 = vrot.lane.b32.xlu0 %v2620, 8
    %v2634 = vpop.permute.xlu0 %2633
    %2639 = vst.msk [vmem:[#allocation2] sm:$0xff] %vm846, %v2628
    %2640 = vst.msk [vmem:[#allocation2 + $0x8] sm:$0xff] %vm846, %v2630
    %2641 = vst.msk [vmem:[#allocation2 + $0x10] sm:$0xff] %vm846, %v2632
    %2642 = vst.msk [vmem:[#allocation2 + $0x18] sm:$0xff] %vm846, %v2634
    %2643 = vrot.lane.b32.xlu0 %v2065, 112
    %v2644 = vpop.permute.xlu0 %2643
    %2645 = vrot.lane.b32.xlu0 %v2070, 112
    %v2646 = vpop.permute.xlu0 %2645
    %2647 = vrot.lane.b32.xlu0 %v2075, 112
    %v2648 = vpop.permute.xlu0 %2647
    %2649 = vrot.lane.b32.xlu0 %v2080, 112
    %v2650 = vpop.permute.xlu0 %2649
    %2651 = vrot.lane.b32.xlu0 %v2065, 80
    %v2652 = vpop.permute.xlu0 %2651
    %2653 = vrot.lane.b32.xlu0 %v2070, 80
    %v2654 = vpop.permute.xlu0 %2653
    %2655 = vrot.lane.b32.xlu0 %v2075, 80
    %v2656 = vpop.permute.xlu0 %2655
    %2657 = vrot.lane.b32.xlu0 %v2080, 80
    %v2658 = vpop.permute.xlu0 %2657
    %v2659 = vsel %vm301, %v2644, 0
    %v2661 = vsel %vm301, %v2646, 0
    %v2663 = vsel %vm301, %v2648, 0
    %v2665 = vsel %vm301, %v2650, 0
    %v2667 = vsel %vm301, %v2652, 0
    %v2669 = vsel %vm301, %v2654, 0
    %v2671 = vsel %vm301, %v2656, 0
    %v2673 = vsel %vm301, %v2658, 0
    %2675 = vmatprep.subr.mxu0 0.0
    %2676 = vmatpush1.xpose.msra.mxu0 0.0
    %2677 = vmatprep.subr.mxu0 0.0
    %2678 = vmatpush1.xpose.msra.mxu0 0.0
    %2679 = vmatprep.subr.mxu0 0.0
    %2680 = vmatpush1.xpose.msra.mxu0 0.0
    %2681 = vmatprep.subr.mxu0 0.0
    %2682 = vmatpush1.xpose.msra.mxu0 0.0
    %2683 = vmatprep.subr.mxu0 0.0
    %2684 = vmatpush1.xpose.msra.mxu0 0.0
    %2685 = vmatprep.subr.mxu0 0.0
    %2686 = vmatpush1.xpose.msra.mxu0 0.0
    %2687 = vmatprep.subr.mxu0 0.0
    %2688 = vmatpush1.xpose.msra.mxu0 0.0
    %2689 = vmatprep.subr.mxu0 0.0
    %2690 = vmatpush1.xpose.msra.mxu0 0.0
    %2691 = vmatprep.subr.mxu0 0.0
    %2692 = vmatpush1.xpose.msra.mxu0 0.0
    %2693 = vmatprep.subr.mxu0 0.0
    %2694 = vmatpush1.xpose.msra.mxu0 0.0
    %2695 = vmatprep.subr.mxu0 0.0
    %2696 = vmatpush1.xpose.msra.mxu0 0.0
    %2697 = vmatprep.subr.mxu0 0.0
    %2698 = vmatpush1.xpose.msra.mxu0 0.0
    %2699 = vmatprep.subr.mxu0 0.0
    %2700 = vmatpush1.xpose.msra.mxu0 %v2673
    %2701 = vmatprep.subr.mxu0 0.0
    %2702 = vmatpush1.xpose.msra.mxu0 %v2671
    %2703 = vmatprep.subr.mxu0 0.0
    %2704 = vmatpush1.xpose.msra.mxu0 %v2669
    %2705 = vmatprep.subr.mxu0 0.0
    %2706 = vmatpush1.xpose.msra.mxu0 %v2667
    %2707 = vmatprep.subr.mxu0 0.0
    %2708 = vmatpush2.xpose.msra.mxu0 0.0
    %2709 = vmatprep.subr.mxu0 0.0
    %2710 = vmatpush2.xpose.msra.mxu0 0.0
    %2711 = vmatprep.subr.mxu0 0.0
    %2712 = vmatpush2.xpose.msra.mxu0 0.0
    %2713 = vmatprep.subr.mxu0 0.0
    %2714 = vmatpush2.xpose.msra.mxu0 0.0
    %2715 = vmatprep.subr.mxu0 0.0
    %2716 = vmatpush2.xpose.msra.mxu0 0.0
    %2717 = vmatprep.subr.mxu0 0.0
    %2718 = vmatpush2.xpose.msra.mxu0 0.0
    %2719 = vmatprep.subr.mxu0 0.0
    %2720 = vmatpush2.xpose.msra.mxu0 0.0
    %2721 = vmatprep.subr.mxu0 0.0
    %2722 = vmatpush2.xpose.msra.mxu0 0.0
    %2723 = vmatprep.subr.mxu0 0.0
    %2724 = vmatpush2.xpose.msra.mxu0 0.0
    %2725 = vmatprep.subr.mxu0 0.0
    %2726 = vmatpush2.xpose.msra.mxu0 0.0
    %2727 = vmatprep.subr.mxu0 0.0
    %2728 = vmatpush2.xpose.msra.mxu0 0.0
    %2729 = vmatprep.subr.mxu0 0.0
    %2730 = vmatpush2.xpose.msra.mxu0 0.0
    %2731 = vmatprep.subr.mxu0 0.0
    %2732 = vmatpush2.xpose.msra.mxu0 0.0
    %2733 = vmatprep.subr.mxu0 0.0
    %2734 = vmatpush2.xpose.msra.mxu0 0.0
    %2735 = vmatprep.subr.mxu0 0.0
    %2736 = vmatpush2.xpose.msra.mxu0 0.0
    %2737 = vmatprep.subr.mxu0 0.0
    %2738 = vmatpush2.xpose.msra.mxu0 0.0
    %2739 = vmatprep.mubr.f32.mxu0 0.0
    %2740 = vmatmul.mubr.f32.gmra.mxu0 %v2659
    %v2741 = vpop.f32.mrf.mxu0
    %v2742 = vadd.f32 %v95, %v2741
    %v2743 = vpop.f32.mrf.mxu0
    %2744 = vmatprep.mubr.f32.mxu0 0.0
    %2745 = vmatmul.mubr.f32.gmra.mxu0 %v2661
    %v2746 = vpop.f32.mrf.mxu0
    %v2747 = vadd.f32 %v95, %v2746
    %v2748 = vpop.f32.mrf.mxu0
    %2749 = vmatprep.mubr.f32.mxu0 0.0
    %2750 = vmatmul.mubr.f32.gmra.mxu0 %v2663
    %v2751 = vpop.f32.mrf.mxu0
    %v2752 = vadd.f32 %v104, %v2751
    %v2753 = vpop.f32.mrf.mxu0
    %2754 = vmatprep.mubr.f32.mxu0 0.0
    %2755 = vmatmul.mubr.f32.gmra.mxu0 %v2665
    %v2756 = vpop.f32.mrf.mxu0
    %v2757 = vadd.f32 %v104, %v2756
    %v2758 = vpop.f32.mrf.mxu0
    %2759 = vdwg.mxu0
    %v2760 = vsel %vm118, %v2742, -inf
    %2761 = vmax.xlane.f32.xlu0 %v2760
    %v2762 = vpop.xlane.xlu0 %2761
    %v2763 = vsel %vm118, %v2747, -inf
    %2764 = vmax.xlane.f32.xlu0 %v2763
    %v2765 = vpop.xlane.xlu0 %2764
    %v2766 = vsel %vm118, %v2752, -inf
    %2767 = vmax.xlane.f32.xlu0 %v2766
    %v2768 = vpop.xlane.xlu0 %2767
    %v2769 = vsel %vm118, %v2757, -inf
    %2770 = vmax.xlane.f32.xlu0 %v2769
    %v2771 = vpop.xlane.xlu0 %2770
    %v2772 = vsub.f32 %v2742, %v2762
    %v2773 = vsub.f32 %v2747, %v2765
    %v2774 = vsub.f32 %v2752, %v2768
    %v2775 = vsub.f32 %v2757, %v2771
    %v2776 = vmul.f32 %v2772, 1.442695
    %v2777 = vpow.pop %v2776
    %v2778 = vmul.f32 %v2773, 1.442695
    %v2779 = vpow.pop %v2778
    %v2780 = vmul.f32 %v2774, 1.442695
    %v2781 = vpow.pop %v2780
    %v2782 = vmul.f32 %v2775, 1.442695
    %v2783 = vpow.pop %v2782
    %v2784 = vsel %vm118, %v2777, 0.0
    %2785 = vadd.xlane.f32.xlu0 %v2784
    %v2786 = vpop.xlane.xlu0 %2785
    %v2787 = vsel %vm118, %v2779, 0.0
    %2788 = vadd.xlane.f32.xlu0 %v2787
    %v2789 = vpop.xlane.xlu0 %2788
    %v2790 = vsel %vm118, %v2781, 0.0
    %2791 = vadd.xlane.f32.xlu0 %v2790
    %v2792 = vpop.xlane.xlu0 %2791
    %v2793 = vsel %vm118, %v2783, 0.0
    %2794 = vadd.xlane.f32.xlu0 %v2793
    %v2795 = vpop.xlane.xlu0 %2794
    %v2796 = vrcp.pop %v2786
    %v2797 = vmul.f32 %v2777, %v2796
    %v2798 = vrcp.pop %v2789
    %v2799 = vmul.f32 %v2779, %v2798
    %v2800 = vrcp.pop %v2792
    %v2801 = vmul.f32 %v2781, %v2800
    %v2802 = vrcp.pop %v2795
    %v2803 = vmul.f32 %v2783, %v2802
    %2804 = vrot.lane.b32.xlu0 %v2065, 48
    %v2805 = vpop.permute.xlu0 %2804
    %2806 = vrot.lane.b32.xlu0 %v2070, 48
    %v2807 = vpop.permute.xlu0 %2806
    %2808 = vrot.lane.b32.xlu0 %v2075, 48
    %v2809 = vpop.permute.xlu0 %2808
    %2810 = vrot.lane.b32.xlu0 %v2080, 48
    %v2811 = vpop.permute.xlu0 %2810
    %v2817 = vsel %vm118, %v2797, 0
    %v2820 = vsel %vm118, %v2799, 0
    %v2823 = vsel %vm118, %v2801, 0
    %v2826 = vsel %vm118, %v2803, 0
    %2828 = vmatprep.subr.mxu0 0.0
    %2829 = vmatpush1.msra.mxu0 0.0
    %2830 = vmatprep.subr.mxu0 0.0
    %2831 = vmatpush1.msra.mxu0 0.0
    %2832 = vmatprep.subr.mxu0 0.0
    %2833 = vmatpush1.msra.mxu0 0.0
    %2834 = vmatprep.subr.mxu0 0.0
    %2835 = vmatpush1.msra.mxu0 0.0
    %2836 = vmatprep.subr.mxu0 0.0
    %2837 = vmatpush1.msra.mxu0 0.0
    %2838 = vmatprep.subr.mxu0 0.0
    %2839 = vmatpush1.msra.mxu0 0.0
    %2840 = vmatprep.subr.mxu0 0.0
    %2841 = vmatpush1.msra.mxu0 0.0
    %2842 = vmatprep.subr.mxu0 0.0
    %2843 = vmatpush1.msra.mxu0 0.0
    %2844 = vmatprep.subr.mxu0 0.0
    %2845 = vmatpush1.msra.mxu0 0.0
    %2846 = vmatprep.subr.mxu0 0.0
    %2847 = vmatpush1.msra.mxu0 0.0
    %2848 = vmatprep.subr.mxu0 0.0
    %2849 = vmatpush1.msra.mxu0 0.0
    %2850 = vmatprep.subr.mxu0 0.0
    %2851 = vmatpush1.msra.mxu0 0.0
    %2852 = vmatprep.subr.mxu0 0.0
    %2853 = vmatpush1.msra.mxu0 %v2811
    %2854 = vmatprep.subr.mxu0 0.0
    %2855 = vmatpush1.msra.mxu0 %v2809
    %2856 = vmatprep.subr.mxu0 0.0
    %2857 = vmatpush1.msra.mxu0 %v2807
    %2858 = vmatprep.subr.mxu0 0.0
    %2859 = vmatpush1.msra.mxu0 %v2805
    %2860 = vmatprep.subr.mxu0 0.0
    %2861 = vmatpush2.msra.mxu0 0.0
    %2862 = vmatprep.subr.mxu0 0.0
    %2863 = vmatpush2.msra.mxu0 0.0
    %2864 = vmatprep.subr.mxu0 0.0
    %2865 = vmatpush2.msra.mxu0 0.0
    %2866 = vmatprep.subr.mxu0 0.0
    %2867 = vmatpush2.msra.mxu0 0.0
    %2868 = vmatprep.subr.mxu0 0.0
    %2869 = vmatpush2.msra.mxu0 0.0
    %2870 = vmatprep.subr.mxu0 0.0
    %2871 = vmatpush2.msra.mxu0 0.0
    %2872 = vmatprep.subr.mxu0 0.0
    %2873 = vmatpush2.msra.mxu0 0.0
    %2874 = vmatprep.subr.mxu0 0.0
    %2875 = vmatpush2.msra.mxu0 0.0
    %2876 = vmatprep.subr.mxu0 0.0
    %2877 = vmatpush2.msra.mxu0 0.0
    %2878 = vmatprep.subr.mxu0 0.0
    %2879 = vmatpush2.msra.mxu0 0.0
    %2880 = vmatprep.subr.mxu0 0.0
    %2881 = vmatpush2.msra.mxu0 0.0
    %2882 = vmatprep.subr.mxu0 0.0
    %2883 = vmatpush2.msra.mxu0 0.0
    %2884 = vmatprep.subr.mxu0 0.0
    %2885 = vmatpush2.msra.mxu0 0.0
    %2886 = vmatprep.subr.mxu0 0.0
    %2887 = vmatpush2.msra.mxu0 0.0
    %2888 = vmatprep.subr.mxu0 0.0
    %2889 = vmatpush2.msra.mxu0 0.0
    %2890 = vmatprep.subr.mxu0 0.0
    %2891 = vmatpush2.msra.mxu0 0.0
    %2892 = vmatprep.mubr.f32.mxu0 0.0
    %2893 = vmatmul.mubr.f32.gmra.mxu0 %v2817
    %v2894 = vpop.f32.mrf.mxu0
    %v2895 = vadd.f32 0.0, %v2894
    %v2896 = vpop.f32.mrf.mxu0
    %2897 = vmatprep.mubr.f32.mxu0 0.0
    %2898 = vmatmul.mubr.f32.gmra.mxu0 %v2820
    %v2899 = vpop.f32.mrf.mxu0
    %v2900 = vadd.f32 0.0, %v2899
    %v2901 = vpop.f32.mrf.mxu0
    %2902 = vmatprep.mubr.f32.mxu0 0.0
    %2903 = vmatmul.mubr.f32.gmra.mxu0 %v2823
    %v2904 = vpop.f32.mrf.mxu0
    %v2905 = vadd.f32 0.0, %v2904
    %v2906 = vpop.f32.mrf.mxu0
    %2907 = vmatprep.mubr.f32.mxu0 0.0
    %2908 = vmatmul.mubr.f32.gmra.mxu0 %v2826
    %v2909 = vpop.f32.mrf.mxu0
    %v2910 = vadd.f32 0.0, %v2909
    %v2911 = vpop.f32.mrf.mxu0
    %2912 = vdwg.mxu0
    %2917 = vrot.lane.b32.xlu0 %v2895, 16
    %v2918 = vpop.permute.xlu0 %2917
    %2919 = vrot.lane.b32.xlu0 %v2900, 16
    %v2920 = vpop.permute.xlu0 %2919
    %2921 = vrot.lane.b32.xlu0 %v2905, 16
    %v2922 = vpop.permute.xlu0 %2921
    %2923 = vrot.lane.b32.xlu0 %v2910, 16
    %v2924 = vpop.permute.xlu0 %2923
    %2929 = vst.msk [vmem:[#allocation2] sm:$0xff] %vm1137, %v2918
    %2930 = vst.msk [vmem:[#allocation2 + $0x8] sm:$0xff] %vm1137, %v2920
    %2931 = vst.msk [vmem:[#allocation2 + $0x10] sm:$0xff] %vm1137, %v2922
    %2932 = vst.msk [vmem:[#allocation2 + $0x18] sm:$0xff] %vm1137, %v2924
    %2933 = vrot.lane.b32.xlu0 %v2065, 104
    %v2934 = vpop.permute.xlu0 %2933
    %2935 = vrot.lane.b32.xlu0 %v2070, 104
    %v2936 = vpop.permute.xlu0 %2935
    %2937 = vrot.lane.b32.xlu0 %v2075, 104
    %v2938 = vpop.permute.xlu0 %2937
    %2939 = vrot.lane.b32.xlu0 %v2080, 104
    %v2940 = vpop.permute.xlu0 %2939
    %2941 = vrot.lane.b32.xlu0 %v2065, 72
    %v2942 = vpop.permute.xlu0 %2941
    %2943 = vrot.lane.b32.xlu0 %v2070, 72
    %v2944 = vpop.permute.xlu0 %2943
    %2945 = vrot.lane.b32.xlu0 %v2075, 72
    %v2946 = vpop.permute.xlu0 %2945
    %2947 = vrot.lane.b32.xlu0 %v2080, 72
    %v2948 = vpop.permute.xlu0 %2947
    %v2949 = vsel %vm301, %v2934, 0
    %v2951 = vsel %vm301, %v2936, 0
    %v2953 = vsel %vm301, %v2938, 0
    %v2955 = vsel %vm301, %v2940, 0
    %v2957 = vsel %vm301, %v2942, 0
    %v2959 = vsel %vm301, %v2944, 0
    %v2961 = vsel %vm301, %v2946, 0
    %v2963 = vsel %vm301, %v2948, 0
    %2965 = vmatprep.subr.mxu0 0.0
    %2966 = vmatpush1.xpose.msra.mxu0 0.0
    %2967 = vmatprep.subr.mxu0 0.0
    %2968 = vmatpush1.xpose.msra.mxu0 0.0
    %2969 = vmatprep.subr.mxu0 0.0
    %2970 = vmatpush1.xpose.msra.mxu0 0.0
    %2971 = vmatprep.subr.mxu0 0.0
    %2972 = vmatpush1.xpose.msra.mxu0 0.0
    %2973 = vmatprep.subr.mxu0 0.0
    %2974 = vmatpush1.xpose.msra.mxu0 0.0
    %2975 = vmatprep.subr.mxu0 0.0
    %2976 = vmatpush1.xpose.msra.mxu0 0.0
    %2977 = vmatprep.subr.mxu0 0.0
    %2978 = vmatpush1.xpose.msra.mxu0 0.0
    %2979 = vmatprep.subr.mxu0 0.0
    %2980 = vmatpush1.xpose.msra.mxu0 0.0
    %2981 = vmatprep.subr.mxu0 0.0
    %2982 = vmatpush1.xpose.msra.mxu0 0.0
    %2983 = vmatprep.subr.mxu0 0.0
    %2984 = vmatpush1.xpose.msra.mxu0 0.0
    %2985 = vmatprep.subr.mxu0 0.0
    %2986 = vmatpush1.xpose.msra.mxu0 0.0
    %2987 = vmatprep.subr.mxu0 0.0
    %2988 = vmatpush1.xpose.msra.mxu0 0.0
    %2989 = vmatprep.subr.mxu0 0.0
    %2990 = vmatpush1.xpose.msra.mxu0 %v2963
    %2991 = vmatprep.subr.mxu0 0.0
    %2992 = vmatpush1.xpose.msra.mxu0 %v2961
    %2993 = vmatprep.subr.mxu0 0.0
    %2994 = vmatpush1.xpose.msra.mxu0 %v2959
    %2995 = vmatprep.subr.mxu0 0.0
    %2996 = vmatpush1.xpose.msra.mxu0 %v2957
    %2997 = vmatprep.subr.mxu0 0.0
    %2998 = vmatpush2.xpose.msra.mxu0 0.0
    %2999 = vmatprep.subr.mxu0 0.0
    %3000 = vmatpush2.xpose.msra.mxu0 0.0
    %3001 = vmatprep.subr.mxu0 0.0
    %3002 = vmatpush2.xpose.msra.mxu0 0.0
    %3003 = vmatprep.subr.mxu0 0.0
    %3004 = vmatpush2.xpose.msra.mxu0 0.0
    %3005 = vmatprep.subr.mxu0 0.0
    %3006 = vmatpush2.xpose.msra.mxu0 0.0
    %3007 = vmatprep.subr.mxu0 0.0
    %3008 = vmatpush2.xpose.msra.mxu0 0.0
    %3009 = vmatprep.subr.mxu0 0.0
    %3010 = vmatpush2.xpose.msra.mxu0 0.0
    %3011 = vmatprep.subr.mxu0 0.0
    %3012 = vmatpush2.xpose.msra.mxu0 0.0
    %3013 = vmatprep.subr.mxu0 0.0
    %3014 = vmatpush2.xpose.msra.mxu0 0.0
    %3015 = vmatprep.subr.mxu0 0.0
    %3016 = vmatpush2.xpose.msra.mxu0 0.0
    %3017 = vmatprep.subr.mxu0 0.0
    %3018 = vmatpush2.xpose.msra.mxu0 0.0
    %3019 = vmatprep.subr.mxu0 0.0
    %3020 = vmatpush2.xpose.msra.mxu0 0.0
    %3021 = vmatprep.subr.mxu0 0.0
    %3022 = vmatpush2.xpose.msra.mxu0 0.0
    %3023 = vmatprep.subr.mxu0 0.0
    %3024 = vmatpush2.xpose.msra.mxu0 0.0
    %3025 = vmatprep.subr.mxu0 0.0
    %3026 = vmatpush2.xpose.msra.mxu0 0.0
    %3027 = vmatprep.subr.mxu0 0.0
    %3028 = vmatpush2.xpose.msra.mxu0 0.0
    %3029 = vmatprep.mubr.f32.mxu0 0.0
    %3030 = vmatmul.mubr.f32.gmra.mxu0 %v2949
    %v3031 = vpop.f32.mrf.mxu0
    %v3032 = vadd.f32 %v95, %v3031
    %v3033 = vpop.f32.mrf.mxu0
    %3034 = vmatprep.mubr.f32.mxu0 0.0
    %3035 = vmatmul.mubr.f32.gmra.mxu0 %v2951
    %v3036 = vpop.f32.mrf.mxu0
    %v3037 = vadd.f32 %v95, %v3036
    %v3038 = vpop.f32.mrf.mxu0
    %3039 = vmatprep.mubr.f32.mxu0 0.0
    %3040 = vmatmul.mubr.f32.gmra.mxu0 %v2953
    %v3041 = vpop.f32.mrf.mxu0
    %v3042 = vadd.f32 %v104, %v3041
    %v3043 = vpop.f32.mrf.mxu0
    %3044 = vmatprep.mubr.f32.mxu0 0.0
    %3045 = vmatmul.mubr.f32.gmra.mxu0 %v2955
    %v3046 = vpop.f32.mrf.mxu0
    %v3047 = vadd.f32 %v104, %v3046
    %v3048 = vpop.f32.mrf.mxu0
    %3049 = vdwg.mxu0
    %v3050 = vsel %vm118, %v3032, -inf
    %3051 = vmax.xlane.f32.xlu0 %v3050
    %v3052 = vpop.xlane.xlu0 %3051
    %v3053 = vsel %vm118, %v3037, -inf
    %3054 = vmax.xlane.f32.xlu0 %v3053
    %v3055 = vpop.xlane.xlu0 %3054
    %v3056 = vsel %vm118, %v3042, -inf
    %3057 = vmax.xlane.f32.xlu0 %v3056
    %v3058 = vpop.xlane.xlu0 %3057
    %v3059 = vsel %vm118, %v3047, -inf
    %3060 = vmax.xlane.f32.xlu0 %v3059
    %v3061 = vpop.xlane.xlu0 %3060
    %v3062 = vsub.f32 %v3032, %v3052
    %v3063 = vsub.f32 %v3037, %v3055
    %v3064 = vsub.f32 %v3042, %v3058
    %v3065 = vsub.f32 %v3047, %v3061
    %v3066 = vmul.f32 %v3062, 1.442695
    %v3067 = vpow.pop %v3066
    %v3068 = vmul.f32 %v3063, 1.442695
    %v3069 = vpow.pop %v3068
    %v3070 = vmul.f32 %v3064, 1.442695
    %v3071 = vpow.pop %v3070
    %v3072 = vmul.f32 %v3065, 1.442695
    %v3073 = vpow.pop %v3072
    %v3074 = vsel %vm118, %v3067, 0.0
    %3075 = vadd.xlane.f32.xlu0 %v3074
    %v3076 = vpop.xlane.xlu0 %3075
    %v3077 = vsel %vm118, %v3069, 0.0
    %3078 = vadd.xlane.f32.xlu0 %v3077
    %v3079 = vpop.xlane.xlu0 %3078
    %v3080 = vsel %vm118, %v3071, 0.0
    %3081 = vadd.xlane.f32.xlu0 %v3080
    %v3082 = vpop.xlane.xlu0 %3081
    %v3083 = vsel %vm118, %v3073, 0.0
    %3084 = vadd.xlane.f32.xlu0 %v3083
    %v3085 = vpop.xlane.xlu0 %3084
    %v3086 = vrcp.pop %v3076
    %v3087 = vmul.f32 %v3067, %v3086
    %v3088 = vrcp.pop %v3079
    %v3089 = vmul.f32 %v3069, %v3088
    %v3090 = vrcp.pop %v3082
    %v3091 = vmul.f32 %v3071, %v3090
    %v3092 = vrcp.pop %v3085
    %v3093 = vmul.f32 %v3073, %v3092
    %3094 = vrot.lane.b32.xlu0 %v2065, 40
    %v3095 = vpop.permute.xlu0 %3094
    %3096 = vrot.lane.b32.xlu0 %v2070, 40
    %v3097 = vpop.permute.xlu0 %3096
    %3098 = vrot.lane.b32.xlu0 %v2075, 40
    %v3099 = vpop.permute.xlu0 %3098
    %3100 = vrot.lane.b32.xlu0 %v2080, 40
    %v3101 = vpop.permute.xlu0 %3100
    %v3107 = vsel %vm118, %v3087, 0
    %v3110 = vsel %vm118, %v3089, 0
    %v3113 = vsel %vm118, %v3091, 0
    %v3116 = vsel %vm118, %v3093, 0
    %3118 = vmatprep.subr.mxu0 0.0
    %3119 = vmatpush1.msra.mxu0 0.0
    %3120 = vmatprep.subr.mxu0 0.0
    %3121 = vmatpush1.msra.mxu0 0.0
    %3122 = vmatprep.subr.mxu0 0.0
    %3123 = vmatpush1.msra.mxu0 0.0
    %3124 = vmatprep.subr.mxu0 0.0
    %3125 = vmatpush1.msra.mxu0 0.0
    %3126 = vmatprep.subr.mxu0 0.0
    %3127 = vmatpush1.msra.mxu0 0.0
    %3128 = vmatprep.subr.mxu0 0.0
    %3129 = vmatpush1.msra.mxu0 0.0
    %3130 = vmatprep.subr.mxu0 0.0
    %3131 = vmatpush1.msra.mxu0 0.0
    %3132 = vmatprep.subr.mxu0 0.0
    %3133 = vmatpush1.msra.mxu0 0.0
    %3134 = vmatprep.subr.mxu0 0.0
    %3135 = vmatpush1.msra.mxu0 0.0
    %3136 = vmatprep.subr.mxu0 0.0
    %3137 = vmatpush1.msra.mxu0 0.0
    %3138 = vmatprep.subr.mxu0 0.0
    %3139 = vmatpush1.msra.mxu0 0.0
    %3140 = vmatprep.subr.mxu0 0.0
    %3141 = vmatpush1.msra.mxu0 0.0
    %3142 = vmatprep.subr.mxu0 0.0
    %3143 = vmatpush1.msra.mxu0 %v3101
    %3144 = vmatprep.subr.mxu0 0.0
    %3145 = vmatpush1.msra.mxu0 %v3099
    %3146 = vmatprep.subr.mxu0 0.0
    %3147 = vmatpush1.msra.mxu0 %v3097
    %3148 = vmatprep.subr.mxu0 0.0
    %3149 = vmatpush1.msra.mxu0 %v3095
    %3150 = vmatprep.subr.mxu0 0.0
    %3151 = vmatpush2.msra.mxu0 0.0
    %3152 = vmatprep.subr.mxu0 0.0
    %3153 = vmatpush2.msra.mxu0 0.0
    %3154 = vmatprep.subr.mxu0 0.0
    %3155 = vmatpush2.msra.mxu0 0.0
    %3156 = vmatprep.subr.mxu0 0.0
    %3157 = vmatpush2.msra.mxu0 0.0
    %3158 = vmatprep.subr.mxu0 0.0
    %3159 = vmatpush2.msra.mxu0 0.0
    %3160 = vmatprep.subr.mxu0 0.0
    %3161 = vmatpush2.msra.mxu0 0.0
    %3162 = vmatprep.subr.mxu0 0.0
    %3163 = vmatpush2.msra.mxu0 0.0
    %3164 = vmatprep.subr.mxu0 0.0
    %3165 = vmatpush2.msra.mxu0 0.0
    %3166 = vmatprep.subr.mxu0 0.0
    %3167 = vmatpush2.msra.mxu0 0.0
    %3168 = vmatprep.subr.mxu0 0.0
    %3169 = vmatpush2.msra.mxu0 0.0
    %3170 = vmatprep.subr.mxu0 0.0
    %3171 = vmatpush2.msra.mxu0 0.0
    %3172 = vmatprep.subr.mxu0 0.0
    %3173 = vmatpush2.msra.mxu0 0.0
    %3174 = vmatprep.subr.mxu0 0.0
    %3175 = vmatpush2.msra.mxu0 0.0
    %3176 = vmatprep.subr.mxu0 0.0
    %3177 = vmatpush2.msra.mxu0 0.0
    %3178 = vmatprep.subr.mxu0 0.0
    %3179 = vmatpush2.msra.mxu0 0.0
    %3180 = vmatprep.subr.mxu0 0.0
    %3181 = vmatpush2.msra.mxu0 0.0
    %3182 = vmatprep.mubr.f32.mxu0 0.0
    %3183 = vmatmul.mubr.f32.gmra.mxu0 %v3107
    %v3184 = vpop.f32.mrf.mxu0
    %v3185 = vadd.f32 0.0, %v3184
    %v3186 = vpop.f32.mrf.mxu0
    %3187 = vmatprep.mubr.f32.mxu0 0.0
    %3188 = vmatmul.mubr.f32.gmra.mxu0 %v3110
    %v3189 = vpop.f32.mrf.mxu0
    %v3190 = vadd.f32 0.0, %v3189
    %v3191 = vpop.f32.mrf.mxu0
    %3192 = vmatprep.mubr.f32.mxu0 0.0
    %3193 = vmatmul.mubr.f32.gmra.mxu0 %v3113
    %v3194 = vpop.f32.mrf.mxu0
    %v3195 = vadd.f32 0.0, %v3194
    %v3196 = vpop.f32.mrf.mxu0
    %3197 = vmatprep.mubr.f32.mxu0 0.0
    %3198 = vmatmul.mubr.f32.gmra.mxu0 %v3116
    %v3199 = vpop.f32.mrf.mxu0
    %v3200 = vadd.f32 0.0, %v3199
    %v3201 = vpop.f32.mrf.mxu0
    %3202 = vdwg.mxu0
    %3207 = vrot.lane.b32.xlu0 %v3185, 24
    %v3208 = vpop.permute.xlu0 %3207
    %3209 = vrot.lane.b32.xlu0 %v3190, 24
    %v3210 = vpop.permute.xlu0 %3209
    %3211 = vrot.lane.b32.xlu0 %v3195, 24
    %v3212 = vpop.permute.xlu0 %3211
    %3213 = vrot.lane.b32.xlu0 %v3200, 24
    %v3214 = vpop.permute.xlu0 %3213
    %3219 = vst.msk [vmem:[#allocation2] sm:$0xff] %vm1428, %v3208
    %3220 = vst.msk [vmem:[#allocation2 + $0x8] sm:$0xff] %vm1428, %v3210
    %3221 = vst.msk [vmem:[#allocation2 + $0x10] sm:$0xff] %vm1428, %v3212
    %3222 = vst.msk [vmem:[#allocation2 + $0x18] sm:$0xff] %vm1428, %v3214
    %v3223 = vld [vmem:[#allocation2] sm:$0xff]
    %v3224 = vld [vmem:[#allocation2 + $0x8] sm:$0xff]
    %v3225 = vld [vmem:[#allocation2 + $0x10] sm:$0xff]
    %v3226 = vld [vmem:[#allocation2 + $0x18] sm:$0xff]
    %v3227 = vlaneseq
    %v3228 = vshrl.u32 %v3227, 7
    %v3229 = vsub.s32 3, %v3228
    %v3230 = vrot.slane %v1913, %v3229
    %3235 = vrot.lane.b32.xlu0 %v1897, 32
    %v3236 = vpop.permute.xlu0 %3235
    %3237 = vrot.lane.b32.xlu0 %v1898, 32
    %v3238 = vpop.permute.xlu0 %3237
    %3239 = vrot.lane.b32.xlu0 %v1899, 32
    %v3240 = vpop.permute.xlu0 %3239
    %3241 = vrot.lane.b32.xlu0 %v1900, 32
    %v3242 = vpop.permute.xlu0 %3241
    %v3248 = vsel %vm118, %v3223, 0
    %v3251 = vsel %vm118, %v3224, 0
    %v3254 = vsel %vm118, %v3225, 0
    %v3257 = vsel %vm118, %v3226, 0
    %3259 = vmatprep.subr.mxu0 0.0
    %3260 = vmatpush1.msra.mxu0 0.0
    %3261 = vmatprep.subr.mxu0 0.0
    %3262 = vmatpush1.msra.mxu0 0.0
    %3263 = vmatprep.subr.mxu0 0.0
    %3264 = vmatpush1.msra.mxu0 0.0
    %3265 = vmatprep.subr.mxu0 0.0
    %3266 = vmatpush1.msra.mxu0 0.0
    %3267 = vmatprep.subr.mxu0 0.0
    %3268 = vmatpush1.msra.mxu0 0.0
    %3269 = vmatprep.subr.mxu0 0.0
    %3270 = vmatpush1.msra.mxu0 0.0
    %3271 = vmatprep.subr.mxu0 0.0
    %3272 = vmatpush1.msra.mxu0 0.0
    %3273 = vmatprep.subr.mxu0 0.0
    %3274 = vmatpush1.msra.mxu0 0.0
    %3275 = vmatprep.subr.mxu0 0.0
    %3276 = vmatpush1.msra.mxu0 0.0
    %3277 = vmatprep.subr.mxu0 0.0
    %3278 = vmatpush1.msra.mxu0 0.0
    %3279 = vmatprep.subr.mxu0 0.0
    %3280 = vmatpush1.msra.mxu0 0.0
    %3281 = vmatprep.subr.mxu0 0.0
    %3282 = vmatpush1.msra.mxu0 0.0
    %3283 = vmatprep.subr.mxu0 0.0
    %3284 = vmatpush1.msra.mxu0 %v3242
    %3285 = vmatprep.subr.mxu0 0.0
    %3286 = vmatpush1.msra.mxu0 %v3240
    %3287 = vmatprep.subr.mxu0 0.0
    %3288 = vmatpush1.msra.mxu0 %v3238
    %3289 = vmatprep.subr.mxu0 0.0
    %3290 = vmatpush1.msra.mxu0 %v3236
    %3291 = vmatprep.subr.mxu0 0.0
    %3292 = vmatpush2.msra.mxu0 0.0
    %3293 = vmatprep.subr.mxu0 0.0
    %3294 = vmatpush2.msra.mxu0 0.0
    %3295 = vmatprep.subr.mxu0 0.0
    %3296 = vmatpush2.msra.mxu0 0.0
    %3297 = vmatprep.subr.mxu0 0.0
    %3298 = vmatpush2.msra.mxu0 0.0
    %3299 = vmatprep.subr.mxu0 0.0
    %3300 = vmatpush2.msra.mxu0 0.0
    %3301 = vmatprep.subr.mxu0 0.0
    %3302 = vmatpush2.msra.mxu0 0.0
    %3303 = vmatprep.subr.mxu0 0.0
    %3304 = vmatpush2.msra.mxu0 0.0
    %3305 = vmatprep.subr.mxu0 0.0
    %3306 = vmatpush2.msra.mxu0 0.0
    %3307 = vmatprep.subr.mxu0 0.0
    %3308 = vmatpush2.msra.mxu0 0.0
    %3309 = vmatprep.subr.mxu0 0.0
    %3310 = vmatpush2.msra.mxu0 0.0
    %3311 = vmatprep.subr.mxu0 0.0
    %3312 = vmatpush2.msra.mxu0 0.0
    %3313 = vmatprep.subr.mxu0 0.0
    %3314 = vmatpush2.msra.mxu0 0.0
    %3315 = vmatprep.subr.mxu0 0.0
    %3316 = vmatpush2.msra.mxu0 0.0
    %3317 = vmatprep.subr.mxu0 0.0
    %3318 = vmatpush2.msra.mxu0 0.0
    %3319 = vmatprep.subr.mxu0 0.0
    %3320 = vmatpush2.msra.mxu0 0.0
    %3321 = vmatprep.subr.mxu0 0.0
    %3322 = vmatpush2.msra.mxu0 0.0
    %3323 = vmatprep.mubr.f32.mxu0 0.0
    %3324 = vmatmul.mubr.f32.gmra.mxu0 %v3248
    %v3325 = vpop.f32.mrf.mxu0
    %v3326 = vadd.f32 %v3230, %v3325
    %v3327 = vpop.f32.mrf.mxu0
    %3328 = vmatprep.mubr.f32.mxu0 0.0
    %3329 = vmatmul.mubr.f32.gmra.mxu0 %v3251
    %v3330 = vpop.f32.mrf.mxu0
    %v3331 = vadd.f32 %v3230, %v3330
    %v3332 = vpop.f32.mrf.mxu0
    %3333 = vmatprep.mubr.f32.mxu0 0.0
    %3334 = vmatmul.mubr.f32.gmra.mxu0 %v3254
    %v3335 = vpop.f32.mrf.mxu0
    %v3336 = vadd.f32 %v3230, %v3335
    %v3337 = vpop.f32.mrf.mxu0
    %3338 = vmatprep.mubr.f32.mxu0 0.0
    %3339 = vmatmul.mubr.f32.gmra.mxu0 %v3257
    %v3340 = vpop.f32.mrf.mxu0
    %v3341 = vadd.f32 %v3230, %v3340
    %v3342 = vpop.f32.mrf.mxu0
    %3343 = vdwg.mxu0
    %v3344 = vadd.f32 %v3326, %v1893
    %v3345 = vadd.f32 %v3331, %v1894
    %v3346 = vadd.f32 %v3336, %v1895
    %v3347 = vadd.f32 %v3341, %v1896
    %v3348 = vsel %vm118, %v3344, 0.0
    %3349 = vadd.xlane.f32.xlu0 %v3348
    %v3350 = vpop.xlane.xlu0 %3349
    %v3351 = vsel %vm118, %v3345, 0.0
    %3352 = vadd.xlane.f32.xlu0 %v3351
    %v3353 = vpop.xlane.xlu0 %3352
    %v3354 = vsel %vm118, %v3346, 0.0
    %3355 = vadd.xlane.f32.xlu0 %v3354
    %v3356 = vpop.xlane.xlu0 %3355
    %v3357 = vsel %vm118, %v3347, 0.0
    %3358 = vadd.xlane.f32.xlu0 %v3357
    %v3359 = vpop.xlane.xlu0 %3358
    %v3360 = vmul.f32 %v3350, %v131
    %v3361 = vmul.f32 %v3353, %v131
    %v3362 = vmul.f32 %v3356, %v131
    %v3363 = vmul.f32 %v3359, %v131
    %v3364 = vsub.f32 %v3344, %v3360
    %v3365 = vsub.f32 %v3345, %v3361
    %v3366 = vsub.f32 %v3346, %v3362
    %v3367 = vsub.f32 %v3347, %v3363
    %v3368 = vmul.f32 %v3364, %v3364
    %v3369 = vmul.f32 %v3365, %v3365
    %v3370 = vmul.f32 %v3366, %v3366
    %v3371 = vmul.f32 %v3367, %v3367
    %v3372 = vsel %vm118, %v3368, 0.0
    %3373 = vadd.xlane.f32.xlu0 %v3372
    %v3374 = vpop.xlane.xlu0 %3373
    %v3375 = vsel %vm118, %v3369, 0.0
    %3376 = vadd.xlane.f32.xlu0 %v3375
    %v3377 = vpop.xlane.xlu0 %3376
    %v3378 = vsel %vm118, %v3370, 0.0
    %3379 = vadd.xlane.f32.xlu0 %v3378
    %v3380 = vpop.xlane.xlu0 %3379
    %v3381 = vsel %vm118, %v3371, 0.0
    %3382 = vadd.xlane.f32.xlu0 %v3381
    %v3383 = vpop.xlane.xlu0 %3382
    %v3384 = vmul.f32 %v3374, %v131
    %v3385 = vmul.f32 %v3377, %v131
    %v3386 = vmul.f32 %v3380, %v131
    %v3387 = vmul.f32 %v3383, %v131
    %v3388 = vadd.f32 %v3384, 1e-12
    %v3389 = vadd.f32 %v3385, 1e-12
    %v3390 = vadd.f32 %v3386, 1e-12
    %v3391 = vadd.f32 %v3387, 1e-12
    %v3392 = vrsqrt.pop %v3388
    %v3393 = vrsqrt.pop %v3389
    %v3394 = vrsqrt.pop %v3390
    %v3395 = vrsqrt.pop %v3391
    %v3396 = vmul.f32 %v3364, %v3392
    %v3397 = vmul.f32 %v3365, %v3393
    %v3398 = vmul.f32 %v3366, %v3394
    %v3399 = vmul.f32 %v3367, %v3395
    %v3400 = vlaneseq
    %v3401 = vshrl.u32 %v3400, 7
    %v3402 = vsub.s32 4, %v3401
    %v3403 = vrot.slane %v1913, %v3402
    %v3404 = vmul.f32 %v3396, %v3403
    %v3405 = vmul.f32 %v3397, %v3403
    %v3406 = vmul.f32 %v3398, %v3403
    %v3407 = vmul.f32 %v3399, %v3403
    %v3408 = vlaneseq
    %v3409 = vshrl.u32 %v3408, 7
    %v3410 = vsub.s32 5, %v3409
    %v3411 = vrot.slane %v1913, %v3410
    %v3412 = vadd.f32 %v3404, %v3411
    %v3413 = vadd.f32 %v3405, %v3411
    %v3414 = vadd.f32 %v3406, %v3411
    %v3415 = vadd.f32 %v3407, %v3411
    %v3416 = vlaneseq
    %v3417 = vshrl.u32 %v3416, 7
    %v3418 = vsub.s32 6, %v3417
    %v3419 = vrot.slane %v1913, %v3418
    %3424 = vrot.lane.b32.xlu0 %v1901, 96
    %v3425 = vpop.permute.xlu0 %3424
    %3426 = vrot.lane.b32.xlu0 %v1902, 96
    %v3427 = vpop.permute.xlu0 %3426
    %3428 = vrot.lane.b32.xlu0 %v1903, 96
    %v3429 = vpop.permute.xlu0 %3428
    %3430 = vrot.lane.b32.xlu0 %v1904, 96
    %v3431 = vpop.permute.xlu0 %3430
    %v3437 = vsel %vm118, %v3412, 0
    %v3440 = vsel %vm118, %v3413, 0
    %v3443 = vsel %vm118, %v3414, 0
    %v3446 = vsel %vm118, %v3415, 0
    %3448 = vmatprep.subr.mxu0 0.0
    %3449 = vmatpush1.msra.mxu0 0.0
    %3450 = vmatprep.subr.mxu0 0.0
    %3451 = vmatpush1.msra.mxu0 0.0
    %3452 = vmatprep.subr.mxu0 0.0
    %3453 = vmatpush1.msra.mxu0 0.0
    %3454 = vmatprep.subr.mxu0 0.0
    %3455 = vmatpush1.msra.mxu0 0.0
    %3456 = vmatprep.subr.mxu0 0.0
    %3457 = vmatpush1.msra.mxu0 0.0
    %3458 = vmatprep.subr.mxu0 0.0
    %3459 = vmatpush1.msra.mxu0 0.0
    %3460 = vmatprep.subr.mxu0 0.0
    %3461 = vmatpush1.msra.mxu0 0.0
    %3462 = vmatprep.subr.mxu0 0.0
    %3463 = vmatpush1.msra.mxu0 0.0
    %3464 = vmatprep.subr.mxu0 0.0
    %3465 = vmatpush1.msra.mxu0 0.0
    %3466 = vmatprep.subr.mxu0 0.0
    %3467 = vmatpush1.msra.mxu0 0.0
    %3468 = vmatprep.subr.mxu0 0.0
    %3469 = vmatpush1.msra.mxu0 0.0
    %3470 = vmatprep.subr.mxu0 0.0
    %3471 = vmatpush1.msra.mxu0 0.0
    %3472 = vmatprep.subr.mxu0 0.0
    %3473 = vmatpush1.msra.mxu0 %v3431
    %3474 = vmatprep.subr.mxu0 0.0
    %3475 = vmatpush1.msra.mxu0 %v3429
    %3476 = vmatprep.subr.mxu0 0.0
    %3477 = vmatpush1.msra.mxu0 %v3427
    %3478 = vmatprep.subr.mxu0 0.0
    %3479 = vmatpush1.msra.mxu0 %v3425
    %3480 = vmatprep.subr.mxu0 0.0
    %3481 = vmatpush2.msra.mxu0 0.0
    %3482 = vmatprep.subr.mxu0 0.0
    %3483 = vmatpush2.msra.mxu0 0.0
    %3484 = vmatprep.subr.mxu0 0.0
    %3485 = vmatpush2.msra.mxu0 0.0
    %3486 = vmatprep.subr.mxu0 0.0
    %3487 = vmatpush2.msra.mxu0 0.0
    %3488 = vmatprep.subr.mxu0 0.0
    %3489 = vmatpush2.msra.mxu0 0.0
    %3490 = vmatprep.subr.mxu0 0.0
    %3491 = vmatpush2.msra.mxu0 0.0
    %3492 = vmatprep.subr.mxu0 0.0
    %3493 = vmatpush2.msra.mxu0 0.0
    %3494 = vmatprep.subr.mxu0 0.0
    %3495 = vmatpush2.msra.mxu0 0.0
    %3496 = vmatprep.subr.mxu0 0.0
    %3497 = vmatpush2.msra.mxu0 0.0
    %3498 = vmatprep.subr.mxu0 0.0
    %3499 = vmatpush2.msra.mxu0 0.0
    %3500 = vmatprep.subr.mxu0 0.0
    %3501 = vmatpush2.msra.mxu0 0.0
    %3502 = vmatprep.subr.mxu0 0.0
    %3503 = vmatpush2.msra.mxu0 0.0
    %3504 = vmatprep.subr.mxu0 0.0
    %3505 = vmatpush2.msra.mxu0 0.0
    %3506 = vmatprep.subr.mxu0 0.0
    %3507 = vmatpush2.msra.mxu0 0.0
    %3508 = vmatprep.subr.mxu0 0.0
    %3509 = vmatpush2.msra.mxu0 0.0
    %3510 = vmatprep.subr.mxu0 0.0
    %3511 = vmatpush2.msra.mxu0 0.0
    %3512 = vmatprep.mubr.f32.mxu0 0.0
    %3513 = vmatmul.mubr.f32.gmra.mxu0 %v3437
    %v3514 = vpop.f32.mrf.mxu0
    %v3515 = vadd.f32 %v3419, %v3514
    %v3516 = vpop.f32.mrf.mxu0
    %3517 = vmatprep.mubr.f32.mxu0 0.0
    %3518 = vmatmul.mubr.f32.gmra.mxu0 %v3440
    %v3519 = vpop.f32.mrf.mxu0
    %v3520 = vadd.f32 %v3419, %v3519
    %v3521 = vpop.f32.mrf.mxu0
    %3522 = vmatprep.mubr.f32.mxu0 0.0
    %3523 = vmatmul.mubr.f32.gmra.mxu0 %v3443
    %v3524 = vpop.f32.mrf.mxu0
    %v3525 = vadd.f32 %v3419, %v3524
    %v3526 = vpop.f32.mrf.mxu0
    %3527 = vmatprep.mubr.f32.mxu0 0.0
    %3528 = vmatmul.mubr.f32.gmra.mxu0 %v3446
    %v3529 = vpop.f32.mrf.mxu0
    %v3530 = vadd.f32 %v3419, %v3529
    %v3531 = vpop.f32.mrf.mxu0
    %3532 = vdwg.mxu0
    %v3533 = vmul.f32 %v3515, 0.5
    %v3534 = vmul.f32 %v3520, 0.5
    %v3535 = vmul.f32 %v3525, 0.5
    %v3536 = vmul.f32 %v3530, 0.5
    %v3537 = vmul.f32 %v3515, 0.70710677
    %v3538 = vmul.f32 %v3520, 0.70710677
    %v3539 = vmul.f32 %v3525, 0.70710677
    %v3540 = vmul.f32 %v3530, 0.70710677
    %v3541 = verf.f32.pop %v3537
    %v3542 = verf.f32.pop %v3538
    %v3543 = verf.f32.pop %v3539
    %v3544 = verf.f32.pop %v3540
    %v3545 = vadd.f32 %v3541, 1.0
    %v3546 = vadd.f32 %v3542, 1.0
    %v3547 = vadd.f32 %v3543, 1.0
    %v3548 = vadd.f32 %v3544, 1.0
    %v3549 = vmul.f32 %v3533, %v3545
    %v3550 = vmul.f32 %v3534, %v3546
    %v3551 = vmul.f32 %v3535, %v3547
    %v3552 = vmul.f32 %v3536, %v3548
    %v3553 = vlaneseq
    %v3554 = vshrl.u32 %v3553, 7
    %v3555 = vsub.s32 7, %v3554
    %v3556 = vrot.slane %v1913, %v3555
    %v3558 = vsel %vm1767, %v3549, 0
    %v3561 = vsel %vm1767, %v3550, 0
    %v3564 = vsel %vm1767, %v3551, 0
    %v3567 = vsel %vm1767, %v3552, 0
    %3569 = vmatprep.subr.mxu0 0.0
    %3570 = vmatpush1.msra.mxu0 0.0
    %3571 = vmatprep.subr.mxu0 0.0
    %3572 = vmatpush1.msra.mxu0 0.0
    %3573 = vmatprep.subr.mxu0 0.0
    %3574 = vmatpush1.msra.mxu0 0.0
    %3575 = vmatprep.subr.mxu0 0.0
    %3576 = vmatpush1.msra.mxu0 0.0
    %3577 = vmatprep.subr.mxu0 0.0
    %3578 = vmatpush1.msra.mxu0 0.0
    %3579 = vmatprep.subr.mxu0 0.0
    %3580 = vmatpush1.msra.mxu0 0.0
    %3581 = vmatprep.subr.mxu0 0.0
    %3582 = vmatpush1.msra.mxu0 0.0
    %3583 = vmatprep.subr.mxu0 0.0
    %3584 = vmatpush1.msra.mxu0 0.0
    %3585 = vmatprep.subr.mxu0 0.0
    %3586 = vmatpush1.msra.mxu0 %v1912
    %3587 = vmatprep.subr.mxu0 0.0
    %3588 = vmatpush1.msra.mxu0 %v1911
    %3589 = vmatprep.subr.mxu0 0.0
    %3590 = vmatpush1.msra.mxu0 %v1910
    %3591 = vmatprep.subr.mxu0 0.0
    %3592 = vmatpush1.msra.mxu0 %v1909
    %3593 = vmatprep.subr.mxu0 0.0
    %3594 = vmatpush1.msra.mxu0 %v1908
    %3595 = vmatprep.subr.mxu0 0.0
    %3596 = vmatpush1.msra.mxu0 %v1907
    %3597 = vmatprep.subr.mxu0 0.0
    %3598 = vmatpush1.msra.mxu0 %v1906
    %3599 = vmatprep.subr.mxu0 0.0
    %3600 = vmatpush1.msra.mxu0 %v1905
    %3601 = vmatprep.subr.mxu0 0.0
    %3602 = vmatpush2.msra.mxu0 0.0
    %3603 = vmatprep.subr.mxu0 0.0
    %3604 = vmatpush2.msra.mxu0 0.0
    %3605 = vmatprep.subr.mxu0 0.0
    %3606 = vmatpush2.msra.mxu0 0.0
    %3607 = vmatprep.subr.mxu0 0.0
    %3608 = vmatpush2.msra.mxu0 0.0
    %3609 = vmatprep.subr.mxu0 0.0
    %3610 = vmatpush2.msra.mxu0 0.0
    %3611 = vmatprep.subr.mxu0 0.0
    %3612 = vmatpush2.msra.mxu0 0.0
    %3613 = vmatprep.subr.mxu0 0.0
    %3614 = vmatpush2.msra.mxu0 0.0
    %3615 = vmatprep.subr.mxu0 0.0
    %3616 = vmatpush2.msra.mxu0 0.0
    %3617 = vmatprep.subr.mxu0 0.0
    %3618 = vmatpush2.msra.mxu0 0.0
    %3619 = vmatprep.subr.mxu0 0.0
    %3620 = vmatpush2.msra.mxu0 0.0
    %3621 = vmatprep.subr.mxu0 0.0
    %3622 = vmatpush2.msra.mxu0 0.0
    %3623 = vmatprep.subr.mxu0 0.0
    %3624 = vmatpush2.msra.mxu0 0.0
    %3625 = vmatprep.subr.mxu0 0.0
    %3626 = vmatpush2.msra.mxu0 0.0
    %3627 = vmatprep.subr.mxu0 0.0
    %3628 = vmatpush2.msra.mxu0 0.0
    %3629 = vmatprep.subr.mxu0 0.0
    %3630 = vmatpush2.msra.mxu0 0.0
    %3631 = vmatprep.subr.mxu0 0.0
    %3632 = vmatpush2.msra.mxu0 0.0
    %3633 = vmatprep.mubr.f32.mxu0 0.0
    %3634 = vmatmul.mubr.f32.gmra.mxu0 %v3558
    %v3635 = vpop.f32.mrf.mxu0
    %v3636 = vadd.f32 %v3556, %v3635
    %v3637 = vpop.f32.mrf.mxu0
    %3638 = vmatprep.mubr.f32.mxu0 0.0
    %3639 = vmatmul.mubr.f32.gmra.mxu0 %v3561
    %v3640 = vpop.f32.mrf.mxu0
    %v3641 = vadd.f32 %v3556, %v3640
    %v3642 = vpop.f32.mrf.mxu0
    %3643 = vmatprep.mubr.f32.mxu0 0.0
    %3644 = vmatmul.mubr.f32.gmra.mxu0 %v3564
    %v3645 = vpop.f32.mrf.mxu0
    %v3646 = vadd.f32 %v3556, %v3645
    %v3647 = vpop.f32.mrf.mxu0
    %3648 = vmatprep.mubr.f32.mxu0 0.0
    %3649 = vmatmul.mubr.f32.gmra.mxu0 %v3567
    %v3650 = vpop.f32.mrf.mxu0
    %v3651 = vadd.f32 %v3556, %v3650
    %v3652 = vpop.f32.mrf.mxu0
    %3653 = vdwg.mxu0
    %v3654 = vadd.f32 %v3636, %v3326
    %v3655 = vadd.f32 %v3641, %v3331
    %v3656 = vadd.f32 %v3646, %v3336
    %v3657 = vadd.f32 %v3651, %v3341
    %v3658 = vmul.f32 %v3654, %v1872
    %v3659 = vmul.f32 %v3655, %v1877
    %v3660 = vmul.f32 %v3656, %v1882
    %v3661 = vmul.f32 %v3657, %v1887
    %v3662 = vadd.f32 %v3658, %v1893
    %v3663 = vadd.f32 %v3659, %v1894
    %v3664 = vadd.f32 %v3660, %v1895
    %v3665 = vadd.f32 %v3661, %v1896
    %v3666 = vld [vmem:[#allocation8 + $0x10] sm:$0x1]
    %v3667 = vld [vmem:[#allocation8 + $0x11] sm:$0x1]
    %v3668 = vsel %vm118, %v3662, 0.0
    %3669 = vadd.xlane.f32.xlu0 %v3668
    %v3670 = vpop.xlane.xlu0 %3669
    %v3671 = vsel %vm118, %v3663, 0.0
    %3672 = vadd.xlane.f32.xlu0 %v3671
    %v3673 = vpop.xlane.xlu0 %3672
    %v3674 = vsel %vm118, %v3664, 0.0
    %3675 = vadd.xlane.f32.xlu0 %v3674
    %v3676 = vpop.xlane.xlu0 %3675
    %v3677 = vsel %vm118, %v3665, 0.0
    %3678 = vadd.xlane.f32.xlu0 %v3677
    %v3679 = vpop.xlane.xlu0 %3678
    %v3680 = vmul.f32 %v3670, %v131
    %v3681 = vmul.f32 %v3673, %v131
    %v3682 = vmul.f32 %v3676, %v131
    %v3683 = vmul.f32 %v3679, %v131
    %v3684 = vsub.f32 %v3662, %v3680
    %v3685 = vsub.f32 %v3663, %v3681
    %v3686 = vsub.f32 %v3664, %v3682
    %v3687 = vsub.f32 %v3665, %v3683
    %v3688 = vmul.f32 %v3684, %v3684
    %v3689 = vmul.f32 %v3685, %v3685
    %v3690 = vmul.f32 %v3686, %v3686
    %v3691 = vmul.f32 %v3687, %v3687
    %v3692 = vsel %vm118, %v3688, 0.0
    %3693 = vadd.xlane.f32.xlu0 %v3692
    %v3694 = vpop.xlane.xlu0 %3693
    %v3695 = vsel %vm118, %v3689, 0.0
    %3696 = vadd.xlane.f32.xlu0 %v3695
    %v3697 = vpop.xlane.xlu0 %3696
    %v3698 = vsel %vm118, %v3690, 0.0
    %3699 = vadd.xlane.f32.xlu0 %v3698
    %v3700 = vpop.xlane.xlu0 %3699
    %v3701 = vsel %vm118, %v3691, 0.0
    %3702 = vadd.xlane.f32.xlu0 %v3701
    %v3703 = vpop.xlane.xlu0 %3702
    %v3704 = vmul.f32 %v3694, %v131
    %v3705 = vmul.f32 %v3697, %v131
    %v3706 = vmul.f32 %v3700, %v131
    %v3707 = vmul.f32 %v3703, %v131
    %v3708 = vadd.f32 %v3704, 1e-12
    %v3709 = vadd.f32 %v3705, 1e-12
    %v3710 = vadd.f32 %v3706, 1e-12
    %v3711 = vadd.f32 %v3707, 1e-12
    %v3712 = vrsqrt.pop %v3708
    %v3713 = vrsqrt.pop %v3709
    %v3714 = vrsqrt.pop %v3710
    %v3715 = vrsqrt.pop %v3711
    %v3716 = vmul.f32 %v3684, %v3712
    %v3717 = vmul.f32 %v3685, %v3713
    %v3718 = vmul.f32 %v3686, %v3714
    %v3719 = vmul.f32 %v3687, %v3715
    %v3720 = vlaneseq
    %v3721 = vshrl.u32 %v3720, 7
    %v3722 = vsub.s32 0, %v3721
    %v3723 = vrot.slane %v3666, %v3722
    %v3724 = vmul.f32 %v3716, %v3723
    %v3725 = vmul.f32 %v3717, %v3723
    %v3726 = vmul.f32 %v3718, %v3723
    %v3727 = vmul.f32 %v3719, %v3723
    %v3728 = vlaneseq
    %v3729 = vshrl.u32 %v3728, 7
    %v3730 = vsub.s32 0, %v3729
    %v3731 = vrot.slane %v3667, %v3730
    %v3732 = vadd.f32 %v3724, %v3731
    %v3733 = vadd.f32 %v3725, %v3731
    %v3734 = vadd.f32 %v3726, %v3731
    %v3735 = vadd.f32 %v3727, %v3731
    %3738 = vrot.lane.b32.xlu0 %v3664, 32
    %v3739 = vpop.permute.xlu0 %3738
    %3740 = vrot.lane.b32.xlu0 %v3665, 32
    %v3741 = vpop.permute.xlu0 %3740
    %3746 = vrot.lane.b32.xlu0 %v3732, 64
    %v3747 = vpop.permute.xlu0 %3746
    %3748 = vrot.lane.b32.xlu0 %v3733, 64
    %v3749 = vpop.permute.xlu0 %3748
    %3754 = vrot.lane.b32.xlu0 %v3734, 96
    %v3755 = vpop.permute.xlu0 %3754
    %3756 = vrot.lane.b32.xlu0 %v3735, 96
    %v3757 = vpop.permute.xlu0 %3756
    %v3760 = vsel %vm118, %v3662, %v3739
    %v3761 = vsel %vm118, %v3663, %v3741
    %v3762 = vsel %vm1767, %v3760, %v3747
    %v3763 = vsel %vm1767, %v3761, %v3749
    %vm3764 = vcmask 785408
    %v3765 = vsel %vm3764, %v3762, %v3755
    %v3766 = vsel %vm3764, %v3763, %v3757
    %3767 = vst [vmem:[#allocation9] sm:$0xff] %v3765
    %3768 = vst [vmem:[#allocation9 + $0x8] sm:$0xff] %v3766
    // Predicated region
    $region30: #{tpu_custom_call.1} parent=1 // pred_check
      _
    $region31: #{tpu_custom_call.1} parent=1 // pred_check_branch
      %3770 = sbr.rel (0) target = $region33
    $region32: #{tpu_custom_call.1} parent=1 // pred_region
      %s3772 = ssub.s32 256, 256
      %3773 = vsyncadd [#allocation5], %s3772
      %s3774 = sshll.u32 [#allocation9], 4
      %s3775 = int_to_ptr.vmem [resolvable:$true] %s3774
      %3780 = dma.vmem_to_hbm [thread:$0]  %s3775, 256, %s4, [#allocation5], 128, 128, 8
    $region33: #{tpu_custom_call.1} parent=1 // pred_fallthru
      _
    // Predicated region
    $region34: #{tpu_custom_call.1} parent=1 // pred_check
      _
    $region35: #{tpu_custom_call.1} parent=1 // pred_check_branch
      %3782 = sbr.rel (0) target = $region37
    $region36: #{tpu_custom_call.1} parent=1 // pred_region
      %3783 = dma.done [#allocation5], 256
    $region37: #{tpu_custom_call.1} parent=1 // pred_fallthru
      _
    %3784 = vsyncpa [#allocation4], 1
    %3785 = vsyncpa [#allocation7], 1
    %3786 = vsyncpa [#allocation5], 1

</llo_original>
